<compile_context>
chip_gen: v5e
topology: v5e:2x2
jax: 0.10.0
libtpu: 0.0.40
codegen_flags: <defaults>
</compile_context>

<pallas_src>
import functools

import jax
import jax.numpy as jnp
from jax import lax
from jax.experimental import pallas as pl
from jax.experimental.pallas import tpu as pltpu

_BN_EPS = 1e-5
_K_ALIGN = 128                      # pad patch dim to lane width (v5e MXU width)
_VMEM_LIMIT = 48 * 1024 * 1024      # scoped VMEM per call (headroom on v7x's 64 MiB)
_VMEM_BUDGET = 40 * 1024 * 1024     # tile-sizing budget (double-buffered operands)
_TM_TARGET = 256                    # default row-tile; shrunk if the budget is exceeded


# ---------------------------------------------------------------------------
# small helpers
# ---------------------------------------------------------------------------

def _round_up(x, m):
    return ((x + m - 1) // m) * m


def _pad_axis_to(x, axis, target):
    if x.shape[axis] == target:
        return x
    pad = [(0, 0)] * x.ndim
    pad[axis] = (0, target - x.shape[axis])
    return jnp.pad(x, pad)


def _pick_tm(m, k, go, *, target=_TM_TARGET, budget=_VMEM_BUDGET):
    """Largest row tile (multiple of 8, <= target) whose double-buffered footprint fits."""
    tm = min(target, _round_up(m, 8))
    tm = _round_up(tm, 8)

    def fits(t):
        a_tile = t * k * 2          # bf16 A tile
        o_tile = t * go * 4         # output tile (conservative: f32)
        w_res = k * go * 2          # resident bf16 weights
        stats = 8 * go * 4
        return 2 * (a_tile + o_tile) + w_res + stats <= budget

    while tm > 8 and not fits(tm):
        tm = _round_up(tm // 2, 8)
    return tm


# ---------------------------------------------------------------------------
# Kernel A: tiled MXU matmul + per-channel BN statistics accumulation
# ---------------------------------------------------------------------------

def _matmul_stats_kernel(a_ref, w_ref, y_ref, s1_ref, s2_ref):
    i = pl.program_id(0)
    # MXU matmul, f32 accumulation; output emitted bf16 (halves HBM writeback).
    y = jnp.dot(a_ref[...], w_ref[...], preferred_element_type=jnp.float32)
    y_ref[...] = y.astype(y_ref.dtype)

    # s1 / s2 accumulated into the resident (1, GO) output blocks across the M axis.
    # Zero-padded rows (M padding) contribute exactly 0 to both sums.
    @pl.when(i == 0)
    def _():
        s1_ref[...] = jnp.zeros_like(s1_ref)
        s2_ref[...] = jnp.zeros_like(s2_ref)

    s1_ref[...] += jnp.sum(y, axis=0, keepdims=True)
    s2_ref[...] += jnp.sum(y * y, axis=0, keepdims=True)


def matmul_with_stats(a_bf16, w_bf16, *, tm):
    mp, k = a_bf16.shape
    _, go = w_bf16.shape
    return pl.pallas_call(
        _matmul_stats_kernel,
        out_shape=(jax.ShapeDtypeStruct((mp, go), jnp.bfloat16),
                   jax.ShapeDtypeStruct((1, go), jnp.float32),
                   jax.ShapeDtypeStruct((1, go), jnp.float32)),
        grid=(mp // tm,),
        in_specs=[pl.BlockSpec((tm, k), lambda i: (i, 0)),
                  pl.BlockSpec((k, go), lambda i: (0, 0))],
        out_specs=[pl.BlockSpec((tm, go), lambda i: (i, 0)),
                   pl.BlockSpec((1, go), lambda i: (0, 0)),
                   pl.BlockSpec((1, go), lambda i: (0, 0))],
        compiler_params=pltpu.CompilerParams(
            dimension_semantics=("arbitrary",),     # stats accumulator spans M
            vmem_limit_bytes=_VMEM_LIMIT),
    )(a_bf16, w_bf16)


# ---------------------------------------------------------------------------
# Kernel B: BatchNorm apply + optional residual + activation (parallel over M)
# ---------------------------------------------------------------------------

def _bn_act_kernel(*refs, act, has_residual, inv_count):
    it = iter(refs)
    y_ref = next(it)               # (TM, GO) bf16 pre-BN conv output
    s1_ref = next(it)              # (1, GO)  f32 per-column sum
    s2_ref = next(it)              # (1, GO)  f32 per-column sum of squares
    g_ref = next(it)               # (1, GO)  gamma (pre-tiled per parity group)
    b_ref = next(it)               # (1, GO)  beta
    res_ref = next(it) if has_residual else None
    o_ref = next(it)               # (TM, GO) bf16

    mean = s1_ref[...] * inv_count
    # NOTE: E[y^2]-mean^2 in f32; clamped at 0.  Cancellation-prone if |mean| >> std.
    var = jnp.maximum(s2_ref[...] * inv_count - mean * mean, 0.0)
    scale = g_ref[...] * lax.rsqrt(var + _BN_EPS)
    shift = b_ref[...] - mean * scale

    y = y_ref[...].astype(jnp.float32) * scale + shift
    if has_residual:
        y = y + res_ref[...].astype(jnp.float32)
    if act == "relu":
        y = jnp.maximum(y, 0.0)
    elif act == "tanh":
        y = jnp.tanh(y)
    o_ref[...] = y.astype(o_ref.dtype)


def bn_act(y_bf16, s1, s2, gamma_t, beta_t, *, count, residual=None, act="relu", tm):
    mp, go = y_bf16.shape
    has_residual = residual is not None
    inputs = [y_bf16, s1, s2, gamma_t, beta_t]
    in_specs = [pl.BlockSpec((tm, go), lambda i: (i, 0)),
                pl.BlockSpec((1, go), lambda i: (0, 0)),
                pl.BlockSpec((1, go), lambda i: (0, 0)),
                pl.BlockSpec((1, go), lambda i: (0, 0)),
                pl.BlockSpec((1, go), lambda i: (0, 0))]
    if has_residual:
        inputs.append(residual)
        in_specs.append(pl.BlockSpec((tm, go), lambda i: (i, 0)))

    kernel = functools.partial(_bn_act_kernel, act=act, has_residual=has_residual,
                               inv_count=1.0 / float(count))
    return pl.pallas_call(
        kernel,
        out_shape=jax.ShapeDtypeStruct((mp, go), jnp.bfloat16),
        grid=(mp // tm,),
        in_specs=in_specs,
        out_specs=pl.BlockSpec((tm, go), lambda i: (i, 0)),
        compiler_params=pltpu.CompilerParams(
            dimension_semantics=("parallel",),       # v7x: shard M over both TCs
            vmem_limit_bytes=_VMEM_LIMIT),
    )(*inputs)


# ---------------------------------------------------------------------------
# Kernel C: tiled matmul + bias + activation (final conv, no BN)
# ---------------------------------------------------------------------------

def _matmul_bias_act_kernel(a_ref, w_ref, bias_ref, o_ref, *, act):
    y = jnp.dot(a_ref[...], w_ref[...], preferred_element_type=jnp.float32)
    y = y + bias_ref[...]
    if act == "relu":
        y = jnp.maximum(y, 0.0)
    elif act == "tanh":
        y = jnp.tanh(y)
    o_ref[...] = y.astype(o_ref.dtype)


def matmul_bias_act(a_bf16, w_bf16, bias_row, *, act, tm, out_dtype=jnp.float32):
    mp, k = a_bf16.shape
    _, go = w_bf16.shape
    kernel = functools.partial(_matmul_bias_act_kernel, act=act)
    return pl.pallas_call(
        kernel,
        out_shape=jax.ShapeDtypeStruct((mp, go), out_dtype),
        grid=(mp // tm,),
        in_specs=[pl.BlockSpec((tm, k), lambda i: (i, 0)),
                  pl.BlockSpec((k, go), lambda i: (0, 0)),
                  pl.BlockSpec((1, go), lambda i: (0, 0))],
        out_specs=pl.BlockSpec((tm, go), lambda i: (i, 0)),
        compiler_params=pltpu.CompilerParams(
            dimension_semantics=("parallel",),
            vmem_limit_bytes=_VMEM_LIMIT),
    )(a_bf16, w_bf16, bias_row)


# ---------------------------------------------------------------------------
# Weight preparation (hoisted, runs once outside the jit)
# ---------------------------------------------------------------------------

def _conv_weight_matrix(w_oihw):
    """(O,I,kh,kw) -> (round_up(kh*kw*I, 128), O); rows are tap-major then channel."""
    o, i, kh, kw = w_oihw.shape
    wm = jnp.transpose(w_oihw, (2, 3, 1, 0)).reshape(kh * kw * i, o)
    return _pad_axis_to(wm, 0, _round_up(kh * kw * i, _K_ALIGN))


def _conv_transpose_weight_matrix(w_iohw):
    """ConvTranspose2d(k=3,s=2,p=1,op=1) as one 2x2-patch matmul.

    Output columns are 4 parity groups g=2r+s (r,s in {0,1}); out[2i+r, 2j+s, o] is produced
    from the 2x2 input patch at (i, j) (input zero-padded by 1 on the bottom/right).
    """
    c, o, kh, kw = w_iohw.shape
    assert (kh, kw) == (3, 3)
    wb = jnp.zeros((4 * c, 4 * o), jnp.float32)
    # (tap t = 2*di + dj, parity group g = 2*r + s, kernel index u, v)
    taps = [(0, 0, 1, 1),
            (0, 1, 1, 2), (1, 1, 1, 0),
            (0, 2, 2, 1), (2, 2, 0, 1),
            (0, 3, 2, 2), (1, 3, 2, 0), (2, 3, 0, 2), (3, 3, 0, 0)]
    for t, g, u, v in taps:
        wb = wb.at[t * c:(t + 1) * c, g * o:(g + 1) * o].set(w_iohw[:, :, u, v])
    return _pad_axis_to(wb, 0, _round_up(4 * c, _K_ALIGN))


def init_params(key, input_nc=3, output_nc=3, ngf=8, n_blocks=2):
    params = {}
    ks = iter(jax.random.split(key, 64))

    def conv_w(o, i, kh, kw):
        return 0.05 * jax.random.normal(next(ks), (o, i, kh, kw), jnp.float32)

    params["c1_w"] = conv_w(ngf, input_nc, 7, 7)
    params["bn1_g"] = jnp.ones((ngf,), jnp.float32)
    params["bn1_b"] = jnp.zeros((ngf,), jnp.float32)
    for i in range(2):
        mult = 2 ** i
        params[f"down{i}_w"] = conv_w(ngf * mult * 2, ngf * mult, 3, 3)
        params[f"down{i}_g"] = jnp.ones((ngf * mult * 2,), jnp.float32)
        params[f"down{i}_b"] = jnp.zeros((ngf * mult * 2,), jnp.float32)
    dim = ngf * 4
    for i in range(n_blocks):
        for j in (1, 2):
            params[f"rb{i}_w{j}"] = conv_w(dim, dim, 3, 3)
            params[f"rb{i}_g{j}"] = jnp.ones((dim,), jnp.float32)
            params[f"rb{i}_b{j}"] = jnp.zeros((dim,), jnp.float32)
    for i in range(2):
        mult = 2 ** (2 - i)
        cin, cout = ngf * mult, ngf * mult // 2
        params[f"up{i}_w"] = 0.05 * jax.random.normal(next(ks), (cin, cout, 3, 3), jnp.float32)
        params[f"up{i}_g"] = jnp.ones((cout,), jnp.float32)
        params[f"up{i}_b"] = jnp.zeros((cout,), jnp.float32)
    params["cf_w"] = conv_w(output_nc, ngf, 7, 7)
    params["cf_b"] = 0.05 * jax.random.normal(next(ks), (output_nc,), jnp.float32)
    return params


def prepare_params(params, n_blocks=2):
    """One-time hoist: weight reshape, K zero-pad to 128, bf16 cast, gamma/beta pre-tiling."""
    def bn_rows(g_key, b_key):
        return (params[g_key].reshape(1, -1).astype(jnp.float32),
                params[b_key].reshape(1, -1).astype(jnp.float32))

    prep = {}
    e = {"wmat": _conv_weight_matrix(params["c1_w"]).astype(jnp.bfloat16)}
    e["gamma"], e["beta"] = bn_rows("bn1_g", "bn1_b")
    prep["c1"] = e
    for i in range(2):
        e = {"wmat": _conv_weight_matrix(params[f"down{i}_w"]).astype(jnp.bfloat16)}
        e["gamma"], e["beta"] = bn_rows(f"down{i}_g", f"down{i}_b")
        prep[f"down{i}"] = e
    for i in range(n_blocks):
        for j in (1, 2):
            e = {"wmat": _conv_weight_matrix(params[f"rb{i}_w{j}"]).astype(jnp.bfloat16)}
            e["gamma"], e["beta"] = bn_rows(f"rb{i}_g{j}", f"rb{i}_b{j}")
            prep[f"rb{i}_{j}"] = e
    for i in range(2):
        oc = params[f"up{i}_g"].shape[0]
        prep[f"up{i}"] = {
            "wmat": _conv_transpose_weight_matrix(params[f"up{i}_w"]).astype(jnp.bfloat16),
            "gamma": jnp.tile(params[f"up{i}_g"].reshape(1, oc).astype(jnp.float32), (1, 4)),
            "beta": jnp.tile(params[f"up{i}_b"].reshape(1, oc).astype(jnp.float32), (1, 4)),
        }
    prep["final"] = {
        "wmat": _conv_weight_matrix(params["cf_w"]).astype(jnp.bfloat16),
        "bias": params["cf_b"].reshape(1, -1).astype(jnp.float32),
    }
    return prep


# ---------------------------------------------------------------------------
# Conv glue (XLA im2col; see TODO about implicit GEMM)
# ---------------------------------------------------------------------------

def _im2col(x, kh, kw, stride):
    """x: (N,H,W,C) already padded -> (N*Ho*Wo, kh*kw*C), tap-major then channel."""
    n, h, w, c = x.shape
    ho = (h - kh) // stride + 1
    wo = (w - kw) // stride + 1
    cols = []
    for di in range(kh):
        for dj in range(kw):
            cols.append(x[:, di:di + stride * (ho - 1) + 1:stride,
                           dj:dj + stride * (wo - 1) + 1:stride, :])
    p = jnp.stack(cols, axis=3)  # (N, Ho, Wo, kh*kw, C)
    return p.reshape(n * ho * wo, kh * kw * c), n, ho, wo


def _prep_cols(cols, kp, tm):
    m = cols.shape[0]
    mp = _round_up(m, tm)
    cols = _pad_axis_to(_pad_axis_to(cols, 1, kp), 0, mp)   # zero pads are numerically inert
    return cols.astype(jnp.bfloat16), m


def _fold_groups(s, groups):
    """(1, G*oc) per-column sums -> per-channel sums replicated across the G groups."""
    oc = s.shape[1] // groups
    return jnp.tile(jnp.sum(s.reshape(groups, oc), axis=0, keepdims=True), (1, groups))


def conv_bn_act(x, layer, *, kh, kw, stride, reflect_pad=0, zero_pad=0, act, residual=None):
    if reflect_pad:
        x = jnp.pad(x, ((0, 0), (reflect_pad,) * 2, (reflect_pad,) * 2, (0, 0)), mode="reflect")
    if zero_pad:
        x = jnp.pad(x, ((0, 0), (zero_pad,) * 2, (zero_pad,) * 2, (0, 0)))
    cols, n, ho, wo = _im2col(x, kh, kw, stride)
    kp, go = layer["wmat"].shape
    tm = _pick_tm(cols.shape[0], kp, go)
    cols, m = _prep_cols(cols, kp, tm)

    y, s1, s2 = matmul_with_stats(cols, layer["wmat"], tm=tm)

    res2d = None
    if residual is not None:
        res2d = _pad_axis_to(residual.reshape(m, -1), 0, cols.shape[0]).astype(jnp.bfloat16)

    out = bn_act(y, s1, s2, layer["gamma"], layer["beta"], count=m,
                 residual=res2d, act=act, tm=tm)
    return out[:m].reshape(n, ho, wo, go)


def conv_transpose_bn_act(x, layer, *, act="relu"):
    """ConvTranspose2d(k=3,s=2,p=1,op=1,bias=False) + BN + act via 2x2-patch matmul."""
    n, h, w, c = x.shape
    xp = jnp.pad(x, ((0, 0), (0, 1), (0, 1), (0, 0)))
    cols = jnp.concatenate(
        [xp[:, 0:h, 0:w, :], xp[:, 0:h, 1:w + 1, :],
         xp[:, 1:h + 1, 0:w, :], xp[:, 1:h + 1, 1:w + 1, :]], axis=-1)   # (N,H,W,4C)
    cols = cols.reshape(n * h * w, 4 * c)
    kp, go4 = layer["wmat"].shape
    oc = go4 // 4
    tm = _pick_tm(cols.shape[0], kp, go4)
    cols, m = _prep_cols(cols, kp, tm)

    y, s1, s2 = matmul_with_stats(cols, layer["wmat"], tm=tm)
    # Combine the 4 parity groups (tiny (1,GO) XLA ops; replaces the old group-mix matmul).
    s1 = _fold_groups(s1, 4)
    s2 = _fold_groups(s2, 4)
    out = bn_act(y, s1, s2, layer["gamma"], layer["beta"], count=4 * m, act=act, tm=tm)

    out = out[:m].reshape(n, h, w, 2, 2, oc)
    return jnp.transpose(out, (0, 1, 3, 2, 4, 5)).reshape(n, 2 * h, 2 * w, oc)


def conv_bias_act(x, layer, *, kh, kw, reflect_pad, act):
    if reflect_pad:
        x = jnp.pad(x, ((0, 0), (reflect_pad,) * 2, (reflect_pad,) * 2, (0, 0)), mode="reflect")
    cols, n, ho, wo = _im2col(x, kh, kw, 1)
    kp, go = layer["wmat"].shape
    tm = _pick_tm(cols.shape[0], kp, go)
    cols, m = _prep_cols(cols, kp, tm)
    y = matmul_bias_act(cols, layer["wmat"], layer["bias"], act=act, tm=tm)
    return y[:m].reshape(n, ho, wo, go)


# ---------------------------------------------------------------------------
# ResnetGenerator forward
# ---------------------------------------------------------------------------

def resnet_generator_forward(x_nchw, prep, n_blocks=2):
    x = jnp.transpose(x_nchw, (0, 2, 3, 1)).astype(jnp.bfloat16)   # NCHW -> NHWC, bf16

    # ReflectionPad2d(3) + Conv2d(input_nc, ngf, 7, bias=False) + BN + ReLU
    x = conv_bn_act(x, prep["c1"], kh=7, kw=7, stride=1, reflect_pad=3, act="relu")

    # downsampling x2: Conv2d(k=3, s=2, p=1, bias=False) + BN + ReLU
    for i in range(2):
        x = conv_bn_act(x, prep[f"down{i}"], kh=3, kw=3, stride=2, zero_pad=1, act="relu")

    # resnet blocks (reflect padding, use_dropout=False)
    for i in range(n_blocks):
        res = x
        h = conv_bn_act(x, prep[f"rb{i}_1"], kh=3, kw=3, stride=1, reflect_pad=1, act="relu")
        x = conv_bn_act(h, prep[f"rb{i}_2"], kh=3, kw=3, stride=1, reflect_pad=1,
                        act="none", residual=res)

    # upsampling x2: ConvTranspose2d(k=3, s=2, p=1, op=1, bias=False) + BN + ReLU
    for i in range(2):
        x = conv_transpose_bn_act(x, prep[f"up{i}"], act="relu")

    # ReflectionPad2d(3) + Conv2d(ngf, output_nc, 7, bias=True) + Tanh
    x = conv_bias_act(x, prep["final"], kh=7, kw=7, reflect_pad=3, act="tanh")

    return jnp.transpose(x, (0, 3, 1, 2)).astype(jnp.float32)      # NHWC -> NCHW


# ---------------------------------------------------------------------------
# main
# ---------------------------------------------------------------------------

if __name__ == "__main__":
    key = jax.random.PRNGKey(0)
    k_params, k_x = jax.random.split(key)

    input_nc, output_nc, ngf, n_blocks = 3, 3, 8, 2
    params = init_params(k_params, input_nc=input_nc, output_nc=output_nc,
                         ngf=ngf, n_blocks=n_blocks)
    prep = prepare_params(params, n_blocks=n_blocks)   # weight transforms run exactly once

    x = jax.random.normal(k_x, (2, input_nc, 16, 16), jnp.float32)  # NCHW, like PyTorch

    fwd = jax.jit(functools.partial(resnet_generator_forward, n_blocks=n_blocks))
    out = jax.block_until_ready(fwd(x, prep))

    assert out.shape == (2, output_nc, 16, 16), out.shape
    assert bool(jnp.all(jnp.isfinite(out)))
    print("KERNEL_OK")
</pallas_src>

<mosaic_0001>
module attributes {stable_mosaic.version = 11 : i64} {
  func.func @_matmul_stats_kernel(%arg0: i32, %arg1: memref<256x256xbf16, #tpu.memory_space<vmem>>, %arg2: memref<256x8xbf16, #tpu.memory_space<vmem>>, %arg3: memref<256x8xbf16, #tpu.memory_space<vmem>>, %arg4: memref<1x8xf32, #tpu.memory_space<vmem>>, %arg5: memref<1x8xf32, #tpu.memory_space<vmem>>) attributes {dimension_semantics = [#tpu.dimension_semantics<arbitrary>], iteration_bounds = array<i64: 2>, scalar_prefetch = 0 : i64, scratch_operands = 0 : i64, tpu.core_type = #tpu.core_type<tc>, window_params = [{transform_indices = @transform_0, window_bounds = array<i64: 256, 256>}, {pipeline_mode = #tpu.pipeline_mode<synchronous>, transform_indices = @transform_1, window_bounds = array<i64: 256, 8>}, {transform_indices = @transform_2, window_bounds = array<i64: 256, 8>}, {pipeline_mode = #tpu.pipeline_mode<synchronous>, transform_indices = @transform_3, window_bounds = array<i64: 1, 8>}, {pipeline_mode = #tpu.pipeline_mode<synchronous>, transform_indices = @transform_4, window_bounds = array<i64: 1, 8>}]} {
    %c0 = arith.constant 0 : index
    %c0_0 = arith.constant 0 : index
    %0 = vector.load %arg1[%c0, %c0_0] : memref<256x256xbf16, #tpu.memory_space<vmem>>, vector<256x256xbf16>
    %c0_1 = arith.constant 0 : index
    %c0_2 = arith.constant 0 : index
    %1 = vector.load %arg2[%c0_1, %c0_2] : memref<256x8xbf16, #tpu.memory_space<vmem>>, vector<256x8xbf16>
    %cst = arith.constant dense<0.000000e+00> : vector<256x8xf32>
    %2 = tpu.matmul %0, %1, %cst {dimension_numbers = #tpu.dot_dimension_numbers<[1], [0], [0], [1], [0, 0, 1, 1], [], []>} : vector<256x256xbf16>, vector<256x8xbf16>, vector<256x8xf32> -> vector<256x8xf32>
    %3 = arith.truncf %2 : vector<256x8xf32> to vector<256x8xbf16>
    %c0_3 = arith.constant 0 : index
    %c0_4 = arith.constant 0 : index
    %4 = vector.load %arg3[%c0_3, %c0_4] : memref<256x8xbf16, #tpu.memory_space<vmem>>, vector<256x8xbf16>
    tpu.vector_store %arg3[%c0_3, %c0_4], %3 {strides = array<i32>} : memref<256x8xbf16, #tpu.memory_space<vmem>>, vector<256x8xbf16>,
    %c0_i32 = arith.constant 0 : i32
    %5 = arith.cmpi eq, %arg0, %c0_i32 : i32
    %6 = arith.extui %5 : i1 to i32
    %c0_i32_5 = arith.constant 0 : i32
    %7 = arith.cmpi ne, %6, %c0_i32_5 : i32
    scf.if %7 {
      %cst_16 = arith.constant 0.000000e+00 : f32
      %19 = vector.broadcast %cst_16 : f32 to vector<1x8xf32>
      %c0_17 = arith.constant 0 : index
      %c0_18 = arith.constant 0 : index
      %20 = vector.load %arg4[%c0_17, %c0_18] : memref<1x8xf32, #tpu.memory_space<vmem>>, vector<1x8xf32>
      tpu.vector_store %arg4[%c0_17, %c0_18], %19 {strides = array<i32>} : memref<1x8xf32, #tpu.memory_space<vmem>>, vector<1x8xf32>,
      %cst_19 = arith.constant 0.000000e+00 : f32
      %21 = vector.broadcast %cst_19 : f32 to vector<1x8xf32>
      %c0_20 = arith.constant 0 : index
      %c0_21 = arith.constant 0 : index
      %22 = vector.load %arg5[%c0_20, %c0_21] : memref<1x8xf32, #tpu.memory_space<vmem>>, vector<1x8xf32>
      tpu.vector_store %arg5[%c0_20, %c0_21], %21 {strides = array<i32>} : memref<1x8xf32, #tpu.memory_space<vmem>>, vector<1x8xf32>,
    } else {
    }
    %c0_6 = arith.constant 0 : index
    %c0_7 = arith.constant 0 : index
    %8 = vector.load %arg4[%c0_6, %c0_7] : memref<1x8xf32, #tpu.memory_space<vmem>>, vector<1x8xf32>
    %cst_8 = arith.constant dense<0.000000e+00> : vector<8xf32>
    %9 = vector.multi_reduction <add>, %2, %cst_8 [0] : vector<256x8xf32> to vector<8xf32>
    %10 = vector.shape_cast %9 : vector<8xf32> to vector<1x8xf32>
    %11 = arith.addf %8, %10 : vector<1x8xf32>
    %c0_9 = arith.constant 0 : index
    %c0_10 = arith.constant 0 : index
    %12 = vector.load %arg4[%c0_9, %c0_10] : memref<1x8xf32, #tpu.memory_space<vmem>>, vector<1x8xf32>
    tpu.vector_store %arg4[%c0_9, %c0_10], %11 {strides = array<i32>} : memref<1x8xf32, #tpu.memory_space<vmem>>, vector<1x8xf32>,
    %c0_11 = arith.constant 0 : index
    %c0_12 = arith.constant 0 : index
    %13 = vector.load %arg5[%c0_11, %c0_12] : memref<1x8xf32, #tpu.memory_space<vmem>>, vector<1x8xf32>
    %14 = arith.mulf %2, %2 : vector<256x8xf32>
    %cst_13 = arith.constant dense<0.000000e+00> : vector<8xf32>
    %15 = vector.multi_reduction <add>, %14, %cst_13 [0] : vector<256x8xf32> to vector<8xf32>
    %16 = vector.shape_cast %15 : vector<8xf32> to vector<1x8xf32>
    %17 = arith.addf %13, %16 : vector<1x8xf32>
    %c0_14 = arith.constant 0 : index
    %c0_15 = arith.constant 0 : index
    %18 = vector.load %arg5[%c0_14, %c0_15] : memref<1x8xf32, #tpu.memory_space<vmem>>, vector<1x8xf32>
    tpu.vector_store %arg5[%c0_14, %c0_15], %17 {strides = array<i32>} : memref<1x8xf32, #tpu.memory_space<vmem>>, vector<1x8xf32>,
    return
  }
  func.func @transform_0(%arg0: i32) -> (i32, i32) {
    %c0_i32 = arith.constant 0 : i32
    %c0_i32_0 = arith.constant 0 : i32
    return %arg0, %c0_i32 : i32, i32
  }
  func.func @transform_1(%arg0: i32) -> (i32, i32) {
    %c0_i32 = arith.constant 0 : i32
    %c0_i32_0 = arith.constant 0 : i32
    %c0_i32_1 = arith.constant 0 : i32
    return %c0_i32, %c0_i32_0 : i32, i32
  }
  func.func @transform_2(%arg0: i32) -> (i32, i32) {
    %c0_i32 = arith.constant 0 : i32
    %c0_i32_0 = arith.constant 0 : i32
    return %arg0, %c0_i32 : i32, i32
  }
  func.func @transform_3(%arg0: i32) -> (i32, i32) {
    %c0_i32 = arith.constant 0 : i32
    %c0_i32_0 = arith.constant 0 : i32
    %c0_i32_1 = arith.constant 0 : i32
    return %c0_i32, %c0_i32_0 : i32, i32
  }
  func.func @transform_4(%arg0: i32) -> (i32, i32) {
    %c0_i32 = arith.constant 0 : i32
    %c0_i32_0 = arith.constant 0 : i32
    %c0_i32_1 = arith.constant 0 : i32
    return %c0_i32, %c0_i32_0 : i32, i32
  }
}

module attributes {stable_mosaic.version = 11 : i64} {
  func.func @_bn_act_kernel(%arg0: i32, %arg1: memref<256x8xbf16, #tpu.memory_space<vmem>>, %arg2: memref<1x8xf32, #tpu.memory_space<vmem>>, %arg3: memref<1x8xf32, #tpu.memory_space<vmem>>, %arg4: memref<1x8xf32, #tpu.memory_space<vmem>>, %arg5: memref<1x8xf32, #tpu.memory_space<vmem>>, %arg6: memref<256x8xbf16, #tpu.memory_space<vmem>>) attributes {dimension_semantics = [#tpu.dimension_semantics<parallel>], iteration_bounds = array<i64: 2>, scalar_prefetch = 0 : i64, scratch_operands = 0 : i64, tpu.core_type = #tpu.core_type<tc>, window_params = [{transform_indices = @transform_0, window_bounds = array<i64: 256, 8>}, {pipeline_mode = #tpu.pipeline_mode<synchronous>, transform_indices = @transform_1, window_bounds = array<i64: 1, 8>}, {pipeline_mode = #tpu.pipeline_mode<synchronous>, transform_indices = @transform_2, window_bounds = array<i64: 1, 8>}, {pipeline_mode = #tpu.pipeline_mode<synchronous>, transform_indices = @transform_3, window_bounds = array<i64: 1, 8>}, {pipeline_mode = #tpu.pipeline_mode<synchronous>, transform_indices = @transform_4, window_bounds = array<i64: 1, 8>}, {transform_indices = @transform_5, window_bounds = array<i64: 256, 8>}]} {
    %c0 = arith.constant 0 : index
    %c0_0 = arith.constant 0 : index
    %0 = vector.load %arg2[%c0, %c0_0] : memref<1x8xf32, #tpu.memory_space<vmem>>, vector<1x8xf32>
    %cst = arith.constant 0.001953125 : f32
    %1 = vector.broadcast %cst : f32 to vector<1x8xf32>
    %2 = arith.mulf %0, %1 : vector<1x8xf32>
    %c0_1 = arith.constant 0 : index
    %c0_2 = arith.constant 0 : index
    %3 = vector.load %arg3[%c0_1, %c0_2] : memref<1x8xf32, #tpu.memory_space<vmem>>, vector<1x8xf32>
    %cst_3 = arith.constant 0.001953125 : f32
    %4 = vector.broadcast %cst_3 : f32 to vector<1x8xf32>
    %5 = arith.mulf %3, %4 : vector<1x8xf32>
    %6 = arith.mulf %2, %2 : vector<1x8xf32>
    %7 = arith.subf %5, %6 : vector<1x8xf32>
    %cst_4 = arith.constant 0.000000e+00 : f32
    %8 = vector.broadcast %cst_4 : f32 to vector<1x8xf32>
    %9 = arith.maximumf %7, %8 : vector<1x8xf32>
    %c0_5 = arith.constant 0 : index
    %c0_6 = arith.constant 0 : index
    %10 = vector.load %arg4[%c0_5, %c0_6] : memref<1x8xf32, #tpu.memory_space<vmem>>, vector<1x8xf32>
    %cst_7 = arith.constant 9.99999974E-6 : f32
    %11 = vector.broadcast %cst_7 : f32 to vector<1x8xf32>
    %12 = arith.addf %9, %11 : vector<1x8xf32>
    %13 = math.rsqrt %12 : vector<1x8xf32>
    %14 = arith.mulf %10, %13 : vector<1x8xf32>
    %c0_8 = arith.constant 0 : index
    %c0_9 = arith.constant 0 : index
    %15 = vector.load %arg5[%c0_8, %c0_9] : memref<1x8xf32, #tpu.memory_space<vmem>>, vector<1x8xf32>
    %16 = arith.mulf %2, %14 : vector<1x8xf32>
    %17 = arith.subf %15, %16 : vector<1x8xf32>
    %c0_10 = arith.constant 0 : index
    %c0_11 = arith.constant 0 : index
    %18 = vector.load %arg1[%c0_10, %c0_11] : memref<256x8xbf16, #tpu.memory_space<vmem>>, vector<256x8xbf16>
    %19 = arith.extf %18 : vector<256x8xbf16> to vector<256x8xf32>
    %20 = vector.broadcast %14 : vector<1x8xf32> to vector<256x8xf32>
    %21 = arith.mulf %19, %20 : vector<256x8xf32>
    %22 = vector.broadcast %17 : vector<1x8xf32> to vector<256x8xf32>
    %23 = arith.addf %21, %22 : vector<256x8xf32>
    %cst_12 = arith.constant 0.000000e+00 : f32
    %24 = vector.broadcast %cst_12 : f32 to vector<256x8xf32>
    %25 = arith.maximumf %23, %24 : vector<256x8xf32>
    %26 = arith.truncf %25 : vector<256x8xf32> to vector<256x8xbf16>
    %c0_13 = arith.constant 0 : index
    %c0_14 = arith.constant 0 : index
    %27 = vector.load %arg6[%c0_13, %c0_14] : memref<256x8xbf16, #tpu.memory_space<vmem>>, vector<256x8xbf16>
    tpu.vector_store %arg6[%c0_13, %c0_14], %26 {strides = array<i32>} : memref<256x8xbf16, #tpu.memory_space<vmem>>, vector<256x8xbf16>,
    return
  }
  func.func @transform_0(%arg0: i32) -> (i32, i32) {
    %c0_i32 = arith.constant 0 : i32
    %c0_i32_0 = arith.constant 0 : i32
    return %arg0, %c0_i32 : i32, i32
  }
  func.func @transform_1(%arg0: i32) -> (i32, i32) {
    %c0_i32 = arith.constant 0 : i32
    %c0_i32_0 = arith.constant 0 : i32
    %c0_i32_1 = arith.constant 0 : i32
    return %c0_i32, %c0_i32_0 : i32, i32
  }
  func.func @transform_2(%arg0: i32) -> (i32, i32) {
    %c0_i32 = arith.constant 0 : i32
    %c0_i32_0 = arith.constant 0 : i32
    %c0_i32_1 = arith.constant 0 : i32
    return %c0_i32, %c0_i32_0 : i32, i32
  }
  func.func @transform_3(%arg0: i32) -> (i32, i32) {
    %c0_i32 = arith.constant 0 : i32
    %c0_i32_0 = arith.constant 0 : i32
    %c0_i32_1 = arith.constant 0 : i32
    return %c0_i32, %c0_i32_0 : i32, i32
  }
  func.func @transform_4(%arg0: i32) -> (i32, i32) {
    %c0_i32 = arith.constant 0 : i32
    %c0_i32_0 = arith.constant 0 : i32
    %c0_i32_1 = arith.constant 0 : i32
    return %c0_i32, %c0_i32_0 : i32, i32
  }
  func.func @transform_5(%arg0: i32) -> (i32, i32) {
    %c0_i32 = arith.constant 0 : i32
    %c0_i32_0 = arith.constant 0 : i32
    return %arg0, %c0_i32 : i32, i32
  }
}

module attributes {stable_mosaic.version = 11 : i64} {
  func.func @_matmul_stats_kernel(%arg0: i32, %arg1: memref<128x128xbf16, #tpu.memory_space<vmem>>, %arg2: memref<128x16xbf16, #tpu.memory_space<vmem>>, %arg3: memref<128x16xbf16, #tpu.memory_space<vmem>>, %arg4: memref<1x16xf32, #tpu.memory_space<vmem>>, %arg5: memref<1x16xf32, #tpu.memory_space<vmem>>) attributes {dimension_semantics = [#tpu.dimension_semantics<arbitrary>], iteration_bounds = array<i64: 1>, scalar_prefetch = 0 : i64, scratch_operands = 0 : i64, tpu.core_type = #tpu.core_type<tc>, window_params = [{transform_indices = @transform_0, window_bounds = array<i64: 128, 128>}, {pipeline_mode = #tpu.pipeline_mode<synchronous>, transform_indices = @transform_1, window_bounds = array<i64: 128, 16>}, {transform_indices = @transform_2, window_bounds = array<i64: 128, 16>}, {pipeline_mode = #tpu.pipeline_mode<synchronous>, transform_indices = @transform_3, window_bounds = array<i64: 1, 16>}, {pipeline_mode = #tpu.pipeline_mode<synchronous>, transform_indices = @transform_4, window_bounds = array<i64: 1, 16>}]} {
    %c0 = arith.constant 0 : index
    %c0_0 = arith.constant 0 : index
    %0 = vector.load %arg1[%c0, %c0_0] : memref<128x128xbf16, #tpu.memory_space<vmem>>, vector<128x128xbf16>
    %c0_1 = arith.constant 0 : index
    %c0_2 = arith.constant 0 : index
    %1 = vector.load %arg2[%c0_1, %c0_2] : memref<128x16xbf16, #tpu.memory_space<vmem>>, vector<128x16xbf16>
    %cst = arith.constant dense<0.000000e+00> : vector<128x16xf32>
    %2 = tpu.matmul %0, %1, %cst {dimension_numbers = #tpu.dot_dimension_numbers<[1], [0], [0], [1], [0, 0, 1, 1], [], []>} : vector<128x128xbf16>, vector<128x16xbf16>, vector<128x16xf32> -> vector<128x16xf32>
    %3 = arith.truncf %2 : vector<128x16xf32> to vector<128x16xbf16>
    %c0_3 = arith.constant 0 : index
    %c0_4 = arith.constant 0 : index
    %4 = vector.load %arg3[%c0_3, %c0_4] : memref<128x16xbf16, #tpu.memory_space<vmem>>, vector<128x16xbf16>
    tpu.vector_store %arg3[%c0_3, %c0_4], %3 {strides = array<i32>} : memref<128x16xbf16, #tpu.memory_space<vmem>>, vector<128x16xbf16>,
    %c0_i32 = arith.constant 0 : i32
    %5 = arith.cmpi eq, %arg0, %c0_i32 : i32
    %6 = arith.extui %5 : i1 to i32
    %c0_i32_5 = arith.constant 0 : i32
    %7 = arith.cmpi ne, %6, %c0_i32_5 : i32
    scf.if %7 {
      %cst_16 = arith.constant 0.000000e+00 : f32
      %19 = vector.broadcast %cst_16 : f32 to vector<1x16xf32>
      %c0_17 = arith.constant 0 : index
      %c0_18 = arith.constant 0 : index
      %20 = vector.load %arg4[%c0_17, %c0_18] : memref<1x16xf32, #tpu.memory_space<vmem>>, vector<1x16xf32>
      tpu.vector_store %arg4[%c0_17, %c0_18], %19 {strides = array<i32>} : memref<1x16xf32, #tpu.memory_space<vmem>>, vector<1x16xf32>,
      %cst_19 = arith.constant 0.000000e+00 : f32
      %21 = vector.broadcast %cst_19 : f32 to vector<1x16xf32>
      %c0_20 = arith.constant 0 : index
      %c0_21 = arith.constant 0 : index
      %22 = vector.load %arg5[%c0_20, %c0_21] : memref<1x16xf32, #tpu.memory_space<vmem>>, vector<1x16xf32>
      tpu.vector_store %arg5[%c0_20, %c0_21], %21 {strides = array<i32>} : memref<1x16xf32, #tpu.memory_space<vmem>>, vector<1x16xf32>,
    } else {
    }
    %c0_6 = arith.constant 0 : index
    %c0_7 = arith.constant 0 : index
    %8 = vector.load %arg4[%c0_6, %c0_7] : memref<1x16xf32, #tpu.memory_space<vmem>>, vector<1x16xf32>
    %cst_8 = arith.constant dense<0.000000e+00> : vector<16xf32>
    %9 = vector.multi_reduction <add>, %2, %cst_8 [0] : vector<128x16xf32> to vector<16xf32>
    %10 = vector.shape_cast %9 : vector<16xf32> to vector<1x16xf32>
    %11 = arith.addf %8, %10 : vector<1x16xf32>
    %c0_9 = arith.constant 0 : index
    %c0_10 = arith.constant 0 : index
    %12 = vector.load %arg4[%c0_9, %c0_10] : memref<1x16xf32, #tpu.memory_space<vmem>>, vector<1x16xf32>
    tpu.vector_store %arg4[%c0_9, %c0_10], %11 {strides = array<i32>} : memref<1x16xf32, #tpu.memory_space<vmem>>, vector<1x16xf32>,
    %c0_11 = arith.constant 0 : index
    %c0_12 = arith.constant 0 : index
    %13 = vector.load %arg5[%c0_11, %c0_12] : memref<1x16xf32, #tpu.memory_space<vmem>>, vector<1x16xf32>
    %14 = arith.mulf %2, %2 : vector<128x16xf32>
    %cst_13 = arith.constant dense<0.000000e+00> : vector<16xf32>
    %15 = vector.multi_reduction <add>, %14, %cst_13 [0] : vector<128x16xf32> to vector<16xf32>
    %16 = vector.shape_cast %15 : vector<16xf32> to vector<1x16xf32>
    %17 = arith.addf %13, %16 : vector<1x16xf32>
    %c0_14 = arith.constant 0 : index
    %c0_15 = arith.constant 0 : index
    %18 = vector.load %arg5[%c0_14, %c0_15] : memref<1x16xf32, #tpu.memory_space<vmem>>, vector<1x16xf32>
    tpu.vector_store %arg5[%c0_14, %c0_15], %17 {strides = array<i32>} : memref<1x16xf32, #tpu.memory_space<vmem>>, vector<1x16xf32>,
    return
  }
  func.func @transform_0(%arg0: i32) -> (i32, i32) {
    %c0_i32 = arith.constant 0 : i32
    %c0_i32_0 = arith.constant 0 : i32
    return %arg0, %c0_i32 : i32, i32
  }
  func.func @transform_1(%arg0: i32) -> (i32, i32) {
    %c0_i32 = arith.constant 0 : i32
    %c0_i32_0 = arith.constant 0 : i32
    %c0_i32_1 = arith.constant 0 : i32
    return %c0_i32, %c0_i32_0 : i32, i32
  }
  func.func @transform_2(%arg0: i32) -> (i32, i32) {
    %c0_i32 = arith.constant 0 : i32
    %c0_i32_0 = arith.constant 0 : i32
    return %arg0, %c0_i32 : i32, i32
  }
  func.func @transform_3(%arg0: i32) -> (i32, i32) {
    %c0_i32 = arith.constant 0 : i32
    %c0_i32_0 = arith.constant 0 : i32
    %c0_i32_1 = arith.constant 0 : i32
    return %c0_i32, %c0_i32_0 : i32, i32
  }
  func.func @transform_4(%arg0: i32) -> (i32, i32) {
    %c0_i32 = arith.constant 0 : i32
    %c0_i32_0 = arith.constant 0 : i32
    %c0_i32_1 = arith.constant 0 : i32
    return %c0_i32, %c0_i32_0 : i32, i32
  }
}

module attributes {stable_mosaic.version = 11 : i64} {
  func.func @_bn_act_kernel(%arg0: i32, %arg1: memref<128x16xbf16, #tpu.memory_space<vmem>>, %arg2: memref<1x16xf32, #tpu.memory_space<vmem>>, %arg3: memref<1x16xf32, #tpu.memory_space<vmem>>, %arg4: memref<1x16xf32, #tpu.memory_space<vmem>>, %arg5: memref<1x16xf32, #tpu.memory_space<vmem>>, %arg6: memref<128x16xbf16, #tpu.memory_space<vmem>>) attributes {dimension_semantics = [#tpu.dimension_semantics<parallel>], iteration_bounds = array<i64: 1>, scalar_prefetch = 0 : i64, scratch_operands = 0 : i64, tpu.core_type = #tpu.core_type<tc>, window_params = [{transform_indices = @transform_0, window_bounds = array<i64: 128, 16>}, {pipeline_mode = #tpu.pipeline_mode<synchronous>, transform_indices = @transform_1, window_bounds = array<i64: 1, 16>}, {pipeline_mode = #tpu.pipeline_mode<synchronous>, transform_indices = @transform_2, window_bounds = array<i64: 1, 16>}, {pipeline_mode = #tpu.pipeline_mode<synchronous>, transform_indices = @transform_3, window_bounds = array<i64: 1, 16>}, {pipeline_mode = #tpu.pipeline_mode<synchronous>, transform_indices = @transform_4, window_bounds = array<i64: 1, 16>}, {transform_indices = @transform_5, window_bounds = array<i64: 128, 16>}]} {
    %c0 = arith.constant 0 : index
    %c0_0 = arith.constant 0 : index
    %0 = vector.load %arg2[%c0, %c0_0] : memref<1x16xf32, #tpu.memory_space<vmem>>, vector<1x16xf32>
    %cst = arith.constant 7.812500e-03 : f32
    %1 = vector.broadcast %cst : f32 to vector<1x16xf32>
    %2 = arith.mulf %0, %1 : vector<1x16xf32>
    %c0_1 = arith.constant 0 : index
    %c0_2 = arith.constant 0 : index
    %3 = vector.load %arg3[%c0_1, %c0_2] : memref<1x16xf32, #tpu.memory_space<vmem>>, vector<1x16xf32>
    %cst_3 = arith.constant 7.812500e-03 : f32
    %4 = vector.broadcast %cst_3 : f32 to vector<1x16xf32>
    %5 = arith.mulf %3, %4 : vector<1x16xf32>
    %6 = arith.mulf %2, %2 : vector<1x16xf32>
    %7 = arith.subf %5, %6 : vector<1x16xf32>
    %cst_4 = arith.constant 0.000000e+00 : f32
    %8 = vector.broadcast %cst_4 : f32 to vector<1x16xf32>
    %9 = arith.maximumf %7, %8 : vector<1x16xf32>
    %c0_5 = arith.constant 0 : index
    %c0_6 = arith.constant 0 : index
    %10 = vector.load %arg4[%c0_5, %c0_6] : memref<1x16xf32, #tpu.memory_space<vmem>>, vector<1x16xf32>
    %cst_7 = arith.constant 9.99999974E-6 : f32
    %11 = vector.broadcast %cst_7 : f32 to vector<1x16xf32>
    %12 = arith.addf %9, %11 : vector<1x16xf32>
    %13 = math.rsqrt %12 : vector<1x16xf32>
    %14 = arith.mulf %10, %13 : vector<1x16xf32>
    %c0_8 = arith.constant 0 : index
    %c0_9 = arith.constant 0 : index
    %15 = vector.load %arg5[%c0_8, %c0_9] : memref<1x16xf32, #tpu.memory_space<vmem>>, vector<1x16xf32>
    %16 = arith.mulf %2, %14 : vector<1x16xf32>
    %17 = arith.subf %15, %16 : vector<1x16xf32>
    %c0_10 = arith.constant 0 : index
    %c0_11 = arith.constant 0 : index
    %18 = vector.load %arg1[%c0_10, %c0_11] : memref<128x16xbf16, #tpu.memory_space<vmem>>, vector<128x16xbf16>
    %19 = arith.extf %18 : vector<128x16xbf16> to vector<128x16xf32>
    %20 = vector.broadcast %14 : vector<1x16xf32> to vector<128x16xf32>
    %21 = arith.mulf %19, %20 : vector<128x16xf32>
    %22 = vector.broadcast %17 : vector<1x16xf32> to vector<128x16xf32>
    %23 = arith.addf %21, %22 : vector<128x16xf32>
    %cst_12 = arith.constant 0.000000e+00 : f32
    %24 = vector.broadcast %cst_12 : f32 to vector<128x16xf32>
    %25 = arith.maximumf %23, %24 : vector<128x16xf32>
    %26 = arith.truncf %25 : vector<128x16xf32> to vector<128x16xbf16>
    %c0_13 = arith.constant 0 : index
    %c0_14 = arith.constant 0 : index
    %27 = vector.load %arg6[%c0_13, %c0_14] : memref<128x16xbf16, #tpu.memory_space<vmem>>, vector<128x16xbf16>
    tpu.vector_store %arg6[%c0_13, %c0_14], %26 {strides = array<i32>} : memref<128x16xbf16, #tpu.memory_space<vmem>>, vector<128x16xbf16>,
    return
  }
  func.func @transform_0(%arg0: i32) -> (i32, i32) {
    %c0_i32 = arith.constant 0 : i32
    %c0_i32_0 = arith.constant 0 : i32
    return %arg0, %c0_i32 : i32, i32
  }
  func.func @transform_1(%arg0: i32) -> (i32, i32) {
    %c0_i32 = arith.constant 0 : i32
    %c0_i32_0 = arith.constant 0 : i32
    %c0_i32_1 = arith.constant 0 : i32
    return %c0_i32, %c0_i32_0 : i32, i32
  }
  func.func @transform_2(%arg0: i32) -> (i32, i32) {
    %c0_i32 = arith.constant 0 : i32
    %c0_i32_0 = arith.constant 0 : i32
    %c0_i32_1 = arith.constant 0 : i32
    return %c0_i32, %c0_i32_0 : i32, i32
  }
  func.func @transform_3(%arg0: i32) -> (i32, i32) {
    %c0_i32 = arith.constant 0 : i32
    %c0_i32_0 = arith.constant 0 : i32
    %c0_i32_1 = arith.constant 0 : i32
    return %c0_i32, %c0_i32_0 : i32, i32
  }
  func.func @transform_4(%arg0: i32) -> (i32, i32) {
    %c0_i32 = arith.constant 0 : i32
    %c0_i32_0 = arith.constant 0 : i32
    %c0_i32_1 = arith.constant 0 : i32
    return %c0_i32, %c0_i32_0 : i32, i32
  }
  func.func @transform_5(%arg0: i32) -> (i32, i32) {
    %c0_i32 = arith.constant 0 : i32
    %c0_i32_0 = arith.constant 0 : i32
    return %arg0, %c0_i32 : i32, i32
  }
}

module attributes {stable_mosaic.version = 11 : i64} {
  func.func @_bn_act_kernel(%arg0: i32, %arg1: memref<32x32xbf16, #tpu.memory_space<vmem>>, %arg2: memref<1x32xf32, #tpu.memory_space<vmem>>, %arg3: memref<1x32xf32, #tpu.memory_space<vmem>>, %arg4: memref<1x32xf32, #tpu.memory_space<vmem>>, %arg5: memref<1x32xf32, #tpu.memory_space<vmem>>, %arg6: memref<32x32xbf16, #tpu.memory_space<vmem>>) attributes {dimension_semantics = [#tpu.dimension_semantics<parallel>], iteration_bounds = array<i64: 1>, scalar_prefetch = 0 : i64, scratch_operands = 0 : i64, tpu.core_type = #tpu.core_type<tc>, window_params = [{transform_indices = @transform_0, window_bounds = array<i64: 32, 32>}, {pipeline_mode = #tpu.pipeline_mode<synchronous>, transform_indices = @transform_1, window_bounds = array<i64: 1, 32>}, {pipeline_mode = #tpu.pipeline_mode<synchronous>, transform_indices = @transform_2, window_bounds = array<i64: 1, 32>}, {pipeline_mode = #tpu.pipeline_mode<synchronous>, transform_indices = @transform_3, window_bounds = array<i64: 1, 32>}, {pipeline_mode = #tpu.pipeline_mode<synchronous>, transform_indices = @transform_4, window_bounds = array<i64: 1, 32>}, {transform_indices = @transform_5, window_bounds = array<i64: 32, 32>}]} {
    %c0 = arith.constant 0 : index
    %c0_0 = arith.constant 0 : index
    %0 = vector.load %arg2[%c0, %c0_0] : memref<1x32xf32, #tpu.memory_space<vmem>>, vector<1x32xf32>
    %cst = arith.constant 3.125000e-02 : f32
    %1 = vector.broadcast %cst : f32 to vector<1x32xf32>
    %2 = arith.mulf %0, %1 : vector<1x32xf32>
    %c0_1 = arith.constant 0 : index
    %c0_2 = arith.constant 0 : index
    %3 = vector.load %arg3[%c0_1, %c0_2] : memref<1x32xf32, #tpu.memory_space<vmem>>, vector<1x32xf32>
    %cst_3 = arith.constant 3.125000e-02 : f32
    %4 = vector.broadcast %cst_3 : f32 to vector<1x32xf32>
    %5 = arith.mulf %3, %4 : vector<1x32xf32>
    %6 = arith.mulf %2, %2 : vector<1x32xf32>
    %7 = arith.subf %5, %6 : vector<1x32xf32>
    %cst_4 = arith.constant 0.000000e+00 : f32
    %8 = vector.broadcast %cst_4 : f32 to vector<1x32xf32>
    %9 = arith.maximumf %7, %8 : vector<1x32xf32>
    %c0_5 = arith.constant 0 : index
    %c0_6 = arith.constant 0 : index
    %10 = vector.load %arg4[%c0_5, %c0_6] : memref<1x32xf32, #tpu.memory_space<vmem>>, vector<1x32xf32>
    %cst_7 = arith.constant 9.99999974E-6 : f32
    %11 = vector.broadcast %cst_7 : f32 to vector<1x32xf32>
    %12 = arith.addf %9, %11 : vector<1x32xf32>
    %13 = math.rsqrt %12 : vector<1x32xf32>
    %14 = arith.mulf %10, %13 : vector<1x32xf32>
    %c0_8 = arith.constant 0 : index
    %c0_9 = arith.constant 0 : index
    %15 = vector.load %arg5[%c0_8, %c0_9] : memref<1x32xf32, #tpu.memory_space<vmem>>, vector<1x32xf32>
    %16 = arith.mulf %2, %14 : vector<1x32xf32>
    %17 = arith.subf %15, %16 : vector<1x32xf32>
    %c0_10 = arith.constant 0 : index
    %c0_11 = arith.constant 0 : index
    %18 = vector.load %arg1[%c0_10, %c0_11] : memref<32x32xbf16, #tpu.memory_space<vmem>>, vector<32x32xbf16>
    %19 = arith.extf %18 : vector<32x32xbf16> to vector<32x32xf32>
    %20 = vector.broadcast %14 : vector<1x32xf32> to vector<32x32xf32>
    %21 = arith.mulf %19, %20 : vector<32x32xf32>
    %22 = vector.broadcast %17 : vector<1x32xf32> to vector<32x32xf32>
    %23 = arith.addf %21, %22 : vector<32x32xf32>
    %cst_12 = arith.constant 0.000000e+00 : f32
    %24 = vector.broadcast %cst_12 : f32 to vector<32x32xf32>
    %25 = arith.maximumf %23, %24 : vector<32x32xf32>
    %26 = arith.truncf %25 : vector<32x32xf32> to vector<32x32xbf16>
    %c0_13 = arith.constant 0 : index
    %c0_14 = arith.constant 0 : index
    %27 = vector.load %arg6[%c0_13, %c0_14] : memref<32x32xbf16, #tpu.memory_space<vmem>>, vector<32x32xbf16>
    tpu.vector_store %arg6[%c0_13, %c0_14], %26 {strides = array<i32>} : memref<32x32xbf16, #tpu.memory_space<vmem>>, vector<32x32xbf16>,
    return
  }
  func.func @transform_0(%arg0: i32) -> (i32, i32) {
    %c0_i32 = arith.constant 0 : i32
    %c0_i32_0 = arith.constant 0 : i32
    return %arg0, %c0_i32 : i32, i32
  }
  func.func @transform_1(%arg0: i32) -> (i32, i32) {
    %c0_i32 = arith.constant 0 : i32
    %c0_i32_0 = arith.constant 0 : i32
    %c0_i32_1 = arith.constant 0 : i32
    return %c0_i32, %c0_i32_0 : i32, i32
  }
  func.func @transform_2(%arg0: i32) -> (i32, i32) {
    %c0_i32 = arith.constant 0 : i32
    %c0_i32_0 = arith.constant 0 : i32
    %c0_i32_1 = arith.constant 0 : i32
    return %c0_i32, %c0_i32_0 : i32, i32
  }
  func.func @transform_3(%arg0: i32) -> (i32, i32) {
    %c0_i32 = arith.constant 0 : i32
    %c0_i32_0 = arith.constant 0 : i32
    %c0_i32_1 = arith.constant 0 : i32
    return %c0_i32, %c0_i32_0 : i32, i32
  }
  func.func @transform_4(%arg0: i32) -> (i32, i32) {
    %c0_i32 = arith.constant 0 : i32
    %c0_i32_0 = arith.constant 0 : i32
    %c0_i32_1 = arith.constant 0 : i32
    return %c0_i32, %c0_i32_0 : i32, i32
  }
  func.func @transform_5(%arg0: i32) -> (i32, i32) {
    %c0_i32 = arith.constant 0 : i32
    %c0_i32_0 = arith.constant 0 : i32
    return %arg0, %c0_i32 : i32, i32
  }
}

module attributes {stable_mosaic.version = 11 : i64} {
  func.func @_matmul_stats_kernel(%arg0: i32, %arg1: memref<32x256xbf16, #tpu.memory_space<vmem>>, %arg2: memref<256x32xbf16, #tpu.memory_space<vmem>>, %arg3: memref<32x32xbf16, #tpu.memory_space<vmem>>, %arg4: memref<1x32xf32, #tpu.memory_space<vmem>>, %arg5: memref<1x32xf32, #tpu.memory_space<vmem>>) attributes {dimension_semantics = [#tpu.dimension_semantics<arbitrary>], iteration_bounds = array<i64: 1>, scalar_prefetch = 0 : i64, scratch_operands = 0 : i64, tpu.core_type = #tpu.core_type<tc>, window_params = [{transform_indices = @transform_0, window_bounds = array<i64: 32, 256>}, {pipeline_mode = #tpu.pipeline_mode<synchronous>, transform_indices = @transform_1, window_bounds = array<i64: 256, 32>}, {transform_indices = @transform_2, window_bounds = array<i64: 32, 32>}, {pipeline_mode = #tpu.pipeline_mode<synchronous>, transform_indices = @transform_3, window_bounds = array<i64: 1, 32>}, {pipeline_mode = #tpu.pipeline_mode<synchronous>, transform_indices = @transform_4, window_bounds = array<i64: 1, 32>}]} {
    %c0 = arith.constant 0 : index
    %c0_0 = arith.constant 0 : index
    %0 = vector.load %arg1[%c0, %c0_0] : memref<32x256xbf16, #tpu.memory_space<vmem>>, vector<32x256xbf16>
    %c0_1 = arith.constant 0 : index
    %c0_2 = arith.constant 0 : index
    %1 = vector.load %arg2[%c0_1, %c0_2] : memref<256x32xbf16, #tpu.memory_space<vmem>>, vector<256x32xbf16>
    %cst = arith.constant dense<0.000000e+00> : vector<32x32xf32>
    %2 = tpu.matmul %0, %1, %cst {dimension_numbers = #tpu.dot_dimension_numbers<[1], [0], [0], [1], [0, 0, 1, 1], [], []>} : vector<32x256xbf16>, vector<256x32xbf16>, vector<32x32xf32> -> vector<32x32xf32>
    %3 = arith.truncf %2 : vector<32x32xf32> to vector<32x32xbf16>
    %c0_3 = arith.constant 0 : index
    %c0_4 = arith.constant 0 : index
    %4 = vector.load %arg3[%c0_3, %c0_4] : memref<32x32xbf16, #tpu.memory_space<vmem>>, vector<32x32xbf16>
    tpu.vector_store %arg3[%c0_3, %c0_4], %3 {strides = array<i32>} : memref<32x32xbf16, #tpu.memory_space<vmem>>, vector<32x32xbf16>,
    %c0_i32 = arith.constant 0 : i32
    %5 = arith.cmpi eq, %arg0, %c0_i32 : i32
    %6 = arith.extui %5 : i1 to i32
    %c0_i32_5 = arith.constant 0 : i32
    %7 = arith.cmpi ne, %6, %c0_i32_5 : i32
    scf.if %7 {
      %cst_16 = arith.constant 0.000000e+00 : f32
      %19 = vector.broadcast %cst_16 : f32 to vector<1x32xf32>
      %c0_17 = arith.constant 0 : index
      %c0_18 = arith.constant 0 : index
      %20 = vector.load %arg4[%c0_17, %c0_18] : memref<1x32xf32, #tpu.memory_space<vmem>>, vector<1x32xf32>
      tpu.vector_store %arg4[%c0_17, %c0_18], %19 {strides = array<i32>} : memref<1x32xf32, #tpu.memory_space<vmem>>, vector<1x32xf32>,
      %cst_19 = arith.constant 0.000000e+00 : f32
      %21 = vector.broadcast %cst_19 : f32 to vector<1x32xf32>
      %c0_20 = arith.constant 0 : index
      %c0_21 = arith.constant 0 : index
      %22 = vector.load %arg5[%c0_20, %c0_21] : memref<1x32xf32, #tpu.memory_space<vmem>>, vector<1x32xf32>
      tpu.vector_store %arg5[%c0_20, %c0_21], %21 {strides = array<i32>} : memref<1x32xf32, #tpu.memory_space<vmem>>, vector<1x32xf32>,
    } else {
    }
    %c0_6 = arith.constant 0 : index
    %c0_7 = arith.constant 0 : index
    %8 = vector.load %arg4[%c0_6, %c0_7] : memref<1x32xf32, #tpu.memory_space<vmem>>, vector<1x32xf32>
    %cst_8 = arith.constant dense<0.000000e+00> : vector<32xf32>
    %9 = vector.multi_reduction <add>, %2, %cst_8 [0] : vector<32x32xf32> to vector<32xf32>
    %10 = vector.shape_cast %9 : vector<32xf32> to vector<1x32xf32>
    %11 = arith.addf %8, %10 : vector<1x32xf32>
    %c0_9 = arith.constant 0 : index
    %c0_10 = arith.constant 0 : index
    %12 = vector.load %arg4[%c0_9, %c0_10] : memref<1x32xf32, #tpu.memory_space<vmem>>, vector<1x32xf32>
    tpu.vector_store %arg4[%c0_9, %c0_10], %11 {strides = array<i32>} : memref<1x32xf32, #tpu.memory_space<vmem>>, vector<1x32xf32>,
    %c0_11 = arith.constant 0 : index
    %c0_12 = arith.constant 0 : index
    %13 = vector.load %arg5[%c0_11, %c0_12] : memref<1x32xf32, #tpu.memory_space<vmem>>, vector<1x32xf32>
    %14 = arith.mulf %2, %2 : vector<32x32xf32>
    %cst_13 = arith.constant dense<0.000000e+00> : vector<32xf32>
    %15 = vector.multi_reduction <add>, %14, %cst_13 [0] : vector<32x32xf32> to vector<32xf32>
    %16 = vector.shape_cast %15 : vector<32xf32> to vector<1x32xf32>
    %17 = arith.addf %13, %16 : vector<1x32xf32>
    %c0_14 = arith.constant 0 : index
    %c0_15 = arith.constant 0 : index
    %18 = vector.load %arg5[%c0_14, %c0_15] : memref<1x32xf32, #tpu.memory_space<vmem>>, vector<1x32xf32>
    tpu.vector_store %arg5[%c0_14, %c0_15], %17 {strides = array<i32>} : memref<1x32xf32, #tpu.memory_space<vmem>>, vector<1x32xf32>,
    return
  }
  func.func @transform_0(%arg0: i32) -> (i32, i32) {
    %c0_i32 = arith.constant 0 : i32
    %c0_i32_0 = arith.constant 0 : i32
    return %arg0, %c0_i32 : i32, i32
  }
  func.func @transform_1(%arg0: i32) -> (i32, i32) {
    %c0_i32 = arith.constant 0 : i32
    %c0_i32_0 = arith.constant 0 : i32
    %c0_i32_1 = arith.constant 0 : i32
    return %c0_i32, %c0_i32_0 : i32, i32
  }
  func.func @transform_2(%arg0: i32) -> (i32, i32) {
    %c0_i32 = arith.constant 0 : i32
    %c0_i32_0 = arith.constant 0 : i32
    return %arg0, %c0_i32 : i32, i32
  }
  func.func @transform_3(%arg0: i32) -> (i32, i32) {
    %c0_i32 = arith.constant 0 : i32
    %c0_i32_0 = arith.constant 0 : i32
    %c0_i32_1 = arith.constant 0 : i32
    return %c0_i32, %c0_i32_0 : i32, i32
  }
  func.func @transform_4(%arg0: i32) -> (i32, i32) {
    %c0_i32 = arith.constant 0 : i32
    %c0_i32_0 = arith.constant 0 : i32
    %c0_i32_1 = arith.constant 0 : i32
    return %c0_i32, %c0_i32_0 : i32, i32
  }
}

module attributes {stable_mosaic.version = 11 : i64} {
  func.func @_matmul_stats_kernel(%arg0: i32, %arg1: memref<32x384xbf16, #tpu.memory_space<vmem>>, %arg2: memref<384x32xbf16, #tpu.memory_space<vmem>>, %arg3: memref<32x32xbf16, #tpu.memory_space<vmem>>, %arg4: memref<1x32xf32, #tpu.memory_space<vmem>>, %arg5: memref<1x32xf32, #tpu.memory_space<vmem>>) attributes {dimension_semantics = [#tpu.dimension_semantics<arbitrary>], iteration_bounds = array<i64: 1>, scalar_prefetch = 0 : i64, scratch_operands = 0 : i64, tpu.core_type = #tpu.core_type<tc>, window_params = [{transform_indices = @transform_0, window_bounds = array<i64: 32, 384>}, {pipeline_mode = #tpu.pipeline_mode<synchronous>, transform_indices = @transform_1, window_bounds = array<i64: 384, 32>}, {transform_indices = @transform_2, window_bounds = array<i64: 32, 32>}, {pipeline_mode = #tpu.pipeline_mode<synchronous>, transform_indices = @transform_3, window_bounds = array<i64: 1, 32>}, {pipeline_mode = #tpu.pipeline_mode<synchronous>, transform_indices = @transform_4, window_bounds = array<i64: 1, 32>}]} {
    %c0 = arith.constant 0 : index
    %c0_0 = arith.constant 0 : index
    %0 = vector.load %arg1[%c0, %c0_0] : memref<32x384xbf16, #tpu.memory_space<vmem>>, vector<32x384xbf16>
    %c0_1 = arith.constant 0 : index
    %c0_2 = arith.constant 0 : index
    %1 = vector.load %arg2[%c0_1, %c0_2] : memref<384x32xbf16, #tpu.memory_space<vmem>>, vector<384x32xbf16>
    %cst = arith.constant dense<0.000000e+00> : vector<32x32xf32>
    %2 = tpu.matmul %0, %1, %cst {dimension_numbers = #tpu.dot_dimension_numbers<[1], [0], [0], [1], [0, 0, 1, 1], [], []>} : vector<32x384xbf16>, vector<384x32xbf16>, vector<32x32xf32> -> vector<32x32xf32>
    %3 = arith.truncf %2 : vector<32x32xf32> to vector<32x32xbf16>
    %c0_3 = arith.constant 0 : index
    %c0_4 = arith.constant 0 : index
    %4 = vector.load %arg3[%c0_3, %c0_4] : memref<32x32xbf16, #tpu.memory_space<vmem>>, vector<32x32xbf16>
    tpu.vector_store %arg3[%c0_3, %c0_4], %3 {strides = array<i32>} : memref<32x32xbf16, #tpu.memory_space<vmem>>, vector<32x32xbf16>,
    %c0_i32 = arith.constant 0 : i32
    %5 = arith.cmpi eq, %arg0, %c0_i32 : i32
    %6 = arith.extui %5 : i1 to i32
    %c0_i32_5 = arith.constant 0 : i32
    %7 = arith.cmpi ne, %6, %c0_i32_5 : i32
    scf.if %7 {
      %cst_16 = arith.constant 0.000000e+00 : f32
      %19 = vector.broadcast %cst_16 : f32 to vector<1x32xf32>
      %c0_17 = arith.constant 0 : index
      %c0_18 = arith.constant 0 : index
      %20 = vector.load %arg4[%c0_17, %c0_18] : memref<1x32xf32, #tpu.memory_space<vmem>>, vector<1x32xf32>
      tpu.vector_store %arg4[%c0_17, %c0_18], %19 {strides = array<i32>} : memref<1x32xf32, #tpu.memory_space<vmem>>, vector<1x32xf32>,
      %cst_19 = arith.constant 0.000000e+00 : f32
      %21 = vector.broadcast %cst_19 : f32 to vector<1x32xf32>
      %c0_20 = arith.constant 0 : index
      %c0_21 = arith.constant 0 : index
      %22 = vector.load %arg5[%c0_20, %c0_21] : memref<1x32xf32, #tpu.memory_space<vmem>>, vector<1x32xf32>
      tpu.vector_store %arg5[%c0_20, %c0_21], %21 {strides = array<i32>} : memref<1x32xf32, #tpu.memory_space<vmem>>, vector<1x32xf32>,
    } else {
    }
    %c0_6 = arith.constant 0 : index
    %c0_7 = arith.constant 0 : index
    %8 = vector.load %arg4[%c0_6, %c0_7] : memref<1x32xf32, #tpu.memory_space<vmem>>, vector<1x32xf32>
    %cst_8 = arith.constant dense<0.000000e+00> : vector<32xf32>
    %9 = vector.multi_reduction <add>, %2, %cst_8 [0] : vector<32x32xf32> to vector<32xf32>
    %10 = vector.shape_cast %9 : vector<32xf32> to vector<1x32xf32>
    %11 = arith.addf %8, %10 : vector<1x32xf32>
    %c0_9 = arith.constant 0 : index
    %c0_10 = arith.constant 0 : index
    %12 = vector.load %arg4[%c0_9, %c0_10] : memref<1x32xf32, #tpu.memory_space<vmem>>, vector<1x32xf32>
    tpu.vector_store %arg4[%c0_9, %c0_10], %11 {strides = array<i32>} : memref<1x32xf32, #tpu.memory_space<vmem>>, vector<1x32xf32>,
    %c0_11 = arith.constant 0 : index
    %c0_12 = arith.constant 0 : index
    %13 = vector.load %arg5[%c0_11, %c0_12] : memref<1x32xf32, #tpu.memory_space<vmem>>, vector<1x32xf32>
    %14 = arith.mulf %2, %2 : vector<32x32xf32>
    %cst_13 = arith.constant dense<0.000000e+00> : vector<32xf32>
    %15 = vector.multi_reduction <add>, %14, %cst_13 [0] : vector<32x32xf32> to vector<32xf32>
    %16 = vector.shape_cast %15 : vector<32xf32> to vector<1x32xf32>
    %17 = arith.addf %13, %16 : vector<1x32xf32>
    %c0_14 = arith.constant 0 : index
    %c0_15 = arith.constant 0 : index
    %18 = vector.load %arg5[%c0_14, %c0_15] : memref<1x32xf32, #tpu.memory_space<vmem>>, vector<1x32xf32>
    tpu.vector_store %arg5[%c0_14, %c0_15], %17 {strides = array<i32>} : memref<1x32xf32, #tpu.memory_space<vmem>>, vector<1x32xf32>,
    return
  }
  func.func @transform_0(%arg0: i32) -> (i32, i32) {
    %c0_i32 = arith.constant 0 : i32
    %c0_i32_0 = arith.constant 0 : i32
    return %arg0, %c0_i32 : i32, i32
  }
  func.func @transform_1(%arg0: i32) -> (i32, i32) {
    %c0_i32 = arith.constant 0 : i32
    %c0_i32_0 = arith.constant 0 : i32
    %c0_i32_1 = arith.constant 0 : i32
    return %c0_i32, %c0_i32_0 : i32, i32
  }
  func.func @transform_2(%arg0: i32) -> (i32, i32) {
    %c0_i32 = arith.constant 0 : i32
    %c0_i32_0 = arith.constant 0 : i32
    return %arg0, %c0_i32 : i32, i32
  }
  func.func @transform_3(%arg0: i32) -> (i32, i32) {
    %c0_i32 = arith.constant 0 : i32
    %c0_i32_0 = arith.constant 0 : i32
    %c0_i32_1 = arith.constant 0 : i32
    return %c0_i32, %c0_i32_0 : i32, i32
  }
  func.func @transform_4(%arg0: i32) -> (i32, i32) {
    %c0_i32 = arith.constant 0 : i32
    %c0_i32_0 = arith.constant 0 : i32
    %c0_i32_1 = arith.constant 0 : i32
    return %c0_i32, %c0_i32_0 : i32, i32
  }
}

module attributes {stable_mosaic.version = 11 : i64} {
  func.func @_bn_act_kernel(%arg0: i32, %arg1: memref<32x32xbf16, #tpu.memory_space<vmem>>, %arg2: memref<1x32xf32, #tpu.memory_space<vmem>>, %arg3: memref<1x32xf32, #tpu.memory_space<vmem>>, %arg4: memref<1x32xf32, #tpu.memory_space<vmem>>, %arg5: memref<1x32xf32, #tpu.memory_space<vmem>>, %arg6: memref<32x32xbf16, #tpu.memory_space<vmem>>, %arg7: memref<32x32xbf16, #tpu.memory_space<vmem>>) attributes {dimension_semantics = [#tpu.dimension_semantics<parallel>], iteration_bounds = array<i64: 1>, scalar_prefetch = 0 : i64, scratch_operands = 0 : i64, tpu.core_type = #tpu.core_type<tc>, window_params = [{transform_indices = @transform_0, window_bounds = array<i64: 32, 32>}, {pipeline_mode = #tpu.pipeline_mode<synchronous>, transform_indices = @transform_1, window_bounds = array<i64: 1, 32>}, {pipeline_mode = #tpu.pipeline_mode<synchronous>, transform_indices = @transform_2, window_bounds = array<i64: 1, 32>}, {pipeline_mode = #tpu.pipeline_mode<synchronous>, transform_indices = @transform_3, window_bounds = array<i64: 1, 32>}, {pipeline_mode = #tpu.pipeline_mode<synchronous>, transform_indices = @transform_4, window_bounds = array<i64: 1, 32>}, {transform_indices = @transform_5, window_bounds = array<i64: 32, 32>}, {transform_indices = @transform_6, window_bounds = array<i64: 32, 32>}]} {
    %c0 = arith.constant 0 : index
    %c0_0 = arith.constant 0 : index
    %0 = vector.load %arg2[%c0, %c0_0] : memref<1x32xf32, #tpu.memory_space<vmem>>, vector<1x32xf32>
    %cst = arith.constant 3.125000e-02 : f32
    %1 = vector.broadcast %cst : f32 to vector<1x32xf32>
    %2 = arith.mulf %0, %1 : vector<1x32xf32>
    %c0_1 = arith.constant 0 : index
    %c0_2 = arith.constant 0 : index
    %3 = vector.load %arg3[%c0_1, %c0_2] : memref<1x32xf32, #tpu.memory_space<vmem>>, vector<1x32xf32>
    %cst_3 = arith.constant 3.125000e-02 : f32
    %4 = vector.broadcast %cst_3 : f32 to vector<1x32xf32>
    %5 = arith.mulf %3, %4 : vector<1x32xf32>
    %6 = arith.mulf %2, %2 : vector<1x32xf32>
    %7 = arith.subf %5, %6 : vector<1x32xf32>
    %cst_4 = arith.constant 0.000000e+00 : f32
    %8 = vector.broadcast %cst_4 : f32 to vector<1x32xf32>
    %9 = arith.maximumf %7, %8 : vector<1x32xf32>
    %c0_5 = arith.constant 0 : index
    %c0_6 = arith.constant 0 : index
    %10 = vector.load %arg4[%c0_5, %c0_6] : memref<1x32xf32, #tpu.memory_space<vmem>>, vector<1x32xf32>
    %cst_7 = arith.constant 9.99999974E-6 : f32
    %11 = vector.broadcast %cst_7 : f32 to vector<1x32xf32>
    %12 = arith.addf %9, %11 : vector<1x32xf32>
    %13 = math.rsqrt %12 : vector<1x32xf32>
    %14 = arith.mulf %10, %13 : vector<1x32xf32>
    %c0_8 = arith.constant 0 : index
    %c0_9 = arith.constant 0 : index
    %15 = vector.load %arg5[%c0_8, %c0_9] : memref<1x32xf32, #tpu.memory_space<vmem>>, vector<1x32xf32>
    %16 = arith.mulf %2, %14 : vector<1x32xf32>
    %17 = arith.subf %15, %16 : vector<1x32xf32>
    %c0_10 = arith.constant 0 : index
    %c0_11 = arith.constant 0 : index
    %18 = vector.load %arg1[%c0_10, %c0_11] : memref<32x32xbf16, #tpu.memory_space<vmem>>, vector<32x32xbf16>
    %19 = arith.extf %18 : vector<32x32xbf16> to vector<32x32xf32>
    %20 = vector.broadcast %14 : vector<1x32xf32> to vector<32x32xf32>
    %21 = arith.mulf %19, %20 : vector<32x32xf32>
    %22 = vector.broadcast %17 : vector<1x32xf32> to vector<32x32xf32>
    %23 = arith.addf %21, %22 : vector<32x32xf32>
    %c0_12 = arith.constant 0 : index
    %c0_13 = arith.constant 0 : index
    %24 = vector.load %arg6[%c0_12, %c0_13] : memref<32x32xbf16, #tpu.memory_space<vmem>>, vector<32x32xbf16>
    %25 = arith.extf %24 : vector<32x32xbf16> to vector<32x32xf32>
    %26 = arith.addf %23, %25 : vector<32x32xf32>
    %27 = arith.truncf %26 : vector<32x32xf32> to vector<32x32xbf16>
    %c0_14 = arith.constant 0 : index
    %c0_15 = arith.constant 0 : index
    %28 = vector.load %arg7[%c0_14, %c0_15] : memref<32x32xbf16, #tpu.memory_space<vmem>>, vector<32x32xbf16>
    tpu.vector_store %arg7[%c0_14, %c0_15], %27 {strides = array<i32>} : memref<32x32xbf16, #tpu.memory_space<vmem>>, vector<32x32xbf16>,
    return
  }
  func.func @transform_0(%arg0: i32) -> (i32, i32) {
    %c0_i32 = arith.constant 0 : i32
    %c0_i32_0 = arith.constant 0 : i32
    return %arg0, %c0_i32 : i32, i32
  }
  func.func @transform_1(%arg0: i32) -> (i32, i32) {
    %c0_i32 = arith.constant 0 : i32
    %c0_i32_0 = arith.constant 0 : i32
    %c0_i32_1 = arith.constant 0 : i32
    return %c0_i32, %c0_i32_0 : i32, i32
  }
  func.func @transform_2(%arg0: i32) -> (i32, i32) {
    %c0_i32 = arith.constant 0 : i32
    %c0_i32_0 = arith.constant 0 : i32
    %c0_i32_1 = arith.constant 0 : i32
    return %c0_i32, %c0_i32_0 : i32, i32
  }
  func.func @transform_3(%arg0: i32) -> (i32, i32) {
    %c0_i32 = arith.constant 0 : i32
    %c0_i32_0 = arith.constant 0 : i32
    %c0_i32_1 = arith.constant 0 : i32
    return %c0_i32, %c0_i32_0 : i32, i32
  }
  func.func @transform_4(%arg0: i32) -> (i32, i32) {
    %c0_i32 = arith.constant 0 : i32
    %c0_i32_0 = arith.constant 0 : i32
    %c0_i32_1 = arith.constant 0 : i32
    return %c0_i32, %c0_i32_0 : i32, i32
  }
  func.func @transform_5(%arg0: i32) -> (i32, i32) {
    %c0_i32 = arith.constant 0 : i32
    %c0_i32_0 = arith.constant 0 : i32
    return %arg0, %c0_i32 : i32, i32
  }
  func.func @transform_6(%arg0: i32) -> (i32, i32) {
    %c0_i32 = arith.constant 0 : i32
    %c0_i32_0 = arith.constant 0 : i32
    return %arg0, %c0_i32 : i32, i32
  }
}

module attributes {stable_mosaic.version = 11 : i64} {
  func.func @_matmul_stats_kernel(%arg0: i32, %arg1: memref<32x128xbf16, #tpu.memory_space<vmem>>, %arg2: memref<128x64xbf16, #tpu.memory_space<vmem>>, %arg3: memref<32x64xbf16, #tpu.memory_space<vmem>>, %arg4: memref<1x64xf32, #tpu.memory_space<vmem>>, %arg5: memref<1x64xf32, #tpu.memory_space<vmem>>) attributes {dimension_semantics = [#tpu.dimension_semantics<arbitrary>], iteration_bounds = array<i64: 1>, scalar_prefetch = 0 : i64, scratch_operands = 0 : i64, tpu.core_type = #tpu.core_type<tc>, window_params = [{transform_indices = @transform_0, window_bounds = array<i64: 32, 128>}, {pipeline_mode = #tpu.pipeline_mode<synchronous>, transform_indices = @transform_1, window_bounds = array<i64: 128, 64>}, {transform_indices = @transform_2, window_bounds = array<i64: 32, 64>}, {pipeline_mode = #tpu.pipeline_mode<synchronous>, transform_indices = @transform_3, window_bounds = array<i64: 1, 64>}, {pipeline_mode = #tpu.pipeline_mode<synchronous>, transform_indices = @transform_4, window_bounds = array<i64: 1, 64>}]} {
    %c0 = arith.constant 0 : index
    %c0_0 = arith.constant 0 : index
    %0 = vector.load %arg1[%c0, %c0_0] : memref<32x128xbf16, #tpu.memory_space<vmem>>, vector<32x128xbf16>
    %c0_1 = arith.constant 0 : index
    %c0_2 = arith.constant 0 : index
    %1 = vector.load %arg2[%c0_1, %c0_2] : memref<128x64xbf16, #tpu.memory_space<vmem>>, vector<128x64xbf16>
    %cst = arith.constant dense<0.000000e+00> : vector<32x64xf32>
    %2 = tpu.matmul %0, %1, %cst {dimension_numbers = #tpu.dot_dimension_numbers<[1], [0], [0], [1], [0, 0, 1, 1], [], []>} : vector<32x128xbf16>, vector<128x64xbf16>, vector<32x64xf32> -> vector<32x64xf32>
    %3 = arith.truncf %2 : vector<32x64xf32> to vector<32x64xbf16>
    %c0_3 = arith.constant 0 : index
    %c0_4 = arith.constant 0 : index
    %4 = vector.load %arg3[%c0_3, %c0_4] : memref<32x64xbf16, #tpu.memory_space<vmem>>, vector<32x64xbf16>
    tpu.vector_store %arg3[%c0_3, %c0_4], %3 {strides = array<i32>} : memref<32x64xbf16, #tpu.memory_space<vmem>>, vector<32x64xbf16>,
    %c0_i32 = arith.constant 0 : i32
    %5 = arith.cmpi eq, %arg0, %c0_i32 : i32
    %6 = arith.extui %5 : i1 to i32
    %c0_i32_5 = arith.constant 0 : i32
    %7 = arith.cmpi ne, %6, %c0_i32_5 : i32
    scf.if %7 {
      %cst_16 = arith.constant 0.000000e+00 : f32
      %19 = vector.broadcast %cst_16 : f32 to vector<1x64xf32>
      %c0_17 = arith.constant 0 : index
      %c0_18 = arith.constant 0 : index
      %20 = vector.load %arg4[%c0_17, %c0_18] : memref<1x64xf32, #tpu.memory_space<vmem>>, vector<1x64xf32>
      tpu.vector_store %arg4[%c0_17, %c0_18], %19 {strides = array<i32>} : memref<1x64xf32, #tpu.memory_space<vmem>>, vector<1x64xf32>,
      %cst_19 = arith.constant 0.000000e+00 : f32
      %21 = vector.broadcast %cst_19 : f32 to vector<1x64xf32>
      %c0_20 = arith.constant 0 : index
      %c0_21 = arith.constant 0 : index
      %22 = vector.load %arg5[%c0_20, %c0_21] : memref<1x64xf32, #tpu.memory_space<vmem>>, vector<1x64xf32>
      tpu.vector_store %arg5[%c0_20, %c0_21], %21 {strides = array<i32>} : memref<1x64xf32, #tpu.memory_space<vmem>>, vector<1x64xf32>,
    } else {
    }
    %c0_6 = arith.constant 0 : index
    %c0_7 = arith.constant 0 : index
    %8 = vector.load %arg4[%c0_6, %c0_7] : memref<1x64xf32, #tpu.memory_space<vmem>>, vector<1x64xf32>
    %cst_8 = arith.constant dense<0.000000e+00> : vector<64xf32>
    %9 = vector.multi_reduction <add>, %2, %cst_8 [0] : vector<32x64xf32> to vector<64xf32>
    %10 = vector.shape_cast %9 : vector<64xf32> to vector<1x64xf32>
    %11 = arith.addf %8, %10 : vector<1x64xf32>
    %c0_9 = arith.constant 0 : index
    %c0_10 = arith.constant 0 : index
    %12 = vector.load %arg4[%c0_9, %c0_10] : memref<1x64xf32, #tpu.memory_space<vmem>>, vector<1x64xf32>
    tpu.vector_store %arg4[%c0_9, %c0_10], %11 {strides = array<i32>} : memref<1x64xf32, #tpu.memory_space<vmem>>, vector<1x64xf32>,
    %c0_11 = arith.constant 0 : index
    %c0_12 = arith.constant 0 : index
    %13 = vector.load %arg5[%c0_11, %c0_12] : memref<1x64xf32, #tpu.memory_space<vmem>>, vector<1x64xf32>
    %14 = arith.mulf %2, %2 : vector<32x64xf32>
    %cst_13 = arith.constant dense<0.000000e+00> : vector<64xf32>
    %15 = vector.multi_reduction <add>, %14, %cst_13 [0] : vector<32x64xf32> to vector<64xf32>
    %16 = vector.shape_cast %15 : vector<64xf32> to vector<1x64xf32>
    %17 = arith.addf %13, %16 : vector<1x64xf32>
    %c0_14 = arith.constant 0 : index
    %c0_15 = arith.constant 0 : index
    %18 = vector.load %arg5[%c0_14, %c0_15] : memref<1x64xf32, #tpu.memory_space<vmem>>, vector<1x64xf32>
    tpu.vector_store %arg5[%c0_14, %c0_15], %17 {strides = array<i32>} : memref<1x64xf32, #tpu.memory_space<vmem>>, vector<1x64xf32>,
    return
  }
  func.func @transform_0(%arg0: i32) -> (i32, i32) {
    %c0_i32 = arith.constant 0 : i32
    %c0_i32_0 = arith.constant 0 : i32
    return %arg0, %c0_i32 : i32, i32
  }
  func.func @transform_1(%arg0: i32) -> (i32, i32) {
    %c0_i32 = arith.constant 0 : i32
    %c0_i32_0 = arith.constant 0 : i32
    %c0_i32_1 = arith.constant 0 : i32
    return %c0_i32, %c0_i32_0 : i32, i32
  }
  func.func @transform_2(%arg0: i32) -> (i32, i32) {
    %c0_i32 = arith.constant 0 : i32
    %c0_i32_0 = arith.constant 0 : i32
    return %arg0, %c0_i32 : i32, i32
  }
  func.func @transform_3(%arg0: i32) -> (i32, i32) {
    %c0_i32 = arith.constant 0 : i32
    %c0_i32_0 = arith.constant 0 : i32
    %c0_i32_1 = arith.constant 0 : i32
    return %c0_i32, %c0_i32_0 : i32, i32
  }
  func.func @transform_4(%arg0: i32) -> (i32, i32) {
    %c0_i32 = arith.constant 0 : i32
    %c0_i32_0 = arith.constant 0 : i32
    %c0_i32_1 = arith.constant 0 : i32
    return %c0_i32, %c0_i32_0 : i32, i32
  }
}

module attributes {stable_mosaic.version = 11 : i64} {
  func.func @_bn_act_kernel(%arg0: i32, %arg1: memref<32x64xbf16, #tpu.memory_space<vmem>>, %arg2: memref<1x64xf32, #tpu.memory_space<vmem>>, %arg3: memref<1x64xf32, #tpu.memory_space<vmem>>, %arg4: memref<1x64xf32, #tpu.memory_space<vmem>>, %arg5: memref<1x64xf32, #tpu.memory_space<vmem>>, %arg6: memref<32x64xbf16, #tpu.memory_space<vmem>>) attributes {dimension_semantics = [#tpu.dimension_semantics<parallel>], iteration_bounds = array<i64: 1>, scalar_prefetch = 0 : i64, scratch_operands = 0 : i64, tpu.core_type = #tpu.core_type<tc>, window_params = [{transform_indices = @transform_0, window_bounds = array<i64: 32, 64>}, {pipeline_mode = #tpu.pipeline_mode<synchronous>, transform_indices = @transform_1, window_bounds = array<i64: 1, 64>}, {pipeline_mode = #tpu.pipeline_mode<synchronous>, transform_indices = @transform_2, window_bounds = array<i64: 1, 64>}, {pipeline_mode = #tpu.pipeline_mode<synchronous>, transform_indices = @transform_3, window_bounds = array<i64: 1, 64>}, {pipeline_mode = #tpu.pipeline_mode<synchronous>, transform_indices = @transform_4, window_bounds = array<i64: 1, 64>}, {transform_indices = @transform_5, window_bounds = array<i64: 32, 64>}]} {
    %c0 = arith.constant 0 : index
    %c0_0 = arith.constant 0 : index
    %0 = vector.load %arg2[%c0, %c0_0] : memref<1x64xf32, #tpu.memory_space<vmem>>, vector<1x64xf32>
    %cst = arith.constant 7.812500e-03 : f32
    %1 = vector.broadcast %cst : f32 to vector<1x64xf32>
    %2 = arith.mulf %0, %1 : vector<1x64xf32>
    %c0_1 = arith.constant 0 : index
    %c0_2 = arith.constant 0 : index
    %3 = vector.load %arg3[%c0_1, %c0_2] : memref<1x64xf32, #tpu.memory_space<vmem>>, vector<1x64xf32>
    %cst_3 = arith.constant 7.812500e-03 : f32
    %4 = vector.broadcast %cst_3 : f32 to vector<1x64xf32>
    %5 = arith.mulf %3, %4 : vector<1x64xf32>
    %6 = arith.mulf %2, %2 : vector<1x64xf32>
    %7 = arith.subf %5, %6 : vector<1x64xf32>
    %cst_4 = arith.constant 0.000000e+00 : f32
    %8 = vector.broadcast %cst_4 : f32 to vector<1x64xf32>
    %9 = arith.maximumf %7, %8 : vector<1x64xf32>
    %c0_5 = arith.constant 0 : index
    %c0_6 = arith.constant 0 : index
    %10 = vector.load %arg4[%c0_5, %c0_6] : memref<1x64xf32, #tpu.memory_space<vmem>>, vector<1x64xf32>
    %cst_7 = arith.constant 9.99999974E-6 : f32
    %11 = vector.broadcast %cst_7 : f32 to vector<1x64xf32>
    %12 = arith.addf %9, %11 : vector<1x64xf32>
    %13 = math.rsqrt %12 : vector<1x64xf32>
    %14 = arith.mulf %10, %13 : vector<1x64xf32>
    %c0_8 = arith.constant 0 : index
    %c0_9 = arith.constant 0 : index
    %15 = vector.load %arg5[%c0_8, %c0_9] : memref<1x64xf32, #tpu.memory_space<vmem>>, vector<1x64xf32>
    %16 = arith.mulf %2, %14 : vector<1x64xf32>
    %17 = arith.subf %15, %16 : vector<1x64xf32>
    %c0_10 = arith.constant 0 : index
    %c0_11 = arith.constant 0 : index
    %18 = vector.load %arg1[%c0_10, %c0_11] : memref<32x64xbf16, #tpu.memory_space<vmem>>, vector<32x64xbf16>
    %19 = arith.extf %18 : vector<32x64xbf16> to vector<32x64xf32>
    %20 = vector.broadcast %14 : vector<1x64xf32> to vector<32x64xf32>
    %21 = arith.mulf %19, %20 : vector<32x64xf32>
    %22 = vector.broadcast %17 : vector<1x64xf32> to vector<32x64xf32>
    %23 = arith.addf %21, %22 : vector<32x64xf32>
    %cst_12 = arith.constant 0.000000e+00 : f32
    %24 = vector.broadcast %cst_12 : f32 to vector<32x64xf32>
    %25 = arith.maximumf %23, %24 : vector<32x64xf32>
    %26 = arith.truncf %25 : vector<32x64xf32> to vector<32x64xbf16>
    %c0_13 = arith.constant 0 : index
    %c0_14 = arith.constant 0 : index
    %27 = vector.load %arg6[%c0_13, %c0_14] : memref<32x64xbf16, #tpu.memory_space<vmem>>, vector<32x64xbf16>
    tpu.vector_store %arg6[%c0_13, %c0_14], %26 {strides = array<i32>} : memref<32x64xbf16, #tpu.memory_space<vmem>>, vector<32x64xbf16>,
    return
  }
  func.func @transform_0(%arg0: i32) -> (i32, i32) {
    %c0_i32 = arith.constant 0 : i32
    %c0_i32_0 = arith.constant 0 : i32
    return %arg0, %c0_i32 : i32, i32
  }
  func.func @transform_1(%arg0: i32) -> (i32, i32) {
    %c0_i32 = arith.constant 0 : i32
    %c0_i32_0 = arith.constant 0 : i32
    %c0_i32_1 = arith.constant 0 : i32
    return %c0_i32, %c0_i32_0 : i32, i32
  }
  func.func @transform_2(%arg0: i32) -> (i32, i32) {
    %c0_i32 = arith.constant 0 : i32
    %c0_i32_0 = arith.constant 0 : i32
    %c0_i32_1 = arith.constant 0 : i32
    return %c0_i32, %c0_i32_0 : i32, i32
  }
  func.func @transform_3(%arg0: i32) -> (i32, i32) {
    %c0_i32 = arith.constant 0 : i32
    %c0_i32_0 = arith.constant 0 : i32
    %c0_i32_1 = arith.constant 0 : i32
    return %c0_i32, %c0_i32_0 : i32, i32
  }
  func.func @transform_4(%arg0: i32) -> (i32, i32) {
    %c0_i32 = arith.constant 0 : i32
    %c0_i32_0 = arith.constant 0 : i32
    %c0_i32_1 = arith.constant 0 : i32
    return %c0_i32, %c0_i32_0 : i32, i32
  }
  func.func @transform_5(%arg0: i32) -> (i32, i32) {
    %c0_i32 = arith.constant 0 : i32
    %c0_i32_0 = arith.constant 0 : i32
    return %arg0, %c0_i32 : i32, i32
  }
}

module attributes {stable_mosaic.version = 11 : i64} {
  func.func @_matmul_stats_kernel(%arg0: i32, %arg1: memref<128x128xbf16, #tpu.memory_space<vmem>>, %arg2: memref<128x32xbf16, #tpu.memory_space<vmem>>, %arg3: memref<128x32xbf16, #tpu.memory_space<vmem>>, %arg4: memref<1x32xf32, #tpu.memory_space<vmem>>, %arg5: memref<1x32xf32, #tpu.memory_space<vmem>>) attributes {dimension_semantics = [#tpu.dimension_semantics<arbitrary>], iteration_bounds = array<i64: 1>, scalar_prefetch = 0 : i64, scratch_operands = 0 : i64, tpu.core_type = #tpu.core_type<tc>, window_params = [{transform_indices = @transform_0, window_bounds = array<i64: 128, 128>}, {pipeline_mode = #tpu.pipeline_mode<synchronous>, transform_indices = @transform_1, window_bounds = array<i64: 128, 32>}, {transform_indices = @transform_2, window_bounds = array<i64: 128, 32>}, {pipeline_mode = #tpu.pipeline_mode<synchronous>, transform_indices = @transform_3, window_bounds = array<i64: 1, 32>}, {pipeline_mode = #tpu.pipeline_mode<synchronous>, transform_indices = @transform_4, window_bounds = array<i64: 1, 32>}]} {
    %c0 = arith.constant 0 : index
    %c0_0 = arith.constant 0 : index
    %0 = vector.load %arg1[%c0, %c0_0] : memref<128x128xbf16, #tpu.memory_space<vmem>>, vector<128x128xbf16>
    %c0_1 = arith.constant 0 : index
    %c0_2 = arith.constant 0 : index
    %1 = vector.load %arg2[%c0_1, %c0_2] : memref<128x32xbf16, #tpu.memory_space<vmem>>, vector<128x32xbf16>
    %cst = arith.constant dense<0.000000e+00> : vector<128x32xf32>
    %2 = tpu.matmul %0, %1, %cst {dimension_numbers = #tpu.dot_dimension_numbers<[1], [0], [0], [1], [0, 0, 1, 1], [], []>} : vector<128x128xbf16>, vector<128x32xbf16>, vector<128x32xf32> -> vector<128x32xf32>
    %3 = arith.truncf %2 : vector<128x32xf32> to vector<128x32xbf16>
    %c0_3 = arith.constant 0 : index
    %c0_4 = arith.constant 0 : index
    %4 = vector.load %arg3[%c0_3, %c0_4] : memref<128x32xbf16, #tpu.memory_space<vmem>>, vector<128x32xbf16>
    tpu.vector_store %arg3[%c0_3, %c0_4], %3 {strides = array<i32>} : memref<128x32xbf16, #tpu.memory_space<vmem>>, vector<128x32xbf16>,
    %c0_i32 = arith.constant 0 : i32
    %5 = arith.cmpi eq, %arg0, %c0_i32 : i32
    %6 = arith.extui %5 : i1 to i32
    %c0_i32_5 = arith.constant 0 : i32
    %7 = arith.cmpi ne, %6, %c0_i32_5 : i32
    scf.if %7 {
      %cst_16 = arith.constant 0.000000e+00 : f32
      %19 = vector.broadcast %cst_16 : f32 to vector<1x32xf32>
      %c0_17 = arith.constant 0 : index
      %c0_18 = arith.constant 0 : index
      %20 = vector.load %arg4[%c0_17, %c0_18] : memref<1x32xf32, #tpu.memory_space<vmem>>, vector<1x32xf32>
      tpu.vector_store %arg4[%c0_17, %c0_18], %19 {strides = array<i32>} : memref<1x32xf32, #tpu.memory_space<vmem>>, vector<1x32xf32>,
      %cst_19 = arith.constant 0.000000e+00 : f32
      %21 = vector.broadcast %cst_19 : f32 to vector<1x32xf32>
      %c0_20 = arith.constant 0 : index
      %c0_21 = arith.constant 0 : index
      %22 = vector.load %arg5[%c0_20, %c0_21] : memref<1x32xf32, #tpu.memory_space<vmem>>, vector<1x32xf32>
      tpu.vector_store %arg5[%c0_20, %c0_21], %21 {strides = array<i32>} : memref<1x32xf32, #tpu.memory_space<vmem>>, vector<1x32xf32>,
    } else {
    }
    %c0_6 = arith.constant 0 : index
    %c0_7 = arith.constant 0 : index
    %8 = vector.load %arg4[%c0_6, %c0_7] : memref<1x32xf32, #tpu.memory_space<vmem>>, vector<1x32xf32>
    %cst_8 = arith.constant dense<0.000000e+00> : vector<32xf32>
    %9 = vector.multi_reduction <add>, %2, %cst_8 [0] : vector<128x32xf32> to vector<32xf32>
    %10 = vector.shape_cast %9 : vector<32xf32> to vector<1x32xf32>
    %11 = arith.addf %8, %10 : vector<1x32xf32>
    %c0_9 = arith.constant 0 : index
    %c0_10 = arith.constant 0 : index
    %12 = vector.load %arg4[%c0_9, %c0_10] : memref<1x32xf32, #tpu.memory_space<vmem>>, vector<1x32xf32>
    tpu.vector_store %arg4[%c0_9, %c0_10], %11 {strides = array<i32>} : memref<1x32xf32, #tpu.memory_space<vmem>>, vector<1x32xf32>,
    %c0_11 = arith.constant 0 : index
    %c0_12 = arith.constant 0 : index
    %13 = vector.load %arg5[%c0_11, %c0_12] : memref<1x32xf32, #tpu.memory_space<vmem>>, vector<1x32xf32>
    %14 = arith.mulf %2, %2 : vector<128x32xf32>
    %cst_13 = arith.constant dense<0.000000e+00> : vector<32xf32>
    %15 = vector.multi_reduction <add>, %14, %cst_13 [0] : vector<128x32xf32> to vector<32xf32>
    %16 = vector.shape_cast %15 : vector<32xf32> to vector<1x32xf32>
    %17 = arith.addf %13, %16 : vector<1x32xf32>
    %c0_14 = arith.constant 0 : index
    %c0_15 = arith.constant 0 : index
    %18 = vector.load %arg5[%c0_14, %c0_15] : memref<1x32xf32, #tpu.memory_space<vmem>>, vector<1x32xf32>
    tpu.vector_store %arg5[%c0_14, %c0_15], %17 {strides = array<i32>} : memref<1x32xf32, #tpu.memory_space<vmem>>, vector<1x32xf32>,
    return
  }
  func.func @transform_0(%arg0: i32) -> (i32, i32) {
    %c0_i32 = arith.constant 0 : i32
    %c0_i32_0 = arith.constant 0 : i32
    return %arg0, %c0_i32 : i32, i32
  }
  func.func @transform_1(%arg0: i32) -> (i32, i32) {
    %c0_i32 = arith.constant 0 : i32
    %c0_i32_0 = arith.constant 0 : i32
    %c0_i32_1 = arith.constant 0 : i32
    return %c0_i32, %c0_i32_0 : i32, i32
  }
  func.func @transform_2(%arg0: i32) -> (i32, i32) {
    %c0_i32 = arith.constant 0 : i32
    %c0_i32_0 = arith.constant 0 : i32
    return %arg0, %c0_i32 : i32, i32
  }
  func.func @transform_3(%arg0: i32) -> (i32, i32) {
    %c0_i32 = arith.constant 0 : i32
    %c0_i32_0 = arith.constant 0 : i32
    %c0_i32_1 = arith.constant 0 : i32
    return %c0_i32, %c0_i32_0 : i32, i32
  }
  func.func @transform_4(%arg0: i32) -> (i32, i32) {
    %c0_i32 = arith.constant 0 : i32
    %c0_i32_0 = arith.constant 0 : i32
    %c0_i32_1 = arith.constant 0 : i32
    return %c0_i32, %c0_i32_0 : i32, i32
  }
}

module attributes {stable_mosaic.version = 11 : i64} {
  func.func @_bn_act_kernel(%arg0: i32, %arg1: memref<128x32xbf16, #tpu.memory_space<vmem>>, %arg2: memref<1x32xf32, #tpu.memory_space<vmem>>, %arg3: memref<1x32xf32, #tpu.memory_space<vmem>>, %arg4: memref<1x32xf32, #tpu.memory_space<vmem>>, %arg5: memref<1x32xf32, #tpu.memory_space<vmem>>, %arg6: memref<128x32xbf16, #tpu.memory_space<vmem>>) attributes {dimension_semantics = [#tpu.dimension_semantics<parallel>], iteration_bounds = array<i64: 1>, scalar_prefetch = 0 : i64, scratch_operands = 0 : i64, tpu.core_type = #tpu.core_type<tc>, window_params = [{transform_indices = @transform_0, window_bounds = array<i64: 128, 32>}, {pipeline_mode = #tpu.pipeline_mode<synchronous>, transform_indices = @transform_1, window_bounds = array<i64: 1, 32>}, {pipeline_mode = #tpu.pipeline_mode<synchronous>, transform_indices = @transform_2, window_bounds = array<i64: 1, 32>}, {pipeline_mode = #tpu.pipeline_mode<synchronous>, transform_indices = @transform_3, window_bounds = array<i64: 1, 32>}, {pipeline_mode = #tpu.pipeline_mode<synchronous>, transform_indices = @transform_4, window_bounds = array<i64: 1, 32>}, {transform_indices = @transform_5, window_bounds = array<i64: 128, 32>}]} {
    %c0 = arith.constant 0 : index
    %c0_0 = arith.constant 0 : index
    %0 = vector.load %arg2[%c0, %c0_0] : memref<1x32xf32, #tpu.memory_space<vmem>>, vector<1x32xf32>
    %cst = arith.constant 0.001953125 : f32
    %1 = vector.broadcast %cst : f32 to vector<1x32xf32>
    %2 = arith.mulf %0, %1 : vector<1x32xf32>
    %c0_1 = arith.constant 0 : index
    %c0_2 = arith.constant 0 : index
    %3 = vector.load %arg3[%c0_1, %c0_2] : memref<1x32xf32, #tpu.memory_space<vmem>>, vector<1x32xf32>
    %cst_3 = arith.constant 0.001953125 : f32
    %4 = vector.broadcast %cst_3 : f32 to vector<1x32xf32>
    %5 = arith.mulf %3, %4 : vector<1x32xf32>
    %6 = arith.mulf %2, %2 : vector<1x32xf32>
    %7 = arith.subf %5, %6 : vector<1x32xf32>
    %cst_4 = arith.constant 0.000000e+00 : f32
    %8 = vector.broadcast %cst_4 : f32 to vector<1x32xf32>
    %9 = arith.maximumf %7, %8 : vector<1x32xf32>
    %c0_5 = arith.constant 0 : index
    %c0_6 = arith.constant 0 : index
    %10 = vector.load %arg4[%c0_5, %c0_6] : memref<1x32xf32, #tpu.memory_space<vmem>>, vector<1x32xf32>
    %cst_7 = arith.constant 9.99999974E-6 : f32
    %11 = vector.broadcast %cst_7 : f32 to vector<1x32xf32>
    %12 = arith.addf %9, %11 : vector<1x32xf32>
    %13 = math.rsqrt %12 : vector<1x32xf32>
    %14 = arith.mulf %10, %13 : vector<1x32xf32>
    %c0_8 = arith.constant 0 : index
    %c0_9 = arith.constant 0 : index
    %15 = vector.load %arg5[%c0_8, %c0_9] : memref<1x32xf32, #tpu.memory_space<vmem>>, vector<1x32xf32>
    %16 = arith.mulf %2, %14 : vector<1x32xf32>
    %17 = arith.subf %15, %16 : vector<1x32xf32>
    %c0_10 = arith.constant 0 : index
    %c0_11 = arith.constant 0 : index
    %18 = vector.load %arg1[%c0_10, %c0_11] : memref<128x32xbf16, #tpu.memory_space<vmem>>, vector<128x32xbf16>
    %19 = arith.extf %18 : vector<128x32xbf16> to vector<128x32xf32>
    %20 = vector.broadcast %14 : vector<1x32xf32> to vector<128x32xf32>
    %21 = arith.mulf %19, %20 : vector<128x32xf32>
    %22 = vector.broadcast %17 : vector<1x32xf32> to vector<128x32xf32>
    %23 = arith.addf %21, %22 : vector<128x32xf32>
    %cst_12 = arith.constant 0.000000e+00 : f32
    %24 = vector.broadcast %cst_12 : f32 to vector<128x32xf32>
    %25 = arith.maximumf %23, %24 : vector<128x32xf32>
    %26 = arith.truncf %25 : vector<128x32xf32> to vector<128x32xbf16>
    %c0_13 = arith.constant 0 : index
    %c0_14 = arith.constant 0 : index
    %27 = vector.load %arg6[%c0_13, %c0_14] : memref<128x32xbf16, #tpu.memory_space<vmem>>, vector<128x32xbf16>
    tpu.vector_store %arg6[%c0_13, %c0_14], %26 {strides = array<i32>} : memref<128x32xbf16, #tpu.memory_space<vmem>>, vector<128x32xbf16>,
    return
  }
  func.func @transform_0(%arg0: i32) -> (i32, i32) {
    %c0_i32 = arith.constant 0 : i32
    %c0_i32_0 = arith.constant 0 : i32
    return %arg0, %c0_i32 : i32, i32
  }
  func.func @transform_1(%arg0: i32) -> (i32, i32) {
    %c0_i32 = arith.constant 0 : i32
    %c0_i32_0 = arith.constant 0 : i32
    %c0_i32_1 = arith.constant 0 : i32
    return %c0_i32, %c0_i32_0 : i32, i32
  }
  func.func @transform_2(%arg0: i32) -> (i32, i32) {
    %c0_i32 = arith.constant 0 : i32
    %c0_i32_0 = arith.constant 0 : i32
    %c0_i32_1 = arith.constant 0 : i32
    return %c0_i32, %c0_i32_0 : i32, i32
  }
  func.func @transform_3(%arg0: i32) -> (i32, i32) {
    %c0_i32 = arith.constant 0 : i32
    %c0_i32_0 = arith.constant 0 : i32
    %c0_i32_1 = arith.constant 0 : i32
    return %c0_i32, %c0_i32_0 : i32, i32
  }
  func.func @transform_4(%arg0: i32) -> (i32, i32) {
    %c0_i32 = arith.constant 0 : i32
    %c0_i32_0 = arith.constant 0 : i32
    %c0_i32_1 = arith.constant 0 : i32
    return %c0_i32, %c0_i32_0 : i32, i32
  }
  func.func @transform_5(%arg0: i32) -> (i32, i32) {
    %c0_i32 = arith.constant 0 : i32
    %c0_i32_0 = arith.constant 0 : i32
    return %arg0, %c0_i32 : i32, i32
  }
}

module attributes {stable_mosaic.version = 11 : i64} {
  func.func @_matmul_bias_act_kernel(%arg0: i32, %arg1: memref<256x512xbf16, #tpu.memory_space<vmem>>, %arg2: memref<512x3xbf16, #tpu.memory_space<vmem>>, %arg3: memref<1x3xf32, #tpu.memory_space<vmem>>, %arg4: memref<256x3xf32, #tpu.memory_space<vmem>>) attributes {dimension_semantics = [#tpu.dimension_semantics<parallel>], iteration_bounds = array<i64: 2>, scalar_prefetch = 0 : i64, scratch_operands = 0 : i64, tpu.core_type = #tpu.core_type<tc>, window_params = [{transform_indices = @transform_0, window_bounds = array<i64: 256, 512>}, {pipeline_mode = #tpu.pipeline_mode<synchronous>, transform_indices = @transform_1, window_bounds = array<i64: 512, 3>}, {pipeline_mode = #tpu.pipeline_mode<synchronous>, transform_indices = @transform_2, window_bounds = array<i64: 1, 3>}, {transform_indices = @transform_3, window_bounds = array<i64: 256, 3>}]} {
    %c0 = arith.constant 0 : index
    %c0_0 = arith.constant 0 : index
    %0 = vector.load %arg1[%c0, %c0_0] : memref<256x512xbf16, #tpu.memory_space<vmem>>, vector<256x512xbf16>
    %c0_1 = arith.constant 0 : index
    %c0_2 = arith.constant 0 : index
    %1 = vector.load %arg2[%c0_1, %c0_2] : memref<512x3xbf16, #tpu.memory_space<vmem>>, vector<512x3xbf16>
    %cst = arith.constant dense<0.000000e+00> : vector<256x3xf32>
    %2 = tpu.matmul %0, %1, %cst {dimension_numbers = #tpu.dot_dimension_numbers<[1], [0], [0], [1], [0, 0, 1, 1], [], []>} : vector<256x512xbf16>, vector<512x3xbf16>, vector<256x3xf32> -> vector<256x3xf32>
    %c0_3 = arith.constant 0 : index
    %c0_4 = arith.constant 0 : index
    %3 = vector.load %arg3[%c0_3, %c0_4] : memref<1x3xf32, #tpu.memory_space<vmem>>, vector<1x3xf32>
    %4 = vector.broadcast %3 : vector<1x3xf32> to vector<256x3xf32>
    %5 = arith.addf %2, %4 : vector<256x3xf32>
    %6 = math.tanh %5 : vector<256x3xf32>
    %c0_5 = arith.constant 0 : index
    %c0_6 = arith.constant 0 : index
    %7 = vector.load %arg4[%c0_5, %c0_6] : memref<256x3xf32, #tpu.memory_space<vmem>>, vector<256x3xf32>
    tpu.vector_store %arg4[%c0_5, %c0_6], %6 {strides = array<i32>} : memref<256x3xf32, #tpu.memory_space<vmem>>, vector<256x3xf32>,
    return
  }
  func.func @transform_0(%arg0: i32) -> (i32, i32) {
    %c0_i32 = arith.constant 0 : i32
    %c0_i32_0 = arith.constant 0 : i32
    return %arg0, %c0_i32 : i32, i32
  }
  func.func @transform_1(%arg0: i32) -> (i32, i32) {
    %c0_i32 = arith.constant 0 : i32
    %c0_i32_0 = arith.constant 0 : i32
    %c0_i32_1 = arith.constant 0 : i32
    return %c0_i32, %c0_i32_0 : i32, i32
  }
  func.func @transform_2(%arg0: i32) -> (i32, i32) {
    %c0_i32 = arith.constant 0 : i32
    %c0_i32_0 = arith.constant 0 : i32
    %c0_i32_1 = arith.constant 0 : i32
    return %c0_i32, %c0_i32_0 : i32, i32
  }
  func.func @transform_3(%arg0: i32) -> (i32, i32) {
    %c0_i32 = arith.constant 0 : i32
    %c0_i32_0 = arith.constant 0 : i32
    return %arg0, %c0_i32 : i32, i32
  }
}

</mosaic_0001>

<llo_original>
// kernel: resnet_generator_forward.20
$region0: #{resnet_generator_forward.20}
  #allocation0 [shape = 'u32[]', space=smem, size = 0x4, offset = 0x4, fixed_abs, tag = 'smem constant byte address 0x4 - core index']
  #allocation1 [shape = 'u32[72,128]{1,0:T(1,128)}', space=vmem, size = 0x9000, scoped, tag = 'internal scratch']
  %s0 = inlined_call_operand.vmem [shape: bf16[512,8], index: 0, kind: input, shape index: {}]
  %s1 = inlined_call_operand.vmem [shape: f32[1,8], index: 1, kind: input, shape index: {}]
  %s2 = inlined_call_operand.vmem [shape: f32[1,8], index: 2, kind: input, shape index: {}]
  %s3 = inlined_call_operand.vmem [shape: f32[1,8], index: 3, kind: input, shape index: {}]
  %s4 = inlined_call_operand.vmem [shape: f32[1,8], index: 4, kind: input, shape index: {}]
  %s5 = inlined_call_operand.vmem [shape: bf16[512,8], index: 5, kind: output, shape index: {}]
  %s6 = sld [smem:[#allocation0]]
  $region53: #{resnet_generator_forward.20} parent=0
    _
  %s8 = ssub.s32 1, %s6
  %s9 = scalar_select 0, %s8, %s6
  loop: start=0, step=1, limit=4
  $region2: #{resnet_generator_forward.20} parent=0 // loop_pre_header
    _
  $region3: #{resnet_generator_forward.20} parent=0 // loop_header
    %s11 = sphi 0, %s15
    %p12 = scmp.ge.s32.totalorder %s11, 4
    %s21 = sphi 0, %s23
    %s24 = sphi 0, %s21
    %s25 = sphi 0, %s24
    %s41 = sphi 0, %s25
    %s45 = sphi 0, %s45
    %s47 = sphi 0, %s45
    %s48 = sphi 0, %s47
    %s62 = sphi 0, %s48
    %s66 = sphi 0, %s66
    %s68 = sphi 0, %s66
    %s69 = sphi 0, %s68
    %s83 = sphi 0, %s69
    %s87 = sphi 0, %s87
    %s89 = sphi 0, %s87
    %s90 = sphi 0, %s89
    %s104 = sphi 0, %s90
    %s108 = sphi 0, %s108
    %s110 = sphi 0, %s108
    %s111 = sphi 0, %s110
    %s125 = sphi 0, %s111
    %s131 = sphi 0, %s133
    %s134 = sphi 0, %s131
    %s135 = sphi 0, %s134
    %s151 = sphi 0, %s135
  $region4: #{resnet_generator_forward.20} parent=0 // loop_header_branch
    %14 = sbr.rel (%p12) target = $region8
  $region5: #{resnet_generator_forward.20} parent=0 // loop_body
    %s16 = ssub.s32 %s11, 1
    %s17 = ssub.s32 %s11, 2
    %s18 = sadd.s32 %s11, 1
    %s19 = ssub.s32 %s11, %s18
    %p20 = scmp.eq.s32.totalorder %s19, 0
    %s22 = sadd.s32 %s21, 1
    %s23 = scalar_select %p20, %s21, %s22
    %p26 = pneg %p20
    %p27 = scmp.eq.s32.totalorder %s11, 1
    %p28 = por %p26, %p27
    %p29 = scmp.ne.s32.totalorder %s21, %s24
    %p30 = scmp.eq.s32.totalorder %s11, 0
    %p31 = por %p29, %p30
    %p32 = scmp.ne.s32.totalorder %s21, %s24
    %p33 = scmp.eq.s32.totalorder %s16, 1
    %p34 = por %p32, %p33
    %p35 = scmp.ne.s32.totalorder %s24, %s25
    %p36 = scmp.eq.s32.totalorder %s16, 0
    %p37 = por %p35, %p36
    %p38 = scmp.ne.s32.totalorder %s24, %s25
    %p39 = scmp.eq.s32.totalorder %s17, 1
    %p40 = por %p38, %p39
    %p42 = scmp.ne.s32.totalorder %s25, %s41
    %p43 = scmp.eq.s32.totalorder %s17, 0
    %p44 = por %p42, %p43
    %s46 = sadd.s32 %s45, 1
    %p49 = scmp.eq.s32.totalorder %s11, 1
    %p50 = scmp.ne.s32.totalorder %s45, %s47
    %p51 = scmp.eq.s32.totalorder %s11, 0
    %p52 = por %p50, %p51
    %p53 = scmp.ne.s32.totalorder %s45, %s47
    %p54 = scmp.eq.s32.totalorder %s16, 1
    %p55 = por %p53, %p54
    %p56 = scmp.ne.s32.totalorder %s47, %s48
    %p57 = scmp.eq.s32.totalorder %s16, 0
    %p58 = por %p56, %p57
    %p59 = scmp.ne.s32.totalorder %s47, %s48
    %p60 = scmp.eq.s32.totalorder %s17, 1
    %p61 = por %p59, %p60
    %p63 = scmp.ne.s32.totalorder %s48, %s62
    %p64 = scmp.eq.s32.totalorder %s17, 0
    %p65 = por %p63, %p64
    %s67 = sadd.s32 %s66, 1
    %p70 = scmp.eq.s32.totalorder %s11, 1
    %p71 = scmp.ne.s32.totalorder %s66, %s68
    %p72 = scmp.eq.s32.totalorder %s11, 0
    %p73 = por %p71, %p72
    %p74 = scmp.ne.s32.totalorder %s66, %s68
    %p75 = scmp.eq.s32.totalorder %s16, 1
    %p76 = por %p74, %p75
    %p77 = scmp.ne.s32.totalorder %s68, %s69
    %p78 = scmp.eq.s32.totalorder %s16, 0
    %p79 = por %p77, %p78
    %p80 = scmp.ne.s32.totalorder %s68, %s69
    %p81 = scmp.eq.s32.totalorder %s17, 1
    %p82 = por %p80, %p81
    %p84 = scmp.ne.s32.totalorder %s69, %s83
    %p85 = scmp.eq.s32.totalorder %s17, 0
    %p86 = por %p84, %p85
    %s88 = sadd.s32 %s87, 1
    %p91 = scmp.eq.s32.totalorder %s11, 1
    %p92 = scmp.ne.s32.totalorder %s87, %s89
    %p93 = scmp.eq.s32.totalorder %s11, 0
    %p94 = por %p92, %p93
    %p95 = scmp.ne.s32.totalorder %s87, %s89
    %p96 = scmp.eq.s32.totalorder %s16, 1
    %p97 = por %p95, %p96
    %p98 = scmp.ne.s32.totalorder %s89, %s90
    %p99 = scmp.eq.s32.totalorder %s16, 0
    %p100 = por %p98, %p99
    %p101 = scmp.ne.s32.totalorder %s89, %s90
    %p102 = scmp.eq.s32.totalorder %s17, 1
    %p103 = por %p101, %p102
    %p105 = scmp.ne.s32.totalorder %s90, %s104
    %p106 = scmp.eq.s32.totalorder %s17, 0
    %p107 = por %p105, %p106
    %s109 = sadd.s32 %s108, 1
    %p112 = scmp.eq.s32.totalorder %s11, 1
    %p113 = scmp.ne.s32.totalorder %s108, %s110
    %p114 = scmp.eq.s32.totalorder %s11, 0
    %p115 = por %p113, %p114
    %p116 = scmp.ne.s32.totalorder %s108, %s110
    %p117 = scmp.eq.s32.totalorder %s16, 1
    %p118 = por %p116, %p117
    %p119 = scmp.ne.s32.totalorder %s110, %s111
    %p120 = scmp.eq.s32.totalorder %s16, 0
    %p121 = por %p119, %p120
    %p122 = scmp.ne.s32.totalorder %s110, %s111
    %p123 = scmp.eq.s32.totalorder %s17, 1
    %p124 = por %p122, %p123
    %p126 = scmp.ne.s32.totalorder %s111, %s125
    %p127 = scmp.eq.s32.totalorder %s17, 0
    %p128 = por %p126, %p127
    %s129 = ssub.s32 %s11, %s18
    %p130 = scmp.eq.s32.totalorder %s129, 0
    %s132 = sadd.s32 %s131, 1
    %s133 = scalar_select %p130, %s131, %s132
    %p136 = pneg %p130
    %p137 = scmp.eq.s32.totalorder %s11, 1
    %p138 = por %p136, %p137
    %p139 = scmp.ne.s32.totalorder %s131, %s134
    %p140 = scmp.eq.s32.totalorder %s11, 0
    %p141 = por %p139, %p140
    %p142 = scmp.ne.s32.totalorder %s131, %s134
    %p143 = scmp.eq.s32.totalorder %s16, 1
    %p144 = por %p142, %p143
    %p145 = scmp.ne.s32.totalorder %s134, %s135
    %p146 = scmp.eq.s32.totalorder %s16, 0
    %p147 = por %p145, %p146
    %p148 = scmp.ne.s32.totalorder %s134, %s135
    %p149 = scmp.eq.s32.totalorder %s17, 1
    %p150 = por %p148, %p149
    %p152 = scmp.ne.s32.totalorder %s135, %s151
    %p153 = scmp.eq.s32.totalorder %s17, 0
    %p154 = por %p152, %p153
    %p155 = scmp.le.s32.totalorder 1, %s11
    %p156 = scmp.lt.s32.totalorder %s11, 3
    %p157 = pnand %p155, %p156
    %p158 = pneg %p157
    // Predicated region
    $region9: #{resnet_generator_forward.20} parent=5 // pred_check
      _
    $region10: #{resnet_generator_forward.20} parent=5 // pred_check_branch
      %160 = sbr.rel (%p157) target = $region12
    $region11: #{resnet_generator_forward.20} parent=5 // pred_region
      %s161 = ssub.s32 %s11, 1
      // Predicated region
      $region13: #{resnet_generator_forward.20} parent=11 // pred_check
        %p162 = pneg %p58
      $region14: #{resnet_generator_forward.20} parent=11 // pred_check_branch
        %164 = sbr.rel (%p162) target = $region16
      $region15: #{resnet_generator_forward.20} parent=11 // pred_region
        _
      $region16: #{resnet_generator_forward.20} parent=11 // pred_fallthru
        _
      // Predicated region
      $region17: #{resnet_generator_forward.20} parent=11 // pred_check
        %p165 = pneg %p79
      $region18: #{resnet_generator_forward.20} parent=11 // pred_check_branch
        %167 = sbr.rel (%p165) target = $region20
      $region19: #{resnet_generator_forward.20} parent=11 // pred_region
        _
      $region20: #{resnet_generator_forward.20} parent=11 // pred_fallthru
        _
      // Predicated region
      $region21: #{resnet_generator_forward.20} parent=11 // pred_check
        %p168 = pneg %p100
      $region22: #{resnet_generator_forward.20} parent=11 // pred_check_branch
        %170 = sbr.rel (%p168) target = $region24
      $region23: #{resnet_generator_forward.20} parent=11 // pred_region
        _
      $region24: #{resnet_generator_forward.20} parent=11 // pred_fallthru
        _
      // Predicated region
      $region25: #{resnet_generator_forward.20} parent=11 // pred_check
        %p171 = pneg %p121
      $region26: #{resnet_generator_forward.20} parent=11 // pred_check_branch
        %173 = sbr.rel (%p171) target = $region28
      $region27: #{resnet_generator_forward.20} parent=11 // pred_region
        _
      $region28: #{resnet_generator_forward.20} parent=11 // pred_fallthru
        _
    $region12: #{resnet_generator_forward.20} parent=5 // pred_fallthru
      _
    %p174 = scmp.lt.s32.totalorder %s11, 2
    // Predicated region
    $region29: #{resnet_generator_forward.20} parent=5 // pred_check
      %p175 = pneg %p174
    $region30: #{resnet_generator_forward.20} parent=5 // pred_check_branch
      %177 = sbr.rel (%p175) target = $region32
    $region31: #{resnet_generator_forward.20} parent=5 // pred_region
      // Predicated region
      $region33: #{resnet_generator_forward.20} parent=31 // pred_check
        %p178 = pneg %p31
      $region34: #{resnet_generator_forward.20} parent=31 // pred_check_branch
        %180 = sbr.rel (%p178) target = $region36
      $region35: #{resnet_generator_forward.20} parent=31 // pred_region
        %s181 = smul.u32 32, %s11
        %p182 = scmp.lt.s32.totalorder %s181, 63
        %s183 = scalar_select %p182, %s181, 63
        %s184 = smul.addr %s183, 4
        %s185 = scalar_lea.vmem %s0, %s184
        %s186 = smul.u32 32, %s11
      $region36: #{resnet_generator_forward.20} parent=31 // pred_fallthru
        _
    $region32: #{resnet_generator_forward.20} parent=5 // pred_fallthru
      _
    %p187 = scmp.le.s32.totalorder 1, %s11
    %p188 = scmp.lt.s32.totalorder %s11, 3
    %p189 = pnand %p187, %p188
    %p190 = pneg %p189
    // Predicated region
    $region37: #{resnet_generator_forward.20} parent=5 // pred_check
      _
    $region38: #{resnet_generator_forward.20} parent=5 // pred_check_branch
      %192 = sbr.rel (%p189) target = $region40
    $region39: #{resnet_generator_forward.20} parent=5 // pred_region
      %s193 = ssub.s32 %s11, 1
      %s194 = smul.u32 32, %s16
      %p195 = scmp.lt.s32.totalorder %s194, 63
      %s196 = scalar_select %p195, %s194, 63
      %s197 = smul.addr %s196, 4
      %s198 = scalar_lea.vmem %s0, %s197
      %p199 = pneg %p37
      %p200 = pneg %p34
      %p201 = pneg %p58
      %p202 = pneg %p55
      %p203 = pneg %p79
      %p204 = pneg %p76
      %p205 = pneg %p100
      %p206 = pneg %p97
      %p207 = pneg %p121
      %p208 = pneg %p118
      %p209 = pneg %p147
      %p210 = pneg %p144
      %s211 = smul.u32 32, %s16
      %p212 = scmp.lt.s32.totalorder %s211, 63
      %s213 = scalar_select %p212, %s211, 63
      %s214 = smul.addr %s213, 4
      %s215 = scalar_lea.vmem %s5, %s214
      %s216 = smul.u32 32, %s16
      %p217 = scmp.lt.s32.totalorder %s216, 63
      %s218 = scalar_select %p217, %s216, 63
      %s219 = smul.addr %s218, 4
      %s220 = scalar_lea.vmem %s0, %s219
      %s221 = smul.u32 32, %s16
      %s222 = smul.u32 32, %s16
      %p223 = scmp.lt.s32.totalorder %s222, 63
      %s224 = scalar_select %p223, %s222, 63
      %s225 = smul.addr %s224, 4
      %s226 = scalar_lea.vmem %s5, %s225
      %s227 = smul.u32 32, %s16
      %v228 = vld [vmem:[%s1] sm:$0x1]
      %v229 = vmul.f32 %v228, 0.001953125
      %v230 = vld [vmem:[%s2] sm:$0x1]
      %v231 = vmul.f32 %v230, 0.001953125
      %v232 = vmul.f32 %v229, %v229
      %v233 = vsub.f32 %v231, %v232
      %v234 = vmax.f32 %v233, 0.0
      %v235 = vld [vmem:[%s3] sm:$0x1]
      %v236 = vadd.f32 %v234, 1e-05
      %v237 = vrsqrt.pop %v236
      %v238 = vmul.f32 %v237, %v236
      %v239 = vmul.f32 %v238, %v237
      %v240 = vmul.f32 0.5, %v239
      %v241 = vsub.f32 1.5, %v240
      %v242 = vmul.f32 %v237, %v241
      %vm243 = vweird.f32 %v236
      %vm244 = vweird.f32 %v237
      %vm245 = vmor %vm243, %vm244
      %v246 = vsel %vm245, %v237, %v242
      %v247 = vmul.f32 %v235, %v246
      %v248 = vld [vmem:[%s4] sm:$0x1]
      %v249 = vmul.f32 %v229, %v247
      %v250 = vsub.f32 %v248, %v249
      %v251 = vld [vmem:[%s220] sm:$0xf]
      %v252 = vld [vmem:[%s220 + $0x4] sm:$0xf]
      %v253 = vld [vmem:[%s220 + $0x8] sm:$0xf]
      %v254 = vld [vmem:[%s220 + $0xc] sm:$0xf]
      %v255 = vld [vmem:[%s220 + $0x10] sm:$0xf]
      %v256 = vld [vmem:[%s220 + $0x14] sm:$0xf]
      %v257 = vld [vmem:[%s220 + $0x18] sm:$0xf]
      %v258 = vld [vmem:[%s220 + $0x1c] sm:$0xf]
      %v259 = vld [vmem:[%s220 + $0x20] sm:$0xf]
      %v260 = vld [vmem:[%s220 + $0x24] sm:$0xf]
      %v261 = vld [vmem:[%s220 + $0x28] sm:$0xf]
      %v262 = vld [vmem:[%s220 + $0x2c] sm:$0xf]
      %v263 = vld [vmem:[%s220 + $0x30] sm:$0xf]
      %v264 = vld [vmem:[%s220 + $0x34] sm:$0xf]
      %v265 = vld [vmem:[%s220 + $0x38] sm:$0xf]
      %v266 = vld [vmem:[%s220 + $0x3c] sm:$0xf]
      %v267 = vld [vmem:[%s220 + $0x40] sm:$0xf]
      %v268 = vld [vmem:[%s220 + $0x44] sm:$0xf]
      %v269 = vld [vmem:[%s220 + $0x48] sm:$0xf]
      %v270 = vld [vmem:[%s220 + $0x4c] sm:$0xf]
      %v271 = vld [vmem:[%s220 + $0x50] sm:$0xf]
      %v272 = vld [vmem:[%s220 + $0x54] sm:$0xf]
      %v273 = vld [vmem:[%s220 + $0x58] sm:$0xf]
      %v274 = vld [vmem:[%s220 + $0x5c] sm:$0xf]
      %v275 = vld [vmem:[%s220 + $0x60] sm:$0xf]
      %v276 = vld [vmem:[%s220 + $0x64] sm:$0xf]
      %v277 = vld [vmem:[%s220 + $0x68] sm:$0xf]
      %v278 = vld [vmem:[%s220 + $0x6c] sm:$0xf]
      %v279 = vld [vmem:[%s220 + $0x70] sm:$0xf]
      %v280 = vld [vmem:[%s220 + $0x74] sm:$0xf]
      %v281 = vld [vmem:[%s220 + $0x78] sm:$0xf]
      %v282 = vld [vmem:[%s220 + $0x7c] sm:$0xf]
      %v283 = vunpack.c.l.bf16 %v251
      %v284 = vunpack.c.l.bf16 %v252
      %v285 = vunpack.c.l.bf16 %v253
      %v286 = vunpack.c.l.bf16 %v254
      %v287 = vunpack.c.l.bf16 %v255
      %v288 = vunpack.c.l.bf16 %v256
      %v289 = vunpack.c.l.bf16 %v257
      %v290 = vunpack.c.l.bf16 %v258
      %v291 = vunpack.c.l.bf16 %v259
      %v292 = vunpack.c.l.bf16 %v260
      %v293 = vunpack.c.l.bf16 %v261
      %v294 = vunpack.c.l.bf16 %v262
      %v295 = vunpack.c.l.bf16 %v263
      %v296 = vunpack.c.l.bf16 %v264
      %v297 = vunpack.c.l.bf16 %v265
      %v298 = vunpack.c.l.bf16 %v266
      %v299 = vunpack.c.l.bf16 %v267
      %v300 = vunpack.c.l.bf16 %v268
      %v301 = vunpack.c.l.bf16 %v269
      %v302 = vunpack.c.l.bf16 %v270
      %v303 = vunpack.c.l.bf16 %v271
      %v304 = vunpack.c.l.bf16 %v272
      %v305 = vunpack.c.l.bf16 %v273
      %v306 = vunpack.c.l.bf16 %v274
      %v307 = vunpack.c.l.bf16 %v275
      %v308 = vunpack.c.l.bf16 %v276
      %v309 = vunpack.c.l.bf16 %v277
      %v310 = vunpack.c.l.bf16 %v278
      %v311 = vunpack.c.l.bf16 %v279
      %v312 = vunpack.c.l.bf16 %v280
      %v313 = vunpack.c.l.bf16 %v281
      %v314 = vunpack.c.l.bf16 %v282
      %v316 = vperm.slane %v247, 0
      %v318 = vmul.f32 %v283, %v316
      %v319 = vmul.f32 %v284, %v316
      %v320 = vmul.f32 %v285, %v316
      %v321 = vmul.f32 %v286, %v316
      %v322 = vmul.f32 %v287, %v316
      %v323 = vmul.f32 %v288, %v316
      %v324 = vmul.f32 %v289, %v316
      %v325 = vmul.f32 %v290, %v316
      %v326 = vmul.f32 %v291, %v316
      %v327 = vmul.f32 %v292, %v316
      %v328 = vmul.f32 %v293, %v316
      %v329 = vmul.f32 %v294, %v316
      %v330 = vmul.f32 %v295, %v316
      %v331 = vmul.f32 %v296, %v316
      %v332 = vmul.f32 %v297, %v316
      %v333 = vmul.f32 %v298, %v316
      %v334 = vmul.f32 %v299, %v316
      %v335 = vmul.f32 %v300, %v316
      %v336 = vmul.f32 %v301, %v316
      %v337 = vmul.f32 %v302, %v316
      %v338 = vmul.f32 %v303, %v316
      %v339 = vmul.f32 %v304, %v316
      %v340 = vmul.f32 %v305, %v316
      %v341 = vmul.f32 %v306, %v316
      %v342 = vmul.f32 %v307, %v316
      %v343 = vmul.f32 %v308, %v316
      %v344 = vmul.f32 %v309, %v316
      %v345 = vmul.f32 %v310, %v316
      %v346 = vmul.f32 %v311, %v316
      %v347 = vmul.f32 %v312, %v316
      %v348 = vmul.f32 %v313, %v316
      %v349 = vmul.f32 %v314, %v316
      %v351 = vperm.slane %v250, 0
      %v353 = vadd.f32 %v318, %v351
      %v354 = vadd.f32 %v319, %v351
      %v355 = vadd.f32 %v320, %v351
      %v356 = vadd.f32 %v321, %v351
      %v357 = vadd.f32 %v322, %v351
      %v358 = vadd.f32 %v323, %v351
      %v359 = vadd.f32 %v324, %v351
      %v360 = vadd.f32 %v325, %v351
      %v361 = vadd.f32 %v326, %v351
      %v362 = vadd.f32 %v327, %v351
      %v363 = vadd.f32 %v328, %v351
      %v364 = vadd.f32 %v329, %v351
      %v365 = vadd.f32 %v330, %v351
      %v366 = vadd.f32 %v331, %v351
      %v367 = vadd.f32 %v332, %v351
      %v368 = vadd.f32 %v333, %v351
      %v369 = vadd.f32 %v334, %v351
      %v370 = vadd.f32 %v335, %v351
      %v371 = vadd.f32 %v336, %v351
      %v372 = vadd.f32 %v337, %v351
      %v373 = vadd.f32 %v338, %v351
      %v374 = vadd.f32 %v339, %v351
      %v375 = vadd.f32 %v340, %v351
      %v376 = vadd.f32 %v341, %v351
      %v377 = vadd.f32 %v342, %v351
      %v378 = vadd.f32 %v343, %v351
      %v379 = vadd.f32 %v344, %v351
      %v380 = vadd.f32 %v345, %v351
      %v381 = vadd.f32 %v346, %v351
      %v382 = vadd.f32 %v347, %v351
      %v383 = vadd.f32 %v348, %v351
      %v384 = vadd.f32 %v349, %v351
      %v385 = vmax.f32 %v353, 0.0
      %v386 = vmax.f32 %v354, 0.0
      %v387 = vmax.f32 %v355, 0.0
      %v388 = vmax.f32 %v356, 0.0
      %v389 = vmax.f32 %v357, 0.0
      %v390 = vmax.f32 %v358, 0.0
      %v391 = vmax.f32 %v359, 0.0
      %v392 = vmax.f32 %v360, 0.0
      %v393 = vmax.f32 %v361, 0.0
      %v394 = vmax.f32 %v362, 0.0
      %v395 = vmax.f32 %v363, 0.0
      %v396 = vmax.f32 %v364, 0.0
      %v397 = vmax.f32 %v365, 0.0
      %v398 = vmax.f32 %v366, 0.0
      %v399 = vmax.f32 %v367, 0.0
      %v400 = vmax.f32 %v368, 0.0
      %v401 = vmax.f32 %v369, 0.0
      %v402 = vmax.f32 %v370, 0.0
      %v403 = vmax.f32 %v371, 0.0
      %v404 = vmax.f32 %v372, 0.0
      %v405 = vmax.f32 %v373, 0.0
      %v406 = vmax.f32 %v374, 0.0
      %v407 = vmax.f32 %v375, 0.0
      %v408 = vmax.f32 %v376, 0.0
      %v409 = vmax.f32 %v377, 0.0
      %v410 = vmax.f32 %v378, 0.0
      %v411 = vmax.f32 %v379, 0.0
      %v412 = vmax.f32 %v380, 0.0
      %v413 = vmax.f32 %v381, 0.0
      %v414 = vmax.f32 %v382, 0.0
      %v415 = vmax.f32 %v383, 0.0
      %v416 = vmax.f32 %v384, 0.0
      %v417 = vpack.c.bf16 %v385, %v385
      %v418 = vpack.c.bf16 %v386, %v386
      %v419 = vpack.c.bf16 %v387, %v387
      %v420 = vpack.c.bf16 %v388, %v388
      %v421 = vpack.c.bf16 %v389, %v389
      %v422 = vpack.c.bf16 %v390, %v390
      %v423 = vpack.c.bf16 %v391, %v391
      %v424 = vpack.c.bf16 %v392, %v392
      %v425 = vpack.c.bf16 %v393, %v393
      %v426 = vpack.c.bf16 %v394, %v394
      %v427 = vpack.c.bf16 %v395, %v395
      %v428 = vpack.c.bf16 %v396, %v396
      %v429 = vpack.c.bf16 %v397, %v397
      %v430 = vpack.c.bf16 %v398, %v398
      %v431 = vpack.c.bf16 %v399, %v399
      %v432 = vpack.c.bf16 %v400, %v400
      %v433 = vpack.c.bf16 %v401, %v401
      %v434 = vpack.c.bf16 %v402, %v402
      %v435 = vpack.c.bf16 %v403, %v403
      %v436 = vpack.c.bf16 %v404, %v404
      %v437 = vpack.c.bf16 %v405, %v405
      %v438 = vpack.c.bf16 %v406, %v406
      %v439 = vpack.c.bf16 %v407, %v407
      %v440 = vpack.c.bf16 %v408, %v408
      %v441 = vpack.c.bf16 %v409, %v409
      %v442 = vpack.c.bf16 %v410, %v410
      %v443 = vpack.c.bf16 %v411, %v411
      %v444 = vpack.c.bf16 %v412, %v412
      %v445 = vpack.c.bf16 %v413, %v413
      %v446 = vpack.c.bf16 %v414, %v414
      %v447 = vpack.c.bf16 %v415, %v415
      %v448 = vpack.c.bf16 %v416, %v416
      %vm449 = vcmask 60416
      %450 = vst.msk [vmem:[%s226] sm:$0xf] %vm449, %v417
      %451 = vst.msk [vmem:[%s226 + $0x4] sm:$0xf] %vm449, %v418
      %452 = vst.msk [vmem:[%s226 + $0x8] sm:$0xf] %vm449, %v419
      %453 = vst.msk [vmem:[%s226 + $0xc] sm:$0xf] %vm449, %v420
      %454 = vst.msk [vmem:[%s226 + $0x10] sm:$0xf] %vm449, %v421
      %455 = vst.msk [vmem:[%s226 + $0x14] sm:$0xf] %vm449, %v422
      %456 = vst.msk [vmem:[%s226 + $0x18] sm:$0xf] %vm449, %v423
      %457 = vst.msk [vmem:[%s226 + $0x1c] sm:$0xf] %vm449, %v424
      %458 = vst.msk [vmem:[%s226 + $0x20] sm:$0xf] %vm449, %v425
      %459 = vst.msk [vmem:[%s226 + $0x24] sm:$0xf] %vm449, %v426
      %460 = vst.msk [vmem:[%s226 + $0x28] sm:$0xf] %vm449, %v427
      %461 = vst.msk [vmem:[%s226 + $0x2c] sm:$0xf] %vm449, %v428
      %462 = vst.msk [vmem:[%s226 + $0x30] sm:$0xf] %vm449, %v429
      %463 = vst.msk [vmem:[%s226 + $0x34] sm:$0xf] %vm449, %v430
      %464 = vst.msk [vmem:[%s226 + $0x38] sm:$0xf] %vm449, %v431
      %465 = vst.msk [vmem:[%s226 + $0x3c] sm:$0xf] %vm449, %v432
      %466 = vst.msk [vmem:[%s226 + $0x40] sm:$0xf] %vm449, %v433
      %467 = vst.msk [vmem:[%s226 + $0x44] sm:$0xf] %vm449, %v434
      %468 = vst.msk [vmem:[%s226 + $0x48] sm:$0xf] %vm449, %v435
      %469 = vst.msk [vmem:[%s226 + $0x4c] sm:$0xf] %vm449, %v436
      %470 = vst.msk [vmem:[%s226 + $0x50] sm:$0xf] %vm449, %v437
      %471 = vst.msk [vmem:[%s226 + $0x54] sm:$0xf] %vm449, %v438
      %472 = vst.msk [vmem:[%s226 + $0x58] sm:$0xf] %vm449, %v439
      %473 = vst.msk [vmem:[%s226 + $0x5c] sm:$0xf] %vm449, %v440
      %474 = vst.msk [vmem:[%s226 + $0x60] sm:$0xf] %vm449, %v441
      %475 = vst.msk [vmem:[%s226 + $0x64] sm:$0xf] %vm449, %v442
      %476 = vst.msk [vmem:[%s226 + $0x68] sm:$0xf] %vm449, %v443
      %477 = vst.msk [vmem:[%s226 + $0x6c] sm:$0xf] %vm449, %v444
      %478 = vst.msk [vmem:[%s226 + $0x70] sm:$0xf] %vm449, %v445
      %479 = vst.msk [vmem:[%s226 + $0x74] sm:$0xf] %vm449, %v446
      %480 = vst.msk [vmem:[%s226 + $0x78] sm:$0xf] %vm449, %v447
      %481 = vst.msk [vmem:[%s226 + $0x7c] sm:$0xf] %vm449, %v448
      %s482 = smul.u32 32, %s16
      %p483 = scmp.lt.s32.totalorder %s482, 63
      %s484 = scalar_select %p483, %s482, 63
      %s485 = smul.addr %s484, 4
      %s486 = scalar_lea.vmem %s5, %s485
      // Predicated region
      $region41: #{resnet_generator_forward.20} parent=39 // pred_check
        %p487 = pneg %p144
      $region42: #{resnet_generator_forward.20} parent=39 // pred_check_branch
        %489 = sbr.rel (%p487) target = $region44
      $region43: #{resnet_generator_forward.20} parent=39 // pred_region
        %s490 = smul.u32 32, %s16
      $region44: #{resnet_generator_forward.20} parent=39 // pred_fallthru
        _
    $region40: #{resnet_generator_forward.20} parent=5 // pred_fallthru
      _
    %p491 = scmp.le.s32.totalorder 2, %s11
    // Predicated region
    $region45: #{resnet_generator_forward.20} parent=5 // pred_check
      %p492 = pneg %p491
    $region46: #{resnet_generator_forward.20} parent=5 // pred_check_branch
      %494 = sbr.rel (%p492) target = $region48
    $region47: #{resnet_generator_forward.20} parent=5 // pred_region
      %s495 = ssub.s32 %s11, 2
      // Predicated region
      $region49: #{resnet_generator_forward.20} parent=47 // pred_check
        %p496 = pneg %p150
      $region50: #{resnet_generator_forward.20} parent=47 // pred_check_branch
        %498 = sbr.rel (%p496) target = $region52
      $region51: #{resnet_generator_forward.20} parent=47 // pred_region
        %s499 = smul.u32 32, %s17
        %p500 = scmp.lt.s32.totalorder %s499, 63
        %s501 = scalar_select %p500, %s499, 63
        %s502 = smul.addr %s501, 4
        %s503 = scalar_lea.vmem %s5, %s502
      $region52: #{resnet_generator_forward.20} parent=47 // pred_fallthru
        _
    $region48: #{resnet_generator_forward.20} parent=5 // pred_fallthru
      _
  $region6: #{resnet_generator_forward.20} parent=0 // loop_footer
    %s15 = sadd.s32 1, %s11
  $region7: #{resnet_generator_forward.20} parent=0 // loop_footer_branch
    %10 = sbr.rel target = $region3
  $region8: #{resnet_generator_forward.20} parent=0 // loop_exit
    _

// kernel: resnet_generator_forward.19
$region0: #{resnet_generator_forward.19}
  #allocation0 [shape = 'u32[]', space=smem, size = 0x4, offset = 0x4, fixed_abs, tag = 'smem constant byte address 0x4 - core index']
  #allocation1 [shape = 'u32[72,128]{1,0:T(1,128)}', space=vmem, size = 0x9000, scoped, tag = 'internal scratch']
  %s0 = inlined_call_operand.vmem [shape: bf16[512,256], index: 0, kind: input, shape index: {}]
  %s1 = inlined_call_operand.vmem [shape: bf16[256,8], index: 1, kind: input, shape index: {}]
  %s2 = inlined_call_operand.vmem [shape: bf16[512,8], index: 2, kind: output, shape index: {0}]
  %s3 = inlined_call_operand.vmem [shape: f32[1,8], index: 3, kind: output, shape index: {1}]
  %s4 = inlined_call_operand.vmem [shape: f32[1,8], index: 4, kind: output, shape index: {2}]
  %5 = xla_tuple %s2, %s3, %s4
  %s6 = sld [smem:[#allocation0]]
  $region61: #{resnet_generator_forward.19} parent=0
    _
  %s8 = ssub.s32 1, %s6
  %s9 = scalar_select 0, %s8, %s6
  loop: start=0, step=1, limit=4
  $region2: #{resnet_generator_forward.19} parent=0 // loop_pre_header
    _
  $region3: #{resnet_generator_forward.19} parent=0 // loop_header
    %s11 = sphi 0, %s15
    %p12 = scmp.ge.s32.totalorder %s11, 4
    %s21 = sphi 0, %s23
    %s24 = sphi 0, %s21
    %s25 = sphi 0, %s24
    %s41 = sphi 0, %s25
    %s45 = sphi 0, %s45
    %s47 = sphi 0, %s45
    %s48 = sphi 0, %s47
    %s62 = sphi 0, %s48
    %s68 = sphi 0, %s70
    %s71 = sphi 0, %s68
    %s72 = sphi 0, %s71
    %s88 = sphi 0, %s72
    %s92 = sphi 0, %s92
    %s94 = sphi 0, %s92
    %s95 = sphi 0, %s94
    %s109 = sphi 0, %s95
    %s113 = sphi 0, %s113
    %s115 = sphi 0, %s113
    %s116 = sphi 0, %s115
    %s130 = sphi 0, %s116
  $region4: #{resnet_generator_forward.19} parent=0 // loop_header_branch
    %14 = sbr.rel (%p12) target = $region8
  $region5: #{resnet_generator_forward.19} parent=0 // loop_body
    %s16 = ssub.s32 %s11, 1
    %s17 = ssub.s32 %s11, 2
    %s18 = sadd.s32 %s11, 1
    %s19 = ssub.s32 %s11, %s18
    %p20 = scmp.eq.s32.totalorder %s19, 0
    %s22 = sadd.s32 %s21, 1
    %s23 = scalar_select %p20, %s21, %s22
    %p26 = pneg %p20
    %p27 = scmp.eq.s32.totalorder %s11, 1
    %p28 = por %p26, %p27
    %p29 = scmp.ne.s32.totalorder %s21, %s24
    %p30 = scmp.eq.s32.totalorder %s11, 0
    %p31 = por %p29, %p30
    %p32 = scmp.ne.s32.totalorder %s21, %s24
    %p33 = scmp.eq.s32.totalorder %s16, 1
    %p34 = por %p32, %p33
    %p35 = scmp.ne.s32.totalorder %s24, %s25
    %p36 = scmp.eq.s32.totalorder %s16, 0
    %p37 = por %p35, %p36
    %p38 = scmp.ne.s32.totalorder %s24, %s25
    %p39 = scmp.eq.s32.totalorder %s17, 1
    %p40 = por %p38, %p39
    %p42 = scmp.ne.s32.totalorder %s25, %s41
    %p43 = scmp.eq.s32.totalorder %s17, 0
    %p44 = por %p42, %p43
    %s46 = sadd.s32 %s45, 1
    %p49 = scmp.eq.s32.totalorder %s11, 1
    %p50 = scmp.ne.s32.totalorder %s45, %s47
    %p51 = scmp.eq.s32.totalorder %s11, 0
    %p52 = por %p50, %p51
    %p53 = scmp.ne.s32.totalorder %s45, %s47
    %p54 = scmp.eq.s32.totalorder %s16, 1
    %p55 = por %p53, %p54
    %p56 = scmp.ne.s32.totalorder %s47, %s48
    %p57 = scmp.eq.s32.totalorder %s16, 0
    %p58 = por %p56, %p57
    %p59 = scmp.ne.s32.totalorder %s47, %s48
    %p60 = scmp.eq.s32.totalorder %s17, 1
    %p61 = por %p59, %p60
    %p63 = scmp.ne.s32.totalorder %s48, %s62
    %p64 = scmp.eq.s32.totalorder %s17, 0
    %p65 = por %p63, %p64
    %s66 = ssub.s32 %s11, %s18
    %p67 = scmp.eq.s32.totalorder %s66, 0
    %s69 = sadd.s32 %s68, 1
    %s70 = scalar_select %p67, %s68, %s69
    %p73 = pneg %p67
    %p74 = scmp.eq.s32.totalorder %s11, 1
    %p75 = por %p73, %p74
    %p76 = scmp.ne.s32.totalorder %s68, %s71
    %p77 = scmp.eq.s32.totalorder %s11, 0
    %p78 = por %p76, %p77
    %p79 = scmp.ne.s32.totalorder %s68, %s71
    %p80 = scmp.eq.s32.totalorder %s16, 1
    %p81 = por %p79, %p80
    %p82 = scmp.ne.s32.totalorder %s71, %s72
    %p83 = scmp.eq.s32.totalorder %s16, 0
    %p84 = por %p82, %p83
    %p85 = scmp.ne.s32.totalorder %s71, %s72
    %p86 = scmp.eq.s32.totalorder %s17, 1
    %p87 = por %p85, %p86
    %p89 = scmp.ne.s32.totalorder %s72, %s88
    %p90 = scmp.eq.s32.totalorder %s17, 0
    %p91 = por %p89, %p90
    %s93 = sadd.s32 %s92, 1
    %p96 = scmp.eq.s32.totalorder %s11, 1
    %p97 = scmp.ne.s32.totalorder %s92, %s94
    %p98 = scmp.eq.s32.totalorder %s11, 0
    %p99 = por %p97, %p98
    %p100 = scmp.ne.s32.totalorder %s92, %s94
    %p101 = scmp.eq.s32.totalorder %s16, 1
    %p102 = por %p100, %p101
    %p103 = scmp.ne.s32.totalorder %s94, %s95
    %p104 = scmp.eq.s32.totalorder %s16, 0
    %p105 = por %p103, %p104
    %p106 = scmp.ne.s32.totalorder %s94, %s95
    %p107 = scmp.eq.s32.totalorder %s17, 1
    %p108 = por %p106, %p107
    %p110 = scmp.ne.s32.totalorder %s95, %s109
    %p111 = scmp.eq.s32.totalorder %s17, 0
    %p112 = por %p110, %p111
    %s114 = sadd.s32 %s113, 1
    %p117 = scmp.eq.s32.totalorder %s11, 1
    %p118 = scmp.ne.s32.totalorder %s113, %s115
    %p119 = scmp.eq.s32.totalorder %s11, 0
    %p120 = por %p118, %p119
    %p121 = scmp.ne.s32.totalorder %s113, %s115
    %p122 = scmp.eq.s32.totalorder %s16, 1
    %p123 = por %p121, %p122
    %p124 = scmp.ne.s32.totalorder %s115, %s116
    %p125 = scmp.eq.s32.totalorder %s16, 0
    %p126 = por %p124, %p125
    %p127 = scmp.ne.s32.totalorder %s115, %s116
    %p128 = scmp.eq.s32.totalorder %s17, 1
    %p129 = por %p127, %p128
    %p131 = scmp.ne.s32.totalorder %s116, %s130
    %p132 = scmp.eq.s32.totalorder %s17, 0
    %p133 = por %p131, %p132
    %p134 = scmp.le.s32.totalorder 1, %s11
    %p135 = scmp.lt.s32.totalorder %s11, 3
    %p136 = pnand %p134, %p135
    %p137 = pneg %p136
    // Predicated region
    $region9: #{resnet_generator_forward.19} parent=5 // pred_check
      _
    $region10: #{resnet_generator_forward.19} parent=5 // pred_check_branch
      %139 = sbr.rel (%p136) target = $region12
    $region11: #{resnet_generator_forward.19} parent=5 // pred_region
      %s140 = ssub.s32 %s11, 1
      // Predicated region
      $region13: #{resnet_generator_forward.19} parent=11 // pred_check
        %p141 = pneg %p58
      $region14: #{resnet_generator_forward.19} parent=11 // pred_check_branch
        %143 = sbr.rel (%p141) target = $region16
      $region15: #{resnet_generator_forward.19} parent=11 // pred_region
        _
      $region16: #{resnet_generator_forward.19} parent=11 // pred_fallthru
        _
    $region12: #{resnet_generator_forward.19} parent=5 // pred_fallthru
      _
    %p144 = scmp.lt.s32.totalorder %s11, 2
    // Predicated region
    $region17: #{resnet_generator_forward.19} parent=5 // pred_check
      %p145 = pneg %p144
    $region18: #{resnet_generator_forward.19} parent=5 // pred_check_branch
      %147 = sbr.rel (%p145) target = $region20
    $region19: #{resnet_generator_forward.19} parent=5 // pred_region
      // Predicated region
      $region21: #{resnet_generator_forward.19} parent=19 // pred_check
        %p148 = pneg %p31
      $region22: #{resnet_generator_forward.19} parent=19 // pred_check_branch
        %150 = sbr.rel (%p148) target = $region24
      $region23: #{resnet_generator_forward.19} parent=19 // pred_region
        %s151 = smul.u32 32, %s11
        %p152 = scmp.lt.s32.totalorder %s151, 63
        %s153 = scalar_select %p152, %s151, 63
        %s154 = smul.addr %s153, 2
        %s155 = smul.addr %s154, 4
        %s156 = scalar_lea.vmem %s0, %s155
        %s157 = smul.u32 32, %s11
      $region24: #{resnet_generator_forward.19} parent=19 // pred_fallthru
        _
    $region20: #{resnet_generator_forward.19} parent=5 // pred_fallthru
      _
    %p158 = scmp.le.s32.totalorder 1, %s11
    %p159 = scmp.lt.s32.totalorder %s11, 3
    %p160 = pnand %p158, %p159
    %p161 = pneg %p160
    // Predicated region
    $region25: #{resnet_generator_forward.19} parent=5 // pred_check
      _
    $region26: #{resnet_generator_forward.19} parent=5 // pred_check_branch
      %163 = sbr.rel (%p160) target = $region28
    $region27: #{resnet_generator_forward.19} parent=5 // pred_region
      %s164 = ssub.s32 %s11, 1
      %s165 = smul.u32 32, %s16
      %p166 = scmp.lt.s32.totalorder %s165, 63
      %s167 = scalar_select %p166, %s165, 63
      %s168 = smul.addr %s167, 2
      %s169 = smul.addr %s168, 4
      %s170 = scalar_lea.vmem %s0, %s169
      %p171 = pneg %p37
      %p172 = pneg %p34
      %p173 = pneg %p58
      %p174 = pneg %p55
      %p175 = pneg %p84
      %p176 = pneg %p81
      %s177 = smul.u32 32, %s16
      %p178 = scmp.lt.s32.totalorder %s177, 63
      %s179 = scalar_select %p178, %s177, 63
      %s180 = smul.addr %s179, 4
      %s181 = scalar_lea.vmem %s2, %s180
      %p182 = pneg %p105
      %p183 = pneg %p102
      %p184 = pneg %p126
      %p185 = pneg %p123
      %s186 = smul.u32 32, %s16
      %p187 = scmp.lt.s32.totalorder %s186, 63
      %s188 = scalar_select %p187, %s186, 63
      %s189 = smul.addr %s188, 2
      %s190 = smul.addr %s189, 4
      %s191 = scalar_lea.vmem %s0, %s190
      %s192 = smul.u32 32, %s16
      %s193 = smul.u32 32, %s16
      %p194 = scmp.lt.s32.totalorder %s193, 63
      %s195 = scalar_select %p194, %s193, 63
      %s196 = smul.addr %s195, 4
      %s197 = scalar_lea.vmem %s2, %s196
      %s198 = smul.u32 32, %s16
      %v199 = vld [vmem:[%s191] sm:$0xff]
      %v200 = vld [vmem:[%s191 + $0x8] sm:$0xff]
      %v201 = vld [vmem:[%s191 + $0x10] sm:$0xff]
      %v202 = vld [vmem:[%s191 + $0x18] sm:$0xff]
      %v203 = vld [vmem:[%s191 + $0x20] sm:$0xff]
      %v204 = vld [vmem:[%s191 + $0x28] sm:$0xff]
      %v205 = vld [vmem:[%s191 + $0x30] sm:$0xff]
      %v206 = vld [vmem:[%s191 + $0x38] sm:$0xff]
      %v207 = vld [vmem:[%s191 + $0x40] sm:$0xff]
      %v208 = vld [vmem:[%s191 + $0x48] sm:$0xff]
      %v209 = vld [vmem:[%s191 + $0x50] sm:$0xff]
      %v210 = vld [vmem:[%s191 + $0x58] sm:$0xff]
      %v211 = vld [vmem:[%s191 + $0x60] sm:$0xff]
      %v212 = vld [vmem:[%s191 + $0x68] sm:$0xff]
      %v213 = vld [vmem:[%s191 + $0x70] sm:$0xff]
      %v214 = vld [vmem:[%s191 + $0x78] sm:$0xff]
      %v215 = vld [vmem:[%s191 + $0x80] sm:$0xff]
      %v216 = vld [vmem:[%s191 + $0x88] sm:$0xff]
      %v217 = vld [vmem:[%s191 + $0x90] sm:$0xff]
      %v218 = vld [vmem:[%s191 + $0x98] sm:$0xff]
      %v219 = vld [vmem:[%s191 + $0xa0] sm:$0xff]
      %v220 = vld [vmem:[%s191 + $0xa8] sm:$0xff]
      %v221 = vld [vmem:[%s191 + $0xb0] sm:$0xff]
      %v222 = vld [vmem:[%s191 + $0xb8] sm:$0xff]
      %v223 = vld [vmem:[%s191 + $0xc0] sm:$0xff]
      %v224 = vld [vmem:[%s191 + $0xc8] sm:$0xff]
      %v225 = vld [vmem:[%s191 + $0xd0] sm:$0xff]
      %v226 = vld [vmem:[%s191 + $0xd8] sm:$0xff]
      %v227 = vld [vmem:[%s191 + $0xe0] sm:$0xff]
      %v228 = vld [vmem:[%s191 + $0xe8] sm:$0xff]
      %v229 = vld [vmem:[%s191 + $0xf0] sm:$0xff]
      %v230 = vld [vmem:[%s191 + $0xf8] sm:$0xff]
      %v231 = vld [vmem:[%s1] sm:$0xf]
      %v232 = vld [vmem:[%s1 + $0x4] sm:$0xf]
      %v233 = vld [vmem:[%s1 + $0x8] sm:$0xf]
      %v234 = vld [vmem:[%s1 + $0xc] sm:$0xf]
      %v235 = vld [vmem:[%s1 + $0x10] sm:$0xf]
      %v236 = vld [vmem:[%s1 + $0x14] sm:$0xf]
      %v237 = vld [vmem:[%s1 + $0x18] sm:$0xf]
      %v238 = vld [vmem:[%s1 + $0x1c] sm:$0xf]
      %v239 = vld [vmem:[%s1 + $0x20] sm:$0xf]
      %v240 = vld [vmem:[%s1 + $0x24] sm:$0xf]
      %v241 = vld [vmem:[%s1 + $0x28] sm:$0xf]
      %v242 = vld [vmem:[%s1 + $0x2c] sm:$0xf]
      %v243 = vld [vmem:[%s1 + $0x30] sm:$0xf]
      %v244 = vld [vmem:[%s1 + $0x34] sm:$0xf]
      %v245 = vld [vmem:[%s1 + $0x38] sm:$0xf]
      %v246 = vld [vmem:[%s1 + $0x3c] sm:$0xf]
      %v247 = vld [vmem:[%s1 + $0x40] sm:$0xf]
      %v248 = vld [vmem:[%s1 + $0x44] sm:$0xf]
      %v249 = vld [vmem:[%s1 + $0x48] sm:$0xf]
      %v250 = vld [vmem:[%s1 + $0x4c] sm:$0xf]
      %v251 = vld [vmem:[%s1 + $0x50] sm:$0xf]
      %v252 = vld [vmem:[%s1 + $0x54] sm:$0xf]
      %v253 = vld [vmem:[%s1 + $0x58] sm:$0xf]
      %v254 = vld [vmem:[%s1 + $0x5c] sm:$0xf]
      %v255 = vld [vmem:[%s1 + $0x60] sm:$0xf]
      %v256 = vld [vmem:[%s1 + $0x64] sm:$0xf]
      %v257 = vld [vmem:[%s1 + $0x68] sm:$0xf]
      %v258 = vld [vmem:[%s1 + $0x6c] sm:$0xf]
      %v259 = vld [vmem:[%s1 + $0x70] sm:$0xf]
      %v260 = vld [vmem:[%s1 + $0x74] sm:$0xf]
      %v261 = vld [vmem:[%s1 + $0x78] sm:$0xf]
      %v262 = vld [vmem:[%s1 + $0x7c] sm:$0xf]
      %v295 = vunpack.c.l.b16 %v199
      %v296 = vunpack.c.h.b16 %v199
      %v297 = vunpack.c.l.b16 %v200
      %v298 = vunpack.c.h.b16 %v200
      %v299 = vunpack.c.l.b16 %v201
      %v300 = vunpack.c.h.b16 %v201
      %v301 = vunpack.c.l.b16 %v202
      %v302 = vunpack.c.h.b16 %v202
      %v303 = vunpack.c.l.b16 %v203
      %v304 = vunpack.c.h.b16 %v203
      %v305 = vunpack.c.l.b16 %v204
      %v306 = vunpack.c.h.b16 %v204
      %v307 = vunpack.c.l.b16 %v205
      %v308 = vunpack.c.h.b16 %v205
      %v309 = vunpack.c.l.b16 %v206
      %v310 = vunpack.c.h.b16 %v206
      %v311 = vunpack.c.l.b16 %v207
      %v312 = vunpack.c.h.b16 %v207
      %v313 = vunpack.c.l.b16 %v208
      %v314 = vunpack.c.h.b16 %v208
      %v315 = vunpack.c.l.b16 %v209
      %v316 = vunpack.c.h.b16 %v209
      %v317 = vunpack.c.l.b16 %v210
      %v318 = vunpack.c.h.b16 %v210
      %v319 = vunpack.c.l.b16 %v211
      %v320 = vunpack.c.h.b16 %v211
      %v321 = vunpack.c.l.b16 %v212
      %v322 = vunpack.c.h.b16 %v212
      %v323 = vunpack.c.l.b16 %v213
      %v324 = vunpack.c.h.b16 %v213
      %v325 = vunpack.c.l.b16 %v214
      %v326 = vunpack.c.h.b16 %v214
      %v327 = vunpack.c.l.b16 %v215
      %v328 = vunpack.c.h.b16 %v215
      %v329 = vunpack.c.l.b16 %v216
      %v330 = vunpack.c.h.b16 %v216
      %v331 = vunpack.c.l.b16 %v217
      %v332 = vunpack.c.h.b16 %v217
      %v333 = vunpack.c.l.b16 %v218
      %v334 = vunpack.c.h.b16 %v218
      %v335 = vunpack.c.l.b16 %v219
      %v336 = vunpack.c.h.b16 %v219
      %v337 = vunpack.c.l.b16 %v220
      %v338 = vunpack.c.h.b16 %v220
      %v339 = vunpack.c.l.b16 %v221
      %v340 = vunpack.c.h.b16 %v221
      %v341 = vunpack.c.l.b16 %v222
      %v342 = vunpack.c.h.b16 %v222
      %v343 = vunpack.c.l.b16 %v223
      %v344 = vunpack.c.h.b16 %v223
      %v345 = vunpack.c.l.b16 %v224
      %v346 = vunpack.c.h.b16 %v224
      %v347 = vunpack.c.l.b16 %v225
      %v348 = vunpack.c.h.b16 %v225
      %v349 = vunpack.c.l.b16 %v226
      %v350 = vunpack.c.h.b16 %v226
      %v351 = vunpack.c.l.b16 %v227
      %v352 = vunpack.c.h.b16 %v227
      %v353 = vunpack.c.l.b16 %v228
      %v354 = vunpack.c.h.b16 %v228
      %v355 = vunpack.c.l.b16 %v229
      %v356 = vunpack.c.h.b16 %v229
      %v357 = vunpack.c.l.b16 %v230
      %v358 = vunpack.c.h.b16 %v230
      %v359 = vpack.c.b16 %v297, %v295
      %v360 = vpack.c.b16 %v298, %v296
      %v361 = vpack.c.b16 %v301, %v299
      %v362 = vpack.c.b16 %v302, %v300
      %v363 = vpack.c.b16 %v305, %v303
      %v364 = vpack.c.b16 %v306, %v304
      %v365 = vpack.c.b16 %v309, %v307
      %v366 = vpack.c.b16 %v310, %v308
      %v367 = vpack.c.b16 %v313, %v311
      %v368 = vpack.c.b16 %v314, %v312
      %v369 = vpack.c.b16 %v317, %v315
      %v370 = vpack.c.b16 %v318, %v316
      %v371 = vpack.c.b16 %v321, %v319
      %v372 = vpack.c.b16 %v322, %v320
      %v373 = vpack.c.b16 %v325, %v323
      %v374 = vpack.c.b16 %v326, %v324
      %v375 = vpack.c.b16 %v329, %v327
      %v376 = vpack.c.b16 %v330, %v328
      %v377 = vpack.c.b16 %v333, %v331
      %v378 = vpack.c.b16 %v334, %v332
      %v379 = vpack.c.b16 %v337, %v335
      %v380 = vpack.c.b16 %v338, %v336
      %v381 = vpack.c.b16 %v341, %v339
      %v382 = vpack.c.b16 %v342, %v340
      %v383 = vpack.c.b16 %v345, %v343
      %v384 = vpack.c.b16 %v346, %v344
      %v385 = vpack.c.b16 %v349, %v347
      %v386 = vpack.c.b16 %v350, %v348
      %v387 = vpack.c.b16 %v353, %v351
      %v388 = vpack.c.b16 %v354, %v352
      %v389 = vpack.c.b16 %v357, %v355
      %v390 = vpack.c.b16 %v358, %v356
      %v455 = vunpack.c.l.b16 %v231
      %v456 = vunpack.c.l.b16 %v232
      %v457 = vunpack.c.l.b16 %v233
      %v458 = vunpack.c.l.b16 %v234
      %v459 = vunpack.c.l.b16 %v235
      %v460 = vunpack.c.l.b16 %v236
      %v461 = vunpack.c.l.b16 %v237
      %v462 = vunpack.c.l.b16 %v238
      %v463 = vunpack.c.l.b16 %v239
      %v464 = vunpack.c.l.b16 %v240
      %v465 = vunpack.c.l.b16 %v241
      %v466 = vunpack.c.l.b16 %v242
      %v467 = vunpack.c.l.b16 %v243
      %v468 = vunpack.c.l.b16 %v244
      %v469 = vunpack.c.l.b16 %v245
      %v470 = vunpack.c.l.b16 %v246
      %v471 = vunpack.c.l.b16 %v247
      %v472 = vunpack.c.l.b16 %v248
      %v473 = vunpack.c.l.b16 %v249
      %v474 = vunpack.c.l.b16 %v250
      %v475 = vunpack.c.l.b16 %v251
      %v476 = vunpack.c.l.b16 %v252
      %v477 = vunpack.c.l.b16 %v253
      %v478 = vunpack.c.l.b16 %v254
      %v479 = vunpack.c.l.b16 %v255
      %v480 = vunpack.c.l.b16 %v256
      %v481 = vunpack.c.l.b16 %v257
      %v482 = vunpack.c.l.b16 %v258
      %v483 = vunpack.c.l.b16 %v259
      %v484 = vunpack.c.l.b16 %v260
      %v485 = vunpack.c.l.b16 %v261
      %v486 = vunpack.c.l.b16 %v262
      %v487 = vpack.c.b16 %v456, %v455
      %v488 = vpack.c.b16 %v458, %v457
      %v489 = vpack.c.b16 %v460, %v459
      %v490 = vpack.c.b16 %v462, %v461
      %v491 = vpack.c.b16 %v464, %v463
      %v492 = vpack.c.b16 %v466, %v465
      %v493 = vpack.c.b16 %v468, %v467
      %v494 = vpack.c.b16 %v470, %v469
      %v495 = vpack.c.b16 %v472, %v471
      %v496 = vpack.c.b16 %v474, %v473
      %v497 = vpack.c.b16 %v476, %v475
      %v498 = vpack.c.b16 %v478, %v477
      %v499 = vpack.c.b16 %v480, %v479
      %v500 = vpack.c.b16 %v482, %v481
      %v501 = vpack.c.b16 %v484, %v483
      %v502 = vpack.c.b16 %v486, %v485
      %519 = vmatpush.bf16.msra.mxu0 %v494
      %520 = vmatpush.bf16.msra.mxu0 %v493
      %521 = vmatpush.bf16.msra.mxu0 %v492
      %522 = vmatpush.bf16.msra.mxu0 %v491
      %523 = vmatpush.bf16.msra.mxu0 %v490
      %524 = vmatpush.bf16.msra.mxu0 %v489
      %525 = vmatpush.bf16.msra.mxu0 %v488
      %526 = vmatpush.bf16.msra.mxu0 %v487
      %527 = vmatmul.bf16.gmra.mxu0 %v359
      %v528 = vpop.f32.mrf.mxu0
      %v529 = vadd.f32 0.0, %v528
      %v530 = vpop.f32.mrf.mxu0
      %v531 = vadd.f32 0.0, %v530
      %532 = vmatmul.bf16.gmra.mxu0 %v361
      %v533 = vpop.f32.mrf.mxu0
      %v534 = vadd.f32 0.0, %v533
      %v535 = vpop.f32.mrf.mxu0
      %v536 = vadd.f32 0.0, %v535
      %537 = vmatmul.bf16.gmra.mxu0 %v363
      %v538 = vpop.f32.mrf.mxu0
      %v539 = vadd.f32 0.0, %v538
      %v540 = vpop.f32.mrf.mxu0
      %v541 = vadd.f32 0.0, %v540
      %542 = vmatmul.bf16.gmra.mxu0 %v365
      %v543 = vpop.f32.mrf.mxu0
      %v544 = vadd.f32 0.0, %v543
      %v545 = vpop.f32.mrf.mxu0
      %v546 = vadd.f32 0.0, %v545
      %547 = vmatmul.bf16.gmra.mxu0 %v367
      %v548 = vpop.f32.mrf.mxu0
      %v549 = vadd.f32 0.0, %v548
      %v550 = vpop.f32.mrf.mxu0
      %v551 = vadd.f32 0.0, %v550
      %552 = vmatmul.bf16.gmra.mxu0 %v369
      %v553 = vpop.f32.mrf.mxu0
      %v554 = vadd.f32 0.0, %v553
      %v555 = vpop.f32.mrf.mxu0
      %v556 = vadd.f32 0.0, %v555
      %557 = vmatmul.bf16.gmra.mxu0 %v371
      %v558 = vpop.f32.mrf.mxu0
      %v559 = vadd.f32 0.0, %v558
      %v560 = vpop.f32.mrf.mxu0
      %v561 = vadd.f32 0.0, %v560
      %562 = vmatmul.bf16.gmra.mxu0 %v373
      %v563 = vpop.f32.mrf.mxu0
      %v564 = vadd.f32 0.0, %v563
      %v565 = vpop.f32.mrf.mxu0
      %v566 = vadd.f32 0.0, %v565
      %567 = vmatmul.bf16.gmra.mxu0 %v375
      %v568 = vpop.f32.mrf.mxu0
      %v569 = vadd.f32 0.0, %v568
      %v570 = vpop.f32.mrf.mxu0
      %v571 = vadd.f32 0.0, %v570
      %572 = vmatmul.bf16.gmra.mxu0 %v377
      %v573 = vpop.f32.mrf.mxu0
      %v574 = vadd.f32 0.0, %v573
      %v575 = vpop.f32.mrf.mxu0
      %v576 = vadd.f32 0.0, %v575
      %577 = vmatmul.bf16.gmra.mxu0 %v379
      %v578 = vpop.f32.mrf.mxu0
      %v579 = vadd.f32 0.0, %v578
      %v580 = vpop.f32.mrf.mxu0
      %v581 = vadd.f32 0.0, %v580
      %582 = vmatmul.bf16.gmra.mxu0 %v381
      %v583 = vpop.f32.mrf.mxu0
      %v584 = vadd.f32 0.0, %v583
      %v585 = vpop.f32.mrf.mxu0
      %v586 = vadd.f32 0.0, %v585
      %587 = vmatmul.bf16.gmra.mxu0 %v383
      %v588 = vpop.f32.mrf.mxu0
      %v589 = vadd.f32 0.0, %v588
      %v590 = vpop.f32.mrf.mxu0
      %v591 = vadd.f32 0.0, %v590
      %592 = vmatmul.bf16.gmra.mxu0 %v385
      %v593 = vpop.f32.mrf.mxu0
      %v594 = vadd.f32 0.0, %v593
      %v595 = vpop.f32.mrf.mxu0
      %v596 = vadd.f32 0.0, %v595
      %597 = vmatmul.bf16.gmra.mxu0 %v387
      %v598 = vpop.f32.mrf.mxu0
      %v599 = vadd.f32 0.0, %v598
      %v600 = vpop.f32.mrf.mxu0
      %v601 = vadd.f32 0.0, %v600
      %602 = vmatmul.bf16.gmra.mxu0 %v389
      %v603 = vpop.f32.mrf.mxu0
      %v604 = vadd.f32 0.0, %v603
      %v605 = vpop.f32.mrf.mxu0
      %v606 = vadd.f32 0.0, %v605
      %607 = vdwg.mxu0
      %608 = vmatpush.bf16.msra.mxu0 %v502
      %609 = vmatpush.bf16.msra.mxu0 %v501
      %610 = vmatpush.bf16.msra.mxu0 %v500
      %611 = vmatpush.bf16.msra.mxu0 %v499
      %612 = vmatpush.bf16.msra.mxu0 %v498
      %613 = vmatpush.bf16.msra.mxu0 %v497
      %614 = vmatpush.bf16.msra.mxu0 %v496
      %615 = vmatpush.bf16.msra.mxu0 %v495
      %616 = vmatmul.bf16.gmra.mxu0 %v360
      %v617 = vpop.f32.mrf.mxu0
      %v618 = vadd.f32 %v529, %v617
      %v619 = vpop.f32.mrf.mxu0
      %v620 = vadd.f32 %v531, %v619
      %621 = vmatmul.bf16.gmra.mxu0 %v362
      %v622 = vpop.f32.mrf.mxu0
      %v623 = vadd.f32 %v534, %v622
      %v624 = vpop.f32.mrf.mxu0
      %v625 = vadd.f32 %v536, %v624
      %626 = vmatmul.bf16.gmra.mxu0 %v364
      %v627 = vpop.f32.mrf.mxu0
      %v628 = vadd.f32 %v539, %v627
      %v629 = vpop.f32.mrf.mxu0
      %v630 = vadd.f32 %v541, %v629
      %631 = vmatmul.bf16.gmra.mxu0 %v366
      %v632 = vpop.f32.mrf.mxu0
      %v633 = vadd.f32 %v544, %v632
      %v634 = vpop.f32.mrf.mxu0
      %v635 = vadd.f32 %v546, %v634
      %636 = vmatmul.bf16.gmra.mxu0 %v368
      %v637 = vpop.f32.mrf.mxu0
      %v638 = vadd.f32 %v549, %v637
      %v639 = vpop.f32.mrf.mxu0
      %v640 = vadd.f32 %v551, %v639
      %641 = vmatmul.bf16.gmra.mxu0 %v370
      %v642 = vpop.f32.mrf.mxu0
      %v643 = vadd.f32 %v554, %v642
      %v644 = vpop.f32.mrf.mxu0
      %v645 = vadd.f32 %v556, %v644
      %646 = vmatmul.bf16.gmra.mxu0 %v372
      %v647 = vpop.f32.mrf.mxu0
      %v648 = vadd.f32 %v559, %v647
      %v649 = vpop.f32.mrf.mxu0
      %v650 = vadd.f32 %v561, %v649
      %651 = vmatmul.bf16.gmra.mxu0 %v374
      %v652 = vpop.f32.mrf.mxu0
      %v653 = vadd.f32 %v564, %v652
      %v654 = vpop.f32.mrf.mxu0
      %v655 = vadd.f32 %v566, %v654
      %656 = vmatmul.bf16.gmra.mxu0 %v376
      %v657 = vpop.f32.mrf.mxu0
      %v658 = vadd.f32 %v569, %v657
      %v659 = vpop.f32.mrf.mxu0
      %v660 = vadd.f32 %v571, %v659
      %661 = vmatmul.bf16.gmra.mxu0 %v378
      %v662 = vpop.f32.mrf.mxu0
      %v663 = vadd.f32 %v574, %v662
      %v664 = vpop.f32.mrf.mxu0
      %v665 = vadd.f32 %v576, %v664
      %666 = vmatmul.bf16.gmra.mxu0 %v380
      %v667 = vpop.f32.mrf.mxu0
      %v668 = vadd.f32 %v579, %v667
      %v669 = vpop.f32.mrf.mxu0
      %v670 = vadd.f32 %v581, %v669
      %671 = vmatmul.bf16.gmra.mxu0 %v382
      %v672 = vpop.f32.mrf.mxu0
      %v673 = vadd.f32 %v584, %v672
      %v674 = vpop.f32.mrf.mxu0
      %v675 = vadd.f32 %v586, %v674
      %676 = vmatmul.bf16.gmra.mxu0 %v384
      %v677 = vpop.f32.mrf.mxu0
      %v678 = vadd.f32 %v589, %v677
      %v679 = vpop.f32.mrf.mxu0
      %v680 = vadd.f32 %v591, %v679
      %681 = vmatmul.bf16.gmra.mxu0 %v386
      %v682 = vpop.f32.mrf.mxu0
      %v683 = vadd.f32 %v594, %v682
      %v684 = vpop.f32.mrf.mxu0
      %v685 = vadd.f32 %v596, %v684
      %686 = vmatmul.bf16.gmra.mxu0 %v388
      %v687 = vpop.f32.mrf.mxu0
      %v688 = vadd.f32 %v599, %v687
      %v689 = vpop.f32.mrf.mxu0
      %v690 = vadd.f32 %v601, %v689
      %691 = vmatmul.bf16.gmra.mxu0 %v390
      %v692 = vpop.f32.mrf.mxu0
      %v693 = vadd.f32 %v604, %v692
      %v694 = vpop.f32.mrf.mxu0
      %v695 = vadd.f32 %v606, %v694
      %696 = vdwg.mxu0
      %v697 = vpack.c.bf16 %v618, %v618
      %v698 = vpack.c.bf16 %v620, %v620
      %v699 = vpack.c.bf16 %v623, %v623
      %v700 = vpack.c.bf16 %v625, %v625
      %v701 = vpack.c.bf16 %v628, %v628
      %v702 = vpack.c.bf16 %v630, %v630
      %v703 = vpack.c.bf16 %v633, %v633
      %v704 = vpack.c.bf16 %v635, %v635
      %v705 = vpack.c.bf16 %v638, %v638
      %v706 = vpack.c.bf16 %v640, %v640
      %v707 = vpack.c.bf16 %v643, %v643
      %v708 = vpack.c.bf16 %v645, %v645
      %v709 = vpack.c.bf16 %v648, %v648
      %v710 = vpack.c.bf16 %v650, %v650
      %v711 = vpack.c.bf16 %v653, %v653
      %v712 = vpack.c.bf16 %v655, %v655
      %v713 = vpack.c.bf16 %v658, %v658
      %v714 = vpack.c.bf16 %v660, %v660
      %v715 = vpack.c.bf16 %v663, %v663
      %v716 = vpack.c.bf16 %v665, %v665
      %v717 = vpack.c.bf16 %v668, %v668
      %v718 = vpack.c.bf16 %v670, %v670
      %v719 = vpack.c.bf16 %v673, %v673
      %v720 = vpack.c.bf16 %v675, %v675
      %v721 = vpack.c.bf16 %v678, %v678
      %v722 = vpack.c.bf16 %v680, %v680
      %v723 = vpack.c.bf16 %v683, %v683
      %v724 = vpack.c.bf16 %v685, %v685
      %v725 = vpack.c.bf16 %v688, %v688
      %v726 = vpack.c.bf16 %v690, %v690
      %v727 = vpack.c.bf16 %v693, %v693
      %v728 = vpack.c.bf16 %v695, %v695
      %vm729 = vcmask 60416
      %730 = vst.msk [vmem:[%s197] sm:$0xf] %vm729, %v697
      %731 = vst.msk [vmem:[%s197 + $0x4] sm:$0xf] %vm729, %v698
      %732 = vst.msk [vmem:[%s197 + $0x8] sm:$0xf] %vm729, %v699
      %733 = vst.msk [vmem:[%s197 + $0xc] sm:$0xf] %vm729, %v700
      %734 = vst.msk [vmem:[%s197 + $0x10] sm:$0xf] %vm729, %v701
      %735 = vst.msk [vmem:[%s197 + $0x14] sm:$0xf] %vm729, %v702
      %736 = vst.msk [vmem:[%s197 + $0x18] sm:$0xf] %vm729, %v703
      %737 = vst.msk [vmem:[%s197 + $0x1c] sm:$0xf] %vm729, %v704
      %738 = vst.msk [vmem:[%s197 + $0x20] sm:$0xf] %vm729, %v705
      %739 = vst.msk [vmem:[%s197 + $0x24] sm:$0xf] %vm729, %v706
      %740 = vst.msk [vmem:[%s197 + $0x28] sm:$0xf] %vm729, %v707
      %741 = vst.msk [vmem:[%s197 + $0x2c] sm:$0xf] %vm729, %v708
      %742 = vst.msk [vmem:[%s197 + $0x30] sm:$0xf] %vm729, %v709
      %743 = vst.msk [vmem:[%s197 + $0x34] sm:$0xf] %vm729, %v710
      %744 = vst.msk [vmem:[%s197 + $0x38] sm:$0xf] %vm729, %v711
      %745 = vst.msk [vmem:[%s197 + $0x3c] sm:$0xf] %vm729, %v712
      %746 = vst.msk [vmem:[%s197 + $0x40] sm:$0xf] %vm729, %v713
      %747 = vst.msk [vmem:[%s197 + $0x44] sm:$0xf] %vm729, %v714
      %748 = vst.msk [vmem:[%s197 + $0x48] sm:$0xf] %vm729, %v715
      %749 = vst.msk [vmem:[%s197 + $0x4c] sm:$0xf] %vm729, %v716
      %750 = vst.msk [vmem:[%s197 + $0x50] sm:$0xf] %vm729, %v717
      %751 = vst.msk [vmem:[%s197 + $0x54] sm:$0xf] %vm729, %v718
      %752 = vst.msk [vmem:[%s197 + $0x58] sm:$0xf] %vm729, %v719
      %753 = vst.msk [vmem:[%s197 + $0x5c] sm:$0xf] %vm729, %v720
      %754 = vst.msk [vmem:[%s197 + $0x60] sm:$0xf] %vm729, %v721
      %755 = vst.msk [vmem:[%s197 + $0x64] sm:$0xf] %vm729, %v722
      %756 = vst.msk [vmem:[%s197 + $0x68] sm:$0xf] %vm729, %v723
      %757 = vst.msk [vmem:[%s197 + $0x6c] sm:$0xf] %vm729, %v724
      %758 = vst.msk [vmem:[%s197 + $0x70] sm:$0xf] %vm729, %v725
      %759 = vst.msk [vmem:[%s197 + $0x74] sm:$0xf] %vm729, %v726
      %760 = vst.msk [vmem:[%s197 + $0x78] sm:$0xf] %vm729, %v727
      %761 = vst.msk [vmem:[%s197 + $0x7c] sm:$0xf] %vm729, %v728
      %p762 = scmp.eq.s32.totalorder %s16, 0
      // Predicated region
      $region29: #{resnet_generator_forward.19} parent=27 // pred_check
        %p763 = pneg %p762
      $region30: #{resnet_generator_forward.19} parent=27 // pred_check_branch
        %765 = sbr.rel (%p763) target = $region32
      $region31: #{resnet_generator_forward.19} parent=27 // pred_region
        %vm766 = vcmask 57344
        %767 = vst.msk [vmem:[%s3] sm:$0x1] %vm766, 0.0
        %768 = vst.msk [vmem:[%s4] sm:$0x1] %vm766, 0.0
      $region32: #{resnet_generator_forward.19} parent=27 // pred_fallthru
        _
      %v769 = vld [vmem:[%s3] sm:$0x1]
      %vm770 = vcmask 64512
      %v771 = vsel %vm770, %v618, 0.0
      %v772 = vsel %vm770, %v620, 0.0
      %v773 = vadd.f32 %v771, %v772
      %v774 = vsel %vm770, %v623, 0.0
      %v775 = vadd.f32 %v773, %v774
      %v776 = vsel %vm770, %v625, 0.0
      %v777 = vadd.f32 %v775, %v776
      %v778 = vsel %vm770, %v628, 0.0
      %v779 = vadd.f32 %v777, %v778
      %v780 = vsel %vm770, %v630, 0.0
      %v781 = vadd.f32 %v779, %v780
      %v782 = vsel %vm770, %v633, 0.0
      %v783 = vadd.f32 %v781, %v782
      %v784 = vsel %vm770, %v635, 0.0
      %v785 = vadd.f32 %v783, %v784
      %v786 = vsel %vm770, %v638, 0.0
      %v787 = vadd.f32 %v785, %v786
      %v788 = vsel %vm770, %v640, 0.0
      %v789 = vadd.f32 %v787, %v788
      %v790 = vsel %vm770, %v643, 0.0
      %v791 = vadd.f32 %v789, %v790
      %v792 = vsel %vm770, %v645, 0.0
      %v793 = vadd.f32 %v791, %v792
      %v794 = vsel %vm770, %v648, 0.0
      %v795 = vadd.f32 %v793, %v794
      %v796 = vsel %vm770, %v650, 0.0
      %v797 = vadd.f32 %v795, %v796
      %v798 = vsel %vm770, %v653, 0.0
      %v799 = vadd.f32 %v797, %v798
      %v800 = vsel %vm770, %v655, 0.0
      %v801 = vadd.f32 %v799, %v800
      %v802 = vsel %vm770, %v658, 0.0
      %v803 = vadd.f32 %v801, %v802
      %v804 = vsel %vm770, %v660, 0.0
      %v805 = vadd.f32 %v803, %v804
      %v806 = vsel %vm770, %v663, 0.0
      %v807 = vadd.f32 %v805, %v806
      %v808 = vsel %vm770, %v665, 0.0
      %v809 = vadd.f32 %v807, %v808
      %v810 = vsel %vm770, %v668, 0.0
      %v811 = vadd.f32 %v809, %v810
      %v812 = vsel %vm770, %v670, 0.0
      %v813 = vadd.f32 %v811, %v812
      %v814 = vsel %vm770, %v673, 0.0
      %v815 = vadd.f32 %v813, %v814
      %v816 = vsel %vm770, %v675, 0.0
      %v817 = vadd.f32 %v815, %v816
      %v818 = vsel %vm770, %v678, 0.0
      %v819 = vadd.f32 %v817, %v818
      %v820 = vsel %vm770, %v680, 0.0
      %v821 = vadd.f32 %v819, %v820
      %v822 = vsel %vm770, %v683, 0.0
      %v823 = vadd.f32 %v821, %v822
      %v824 = vsel %vm770, %v685, 0.0
      %v825 = vadd.f32 %v823, %v824
      %v826 = vsel %vm770, %v688, 0.0
      %v827 = vadd.f32 %v825, %v826
      %v828 = vsel %vm770, %v690, 0.0
      %v829 = vadd.f32 %v827, %v828
      %v830 = vsel %vm770, %v693, 0.0
      %v831 = vadd.f32 %v829, %v830
      %v832 = vsel %vm770, %v695, 0.0
      %v833 = vadd.f32 %v831, %v832
      %v834 = vrot.slane %v833, 4
      %v835 = vadd.f32 %v833, %v834
      %v836 = vrot.slane %v835, 2
      %v837 = vadd.f32 %v835, %v836
      %v838 = vrot.slane %v837, 1
      %v839 = vadd.f32 %v837, %v838
      %v840 = vadd.f32 %v769, %v839
      %vm841 = vcmask 57344
      %842 = vst.msk [vmem:[%s3] sm:$0x1] %vm841, %v840
      %v843 = vld [vmem:[%s4] sm:$0x1]
      %v844 = vmul.f32 %v618, %v618
      %v845 = vmul.f32 %v620, %v620
      %v846 = vmul.f32 %v623, %v623
      %v847 = vmul.f32 %v625, %v625
      %v848 = vmul.f32 %v628, %v628
      %v849 = vmul.f32 %v630, %v630
      %v850 = vmul.f32 %v633, %v633
      %v851 = vmul.f32 %v635, %v635
      %v852 = vmul.f32 %v638, %v638
      %v853 = vmul.f32 %v640, %v640
      %v854 = vmul.f32 %v643, %v643
      %v855 = vmul.f32 %v645, %v645
      %v856 = vmul.f32 %v648, %v648
      %v857 = vmul.f32 %v650, %v650
      %v858 = vmul.f32 %v653, %v653
      %v859 = vmul.f32 %v655, %v655
      %v860 = vmul.f32 %v658, %v658
      %v861 = vmul.f32 %v660, %v660
      %v862 = vmul.f32 %v663, %v663
      %v863 = vmul.f32 %v665, %v665
      %v864 = vmul.f32 %v668, %v668
      %v865 = vmul.f32 %v670, %v670
      %v866 = vmul.f32 %v673, %v673
      %v867 = vmul.f32 %v675, %v675
      %v868 = vmul.f32 %v678, %v678
      %v869 = vmul.f32 %v680, %v680
      %v870 = vmul.f32 %v683, %v683
      %v871 = vmul.f32 %v685, %v685
      %v872 = vmul.f32 %v688, %v688
      %v873 = vmul.f32 %v690, %v690
      %v874 = vmul.f32 %v693, %v693
      %v875 = vmul.f32 %v695, %v695
      %v876 = vsel %vm770, %v844, 0.0
      %v877 = vsel %vm770, %v845, 0.0
      %v878 = vadd.f32 %v876, %v877
      %v879 = vsel %vm770, %v846, 0.0
      %v880 = vadd.f32 %v878, %v879
      %v881 = vsel %vm770, %v847, 0.0
      %v882 = vadd.f32 %v880, %v881
      %v883 = vsel %vm770, %v848, 0.0
      %v884 = vadd.f32 %v882, %v883
      %v885 = vsel %vm770, %v849, 0.0
      %v886 = vadd.f32 %v884, %v885
      %v887 = vsel %vm770, %v850, 0.0
      %v888 = vadd.f32 %v886, %v887
      %v889 = vsel %vm770, %v851, 0.0
      %v890 = vadd.f32 %v888, %v889
      %v891 = vsel %vm770, %v852, 0.0
      %v892 = vadd.f32 %v890, %v891
      %v893 = vsel %vm770, %v853, 0.0
      %v894 = vadd.f32 %v892, %v893
      %v895 = vsel %vm770, %v854, 0.0
      %v896 = vadd.f32 %v894, %v895
      %v897 = vsel %vm770, %v855, 0.0
      %v898 = vadd.f32 %v896, %v897
      %v899 = vsel %vm770, %v856, 0.0
      %v900 = vadd.f32 %v898, %v899
      %v901 = vsel %vm770, %v857, 0.0
      %v902 = vadd.f32 %v900, %v901
      %v903 = vsel %vm770, %v858, 0.0
      %v904 = vadd.f32 %v902, %v903
      %v905 = vsel %vm770, %v859, 0.0
      %v906 = vadd.f32 %v904, %v905
      %v907 = vsel %vm770, %v860, 0.0
      %v908 = vadd.f32 %v906, %v907
      %v909 = vsel %vm770, %v861, 0.0
      %v910 = vadd.f32 %v908, %v909
      %v911 = vsel %vm770, %v862, 0.0
      %v912 = vadd.f32 %v910, %v911
      %v913 = vsel %vm770, %v863, 0.0
      %v914 = vadd.f32 %v912, %v913
      %v915 = vsel %vm770, %v864, 0.0
      %v916 = vadd.f32 %v914, %v915
      %v917 = vsel %vm770, %v865, 0.0
      %v918 = vadd.f32 %v916, %v917
      %v919 = vsel %vm770, %v866, 0.0
      %v920 = vadd.f32 %v918, %v919
      %v921 = vsel %vm770, %v867, 0.0
      %v922 = vadd.f32 %v920, %v921
      %v923 = vsel %vm770, %v868, 0.0
      %v924 = vadd.f32 %v922, %v923
      %v925 = vsel %vm770, %v869, 0.0
      %v926 = vadd.f32 %v924, %v925
      %v927 = vsel %vm770, %v870, 0.0
      %v928 = vadd.f32 %v926, %v927
      %v929 = vsel %vm770, %v871, 0.0
      %v930 = vadd.f32 %v928, %v929
      %v931 = vsel %vm770, %v872, 0.0
      %v932 = vadd.f32 %v930, %v931
      %v933 = vsel %vm770, %v873, 0.0
      %v934 = vadd.f32 %v932, %v933
      %v935 = vsel %vm770, %v874, 0.0
      %v936 = vadd.f32 %v934, %v935
      %v937 = vsel %vm770, %v875, 0.0
      %v938 = vadd.f32 %v936, %v937
      %v939 = vrot.slane %v938, 4
      %v940 = vadd.f32 %v938, %v939
      %v941 = vrot.slane %v940, 2
      %v942 = vadd.f32 %v940, %v941
      %v943 = vrot.slane %v942, 1
      %v944 = vadd.f32 %v942, %v943
      %v945 = vadd.f32 %v843, %v944
      %946 = vst.msk [vmem:[%s4] sm:$0x1] %vm841, %v945
      %s947 = smul.u32 32, %s16
      %p948 = scmp.lt.s32.totalorder %s947, 63
      %s949 = scalar_select %p948, %s947, 63
      %s950 = smul.addr %s949, 4
      %s951 = scalar_lea.vmem %s2, %s950
      // Predicated region
      $region33: #{resnet_generator_forward.19} parent=27 // pred_check
        %p952 = pneg %p81
      $region34: #{resnet_generator_forward.19} parent=27 // pred_check_branch
        %954 = sbr.rel (%p952) target = $region36
      $region35: #{resnet_generator_forward.19} parent=27 // pred_region
        %s955 = smul.u32 32, %s16
      $region36: #{resnet_generator_forward.19} parent=27 // pred_fallthru
        _
      // Predicated region
      $region37: #{resnet_generator_forward.19} parent=27 // pred_check
        %p956 = pneg %p102
      $region38: #{resnet_generator_forward.19} parent=27 // pred_check_branch
        %958 = sbr.rel (%p956) target = $region40
      $region39: #{resnet_generator_forward.19} parent=27 // pred_region
        _
      $region40: #{resnet_generator_forward.19} parent=27 // pred_fallthru
        _
      // Predicated region
      $region41: #{resnet_generator_forward.19} parent=27 // pred_check
        %p959 = pneg %p123
      $region42: #{resnet_generator_forward.19} parent=27 // pred_check_branch
        %961 = sbr.rel (%p959) target = $region44
      $region43: #{resnet_generator_forward.19} parent=27 // pred_region
        _
      $region44: #{resnet_generator_forward.19} parent=27 // pred_fallthru
        _
      // Predicated region
      $region45: #{resnet_generator_forward.19} parent=27 // pred_check
        %p962 = pneg %p102
      $region46: #{resnet_generator_forward.19} parent=27 // pred_check_branch
        %964 = sbr.rel (%p962) target = $region48
      $region47: #{resnet_generator_forward.19} parent=27 // pred_region
        _
      $region48: #{resnet_generator_forward.19} parent=27 // pred_fallthru
        _
      // Predicated region
      $region49: #{resnet_generator_forward.19} parent=27 // pred_check
        %p965 = pneg %p123
      $region50: #{resnet_generator_forward.19} parent=27 // pred_check_branch
        %967 = sbr.rel (%p965) target = $region52
      $region51: #{resnet_generator_forward.19} parent=27 // pred_region
        _
      $region52: #{resnet_generator_forward.19} parent=27 // pred_fallthru
        _
    $region28: #{resnet_generator_forward.19} parent=5 // pred_fallthru
      _
    %p968 = scmp.le.s32.totalorder 2, %s11
    // Predicated region
    $region53: #{resnet_generator_forward.19} parent=5 // pred_check
      %p969 = pneg %p968
    $region54: #{resnet_generator_forward.19} parent=5 // pred_check_branch
      %971 = sbr.rel (%p969) target = $region56
    $region55: #{resnet_generator_forward.19} parent=5 // pred_region
      %s972 = ssub.s32 %s11, 2
      // Predicated region
      $region57: #{resnet_generator_forward.19} parent=55 // pred_check
        %p973 = pneg %p87
      $region58: #{resnet_generator_forward.19} parent=55 // pred_check_branch
        %975 = sbr.rel (%p973) target = $region60
      $region59: #{resnet_generator_forward.19} parent=55 // pred_region
        %s976 = smul.u32 32, %s17
        %p977 = scmp.lt.s32.totalorder %s976, 63
        %s978 = scalar_select %p977, %s976, 63
        %s979 = smul.addr %s978, 4
        %s980 = scalar_lea.vmem %s2, %s979
      $region60: #{resnet_generator_forward.19} parent=55 // pred_fallthru
        _
    $region56: #{resnet_generator_forward.19} parent=5 // pred_fallthru
      _
  $region6: #{resnet_generator_forward.19} parent=0 // loop_footer
    %s15 = sadd.s32 1, %s11
  $region7: #{resnet_generator_forward.19} parent=0 // loop_footer_branch
    %10 = sbr.rel target = $region3
  $region8: #{resnet_generator_forward.19} parent=0 // loop_exit
    _

// kernel: resnet_generator_forward.21
$region0: #{resnet_generator_forward.21}
  #allocation0 [shape = 'u32[]', space=smem, size = 0x4, offset = 0x4, fixed_abs, tag = 'smem constant byte address 0x4 - core index']
  #allocation1 [shape = 'u32[72,128]{1,0:T(1,128)}', space=vmem, size = 0x9000, scoped, tag = 'internal scratch']
  %s0 = inlined_call_operand.vmem [shape: bf16[128,128], index: 0, kind: input, shape index: {}]
  %s1 = inlined_call_operand.vmem [shape: bf16[128,16], index: 1, kind: input, shape index: {}]
  %s2 = inlined_call_operand.vmem [shape: bf16[128,16], index: 2, kind: output, shape index: {0}]
  %s3 = inlined_call_operand.vmem [shape: f32[1,16], index: 3, kind: output, shape index: {1}]
  %s4 = inlined_call_operand.vmem [shape: f32[1,16], index: 4, kind: output, shape index: {2}]
  %5 = xla_tuple %s2, %s3, %s4
  %s6 = sld [smem:[#allocation0]]
  $region38: #{resnet_generator_forward.21} parent=0
    _
  %s8 = ssub.s32 1, %s6
  %s9 = scalar_select 0, %s8, %s6
  // Predicated region
  $region2: #{resnet_generator_forward.21} parent=0 // pred_check
    _
  $region3: #{resnet_generator_forward.21} parent=0 // pred_check_branch
    %11 = sbr.rel (0) target = $region5
  $region4: #{resnet_generator_forward.21} parent=0 // pred_region
    _
  $region5: #{resnet_generator_forward.21} parent=0 // pred_fallthru
    _
  // Predicated region
  $region6: #{resnet_generator_forward.21} parent=0 // pred_check
    _
  $region7: #{resnet_generator_forward.21} parent=0 // pred_check_branch
    %13 = sbr.rel (0) target = $region9
  $region8: #{resnet_generator_forward.21} parent=0 // pred_region
    _
  $region9: #{resnet_generator_forward.21} parent=0 // pred_fallthru
    _
  %v14 = vld [vmem:[%s0] sm:$0xf]
  %v15 = vld [vmem:[%s0 + $0x4] sm:$0xf]
  %v16 = vld [vmem:[%s0 + $0x8] sm:$0xf]
  %v17 = vld [vmem:[%s0 + $0xc] sm:$0xf]
  %v18 = vld [vmem:[%s0 + $0x10] sm:$0xf]
  %v19 = vld [vmem:[%s0 + $0x14] sm:$0xf]
  %v20 = vld [vmem:[%s0 + $0x18] sm:$0xf]
  %v21 = vld [vmem:[%s0 + $0x1c] sm:$0xf]
  %v22 = vld [vmem:[%s0 + $0x20] sm:$0xf]
  %v23 = vld [vmem:[%s0 + $0x24] sm:$0xf]
  %v24 = vld [vmem:[%s0 + $0x28] sm:$0xf]
  %v25 = vld [vmem:[%s0 + $0x2c] sm:$0xf]
  %v26 = vld [vmem:[%s0 + $0x30] sm:$0xf]
  %v27 = vld [vmem:[%s0 + $0x34] sm:$0xf]
  %v28 = vld [vmem:[%s0 + $0x38] sm:$0xf]
  %v29 = vld [vmem:[%s0 + $0x3c] sm:$0xf]
  %v30 = vld [vmem:[%s1] sm:$0xf]
  %v31 = vld [vmem:[%s1 + $0x4] sm:$0xf]
  %v32 = vld [vmem:[%s1 + $0x8] sm:$0xf]
  %v33 = vld [vmem:[%s1 + $0xc] sm:$0xf]
  %v34 = vld [vmem:[%s1 + $0x10] sm:$0xf]
  %v35 = vld [vmem:[%s1 + $0x14] sm:$0xf]
  %v36 = vld [vmem:[%s1 + $0x18] sm:$0xf]
  %v37 = vld [vmem:[%s1 + $0x1c] sm:$0xf]
  %v38 = vld [vmem:[%s1 + $0x20] sm:$0xf]
  %v39 = vld [vmem:[%s1 + $0x24] sm:$0xf]
  %v40 = vld [vmem:[%s1 + $0x28] sm:$0xf]
  %v41 = vld [vmem:[%s1 + $0x2c] sm:$0xf]
  %v42 = vld [vmem:[%s1 + $0x30] sm:$0xf]
  %v43 = vld [vmem:[%s1 + $0x34] sm:$0xf]
  %v44 = vld [vmem:[%s1 + $0x38] sm:$0xf]
  %v45 = vld [vmem:[%s1 + $0x3c] sm:$0xf]
  %v62 = vunpack.c.l.b16 %v14
  %v63 = vunpack.c.l.b16 %v15
  %v64 = vunpack.c.l.b16 %v16
  %v65 = vunpack.c.l.b16 %v17
  %v66 = vunpack.c.l.b16 %v18
  %v67 = vunpack.c.l.b16 %v19
  %v68 = vunpack.c.l.b16 %v20
  %v69 = vunpack.c.l.b16 %v21
  %v70 = vunpack.c.l.b16 %v22
  %v71 = vunpack.c.l.b16 %v23
  %v72 = vunpack.c.l.b16 %v24
  %v73 = vunpack.c.l.b16 %v25
  %v74 = vunpack.c.l.b16 %v26
  %v75 = vunpack.c.l.b16 %v27
  %v76 = vunpack.c.l.b16 %v28
  %v77 = vunpack.c.l.b16 %v29
  %v78 = vpack.c.b16 %v63, %v62
  %v79 = vpack.c.b16 %v65, %v64
  %v80 = vpack.c.b16 %v67, %v66
  %v81 = vpack.c.b16 %v69, %v68
  %v82 = vpack.c.b16 %v71, %v70
  %v83 = vpack.c.b16 %v73, %v72
  %v84 = vpack.c.b16 %v75, %v74
  %v85 = vpack.c.b16 %v77, %v76
  %v110 = vunpack.c.l.b16 %v30
  %v111 = vunpack.c.l.b16 %v31
  %v112 = vunpack.c.l.b16 %v32
  %v113 = vunpack.c.l.b16 %v33
  %v114 = vunpack.c.l.b16 %v34
  %v115 = vunpack.c.l.b16 %v35
  %v116 = vunpack.c.l.b16 %v36
  %v117 = vunpack.c.l.b16 %v37
  %v118 = vunpack.c.l.b16 %v38
  %v119 = vunpack.c.l.b16 %v39
  %v120 = vunpack.c.l.b16 %v40
  %v121 = vunpack.c.l.b16 %v41
  %v122 = vunpack.c.l.b16 %v42
  %v123 = vunpack.c.l.b16 %v43
  %v124 = vunpack.c.l.b16 %v44
  %v125 = vunpack.c.l.b16 %v45
  %v126 = vpack.c.b16 %v111, %v110
  %v127 = vpack.c.b16 %v113, %v112
  %v128 = vpack.c.b16 %v115, %v114
  %v129 = vpack.c.b16 %v117, %v116
  %v130 = vpack.c.b16 %v119, %v118
  %v131 = vpack.c.b16 %v121, %v120
  %v132 = vpack.c.b16 %v123, %v122
  %v133 = vpack.c.b16 %v125, %v124
  %142 = vmatpush.bf16.msra.mxu0 %v133
  %143 = vmatpush.bf16.msra.mxu0 %v132
  %144 = vmatpush.bf16.msra.mxu0 %v131
  %145 = vmatpush.bf16.msra.mxu0 %v130
  %146 = vmatpush.bf16.msra.mxu0 %v129
  %147 = vmatpush.bf16.msra.mxu0 %v128
  %148 = vmatpush.bf16.msra.mxu0 %v127
  %149 = vmatpush.bf16.msra.mxu0 %v126
  %150 = vmatmul.bf16.gmra.mxu0 %v78
  %v151 = vpop.f32.mrf.mxu0
  %v152 = vadd.f32 0.0, %v151
  %v153 = vpop.f32.mrf.mxu0
  %v154 = vadd.f32 0.0, %v153
  %155 = vmatmul.bf16.gmra.mxu0 %v79
  %v156 = vpop.f32.mrf.mxu0
  %v157 = vadd.f32 0.0, %v156
  %v158 = vpop.f32.mrf.mxu0
  %v159 = vadd.f32 0.0, %v158
  %160 = vmatmul.bf16.gmra.mxu0 %v80
  %v161 = vpop.f32.mrf.mxu0
  %v162 = vadd.f32 0.0, %v161
  %v163 = vpop.f32.mrf.mxu0
  %v164 = vadd.f32 0.0, %v163
  %165 = vmatmul.bf16.gmra.mxu0 %v81
  %v166 = vpop.f32.mrf.mxu0
  %v167 = vadd.f32 0.0, %v166
  %v168 = vpop.f32.mrf.mxu0
  %v169 = vadd.f32 0.0, %v168
  %170 = vmatmul.bf16.gmra.mxu0 %v82
  %v171 = vpop.f32.mrf.mxu0
  %v172 = vadd.f32 0.0, %v171
  %v173 = vpop.f32.mrf.mxu0
  %v174 = vadd.f32 0.0, %v173
  %175 = vmatmul.bf16.gmra.mxu0 %v83
  %v176 = vpop.f32.mrf.mxu0
  %v177 = vadd.f32 0.0, %v176
  %v178 = vpop.f32.mrf.mxu0
  %v179 = vadd.f32 0.0, %v178
  %180 = vmatmul.bf16.gmra.mxu0 %v84
  %v181 = vpop.f32.mrf.mxu0
  %v182 = vadd.f32 0.0, %v181
  %v183 = vpop.f32.mrf.mxu0
  %v184 = vadd.f32 0.0, %v183
  %185 = vmatmul.bf16.gmra.mxu0 %v85
  %v186 = vpop.f32.mrf.mxu0
  %v187 = vadd.f32 0.0, %v186
  %v188 = vpop.f32.mrf.mxu0
  %v189 = vadd.f32 0.0, %v188
  %190 = vdwg.mxu0
  %v191 = vpack.c.bf16 %v152, %v152
  %v192 = vpack.c.bf16 %v154, %v154
  %v193 = vpack.c.bf16 %v157, %v157
  %v194 = vpack.c.bf16 %v159, %v159
  %v195 = vpack.c.bf16 %v162, %v162
  %v196 = vpack.c.bf16 %v164, %v164
  %v197 = vpack.c.bf16 %v167, %v167
  %v198 = vpack.c.bf16 %v169, %v169
  %v199 = vpack.c.bf16 %v172, %v172
  %v200 = vpack.c.bf16 %v174, %v174
  %v201 = vpack.c.bf16 %v177, %v177
  %v202 = vpack.c.bf16 %v179, %v179
  %v203 = vpack.c.bf16 %v182, %v182
  %v204 = vpack.c.bf16 %v184, %v184
  %v205 = vpack.c.bf16 %v187, %v187
  %v206 = vpack.c.bf16 %v189, %v189
  %vm207 = vcmask 125952
  %208 = vst.msk [vmem:[%s2] sm:$0xf] %vm207, %v191
  %209 = vst.msk [vmem:[%s2 + $0x4] sm:$0xf] %vm207, %v192
  %210 = vst.msk [vmem:[%s2 + $0x8] sm:$0xf] %vm207, %v193
  %211 = vst.msk [vmem:[%s2 + $0xc] sm:$0xf] %vm207, %v194
  %212 = vst.msk [vmem:[%s2 + $0x10] sm:$0xf] %vm207, %v195
  %213 = vst.msk [vmem:[%s2 + $0x14] sm:$0xf] %vm207, %v196
  %214 = vst.msk [vmem:[%s2 + $0x18] sm:$0xf] %vm207, %v197
  %215 = vst.msk [vmem:[%s2 + $0x1c] sm:$0xf] %vm207, %v198
  %216 = vst.msk [vmem:[%s2 + $0x20] sm:$0xf] %vm207, %v199
  %217 = vst.msk [vmem:[%s2 + $0x24] sm:$0xf] %vm207, %v200
  %218 = vst.msk [vmem:[%s2 + $0x28] sm:$0xf] %vm207, %v201
  %219 = vst.msk [vmem:[%s2 + $0x2c] sm:$0xf] %vm207, %v202
  %220 = vst.msk [vmem:[%s2 + $0x30] sm:$0xf] %vm207, %v203
  %221 = vst.msk [vmem:[%s2 + $0x34] sm:$0xf] %vm207, %v204
  %222 = vst.msk [vmem:[%s2 + $0x38] sm:$0xf] %vm207, %v205
  %223 = vst.msk [vmem:[%s2 + $0x3c] sm:$0xf] %vm207, %v206
  %p224 = scmp.eq.s32.totalorder 0, 0
  // Predicated region
  $region10: #{resnet_generator_forward.21} parent=0 // pred_check
    %p225 = pneg %p224
  $region11: #{resnet_generator_forward.21} parent=0 // pred_check_branch
    %227 = sbr.rel (%p225) target = $region13
  $region12: #{resnet_generator_forward.21} parent=0 // pred_region
    %vm228 = vcmask 122880
    %229 = vst.msk [vmem:[%s3] sm:$0x1] %vm228, 0.0
    %230 = vst.msk [vmem:[%s4] sm:$0x1] %vm228, 0.0
  $region13: #{resnet_generator_forward.21} parent=0 // pred_fallthru
    _
  %v231 = vld [vmem:[%s3] sm:$0x1]
  %vm232 = vcmask 130048
  %v233 = vsel %vm232, %v152, 0.0
  %v234 = vsel %vm232, %v154, 0.0
  %v235 = vadd.f32 %v233, %v234
  %v236 = vsel %vm232, %v157, 0.0
  %v237 = vadd.f32 %v235, %v236
  %v238 = vsel %vm232, %v159, 0.0
  %v239 = vadd.f32 %v237, %v238
  %v240 = vsel %vm232, %v162, 0.0
  %v241 = vadd.f32 %v239, %v240
  %v242 = vsel %vm232, %v164, 0.0
  %v243 = vadd.f32 %v241, %v242
  %v244 = vsel %vm232, %v167, 0.0
  %v245 = vadd.f32 %v243, %v244
  %v246 = vsel %vm232, %v169, 0.0
  %v247 = vadd.f32 %v245, %v246
  %v248 = vsel %vm232, %v172, 0.0
  %v249 = vadd.f32 %v247, %v248
  %v250 = vsel %vm232, %v174, 0.0
  %v251 = vadd.f32 %v249, %v250
  %v252 = vsel %vm232, %v177, 0.0
  %v253 = vadd.f32 %v251, %v252
  %v254 = vsel %vm232, %v179, 0.0
  %v255 = vadd.f32 %v253, %v254
  %v256 = vsel %vm232, %v182, 0.0
  %v257 = vadd.f32 %v255, %v256
  %v258 = vsel %vm232, %v184, 0.0
  %v259 = vadd.f32 %v257, %v258
  %v260 = vsel %vm232, %v187, 0.0
  %v261 = vadd.f32 %v259, %v260
  %v262 = vsel %vm232, %v189, 0.0
  %v263 = vadd.f32 %v261, %v262
  %v264 = vrot.slane %v263, 4
  %v265 = vadd.f32 %v263, %v264
  %v266 = vrot.slane %v265, 2
  %v267 = vadd.f32 %v265, %v266
  %v268 = vrot.slane %v267, 1
  %v269 = vadd.f32 %v267, %v268
  %v270 = vadd.f32 %v231, %v269
  %vm271 = vcmask 122880
  %272 = vst.msk [vmem:[%s3] sm:$0x1] %vm271, %v270
  %v273 = vld [vmem:[%s4] sm:$0x1]
  %v274 = vmul.f32 %v152, %v152
  %v275 = vmul.f32 %v154, %v154
  %v276 = vmul.f32 %v157, %v157
  %v277 = vmul.f32 %v159, %v159
  %v278 = vmul.f32 %v162, %v162
  %v279 = vmul.f32 %v164, %v164
  %v280 = vmul.f32 %v167, %v167
  %v281 = vmul.f32 %v169, %v169
  %v282 = vmul.f32 %v172, %v172
  %v283 = vmul.f32 %v174, %v174
  %v284 = vmul.f32 %v177, %v177
  %v285 = vmul.f32 %v179, %v179
  %v286 = vmul.f32 %v182, %v182
  %v287 = vmul.f32 %v184, %v184
  %v288 = vmul.f32 %v187, %v187
  %v289 = vmul.f32 %v189, %v189
  %v290 = vsel %vm232, %v274, 0.0
  %v291 = vsel %vm232, %v275, 0.0
  %v292 = vadd.f32 %v290, %v291
  %v293 = vsel %vm232, %v276, 0.0
  %v294 = vadd.f32 %v292, %v293
  %v295 = vsel %vm232, %v277, 0.0
  %v296 = vadd.f32 %v294, %v295
  %v297 = vsel %vm232, %v278, 0.0
  %v298 = vadd.f32 %v296, %v297
  %v299 = vsel %vm232, %v279, 0.0
  %v300 = vadd.f32 %v298, %v299
  %v301 = vsel %vm232, %v280, 0.0
  %v302 = vadd.f32 %v300, %v301
  %v303 = vsel %vm232, %v281, 0.0
  %v304 = vadd.f32 %v302, %v303
  %v305 = vsel %vm232, %v282, 0.0
  %v306 = vadd.f32 %v304, %v305
  %v307 = vsel %vm232, %v283, 0.0
  %v308 = vadd.f32 %v306, %v307
  %v309 = vsel %vm232, %v284, 0.0
  %v310 = vadd.f32 %v308, %v309
  %v311 = vsel %vm232, %v285, 0.0
  %v312 = vadd.f32 %v310, %v311
  %v313 = vsel %vm232, %v286, 0.0
  %v314 = vadd.f32 %v312, %v313
  %v315 = vsel %vm232, %v287, 0.0
  %v316 = vadd.f32 %v314, %v315
  %v317 = vsel %vm232, %v288, 0.0
  %v318 = vadd.f32 %v316, %v317
  %v319 = vsel %vm232, %v289, 0.0
  %v320 = vadd.f32 %v318, %v319
  %v321 = vrot.slane %v320, 4
  %v322 = vadd.f32 %v320, %v321
  %v323 = vrot.slane %v322, 2
  %v324 = vadd.f32 %v322, %v323
  %v325 = vrot.slane %v324, 1
  %v326 = vadd.f32 %v324, %v325
  %v327 = vadd.f32 %v273, %v326
  %328 = vst.msk [vmem:[%s4] sm:$0x1] %vm271, %v327
  // Predicated region
  $region14: #{resnet_generator_forward.21} parent=0 // pred_check
    _
  $region15: #{resnet_generator_forward.21} parent=0 // pred_check_branch
    %330 = sbr.rel (0) target = $region17
  $region16: #{resnet_generator_forward.21} parent=0 // pred_region
    _
  $region17: #{resnet_generator_forward.21} parent=0 // pred_fallthru
    _
  // Predicated region
  $region18: #{resnet_generator_forward.21} parent=0 // pred_check
    _
  $region19: #{resnet_generator_forward.21} parent=0 // pred_check_branch
    %332 = sbr.rel (0) target = $region21
  $region20: #{resnet_generator_forward.21} parent=0 // pred_region
    _
  $region21: #{resnet_generator_forward.21} parent=0 // pred_fallthru
    _
  // Predicated region
  $region22: #{resnet_generator_forward.21} parent=0 // pred_check
    _
  $region23: #{resnet_generator_forward.21} parent=0 // pred_check_branch
    %334 = sbr.rel (0) target = $region25
  $region24: #{resnet_generator_forward.21} parent=0 // pred_region
    _
  $region25: #{resnet_generator_forward.21} parent=0 // pred_fallthru
    _
  // Predicated region
  $region26: #{resnet_generator_forward.21} parent=0 // pred_check
    _
  $region27: #{resnet_generator_forward.21} parent=0 // pred_check_branch
    %336 = sbr.rel (0) target = $region29
  $region28: #{resnet_generator_forward.21} parent=0 // pred_region
    _
  $region29: #{resnet_generator_forward.21} parent=0 // pred_fallthru
    _
  // Predicated region
  $region30: #{resnet_generator_forward.21} parent=0 // pred_check
    _
  $region31: #{resnet_generator_forward.21} parent=0 // pred_check_branch
    %338 = sbr.rel (0) target = $region33
  $region32: #{resnet_generator_forward.21} parent=0 // pred_region
    _
  $region33: #{resnet_generator_forward.21} parent=0 // pred_fallthru
    _
  // Predicated region
  $region34: #{resnet_generator_forward.21} parent=0 // pred_check
    _
  $region35: #{resnet_generator_forward.21} parent=0 // pred_check_branch
    %340 = sbr.rel (0) target = $region37
  $region36: #{resnet_generator_forward.21} parent=0 // pred_region
    _
  $region37: #{resnet_generator_forward.21} parent=0 // pred_fallthru
    _

// kernel: resnet_generator_forward.22
$region0: #{resnet_generator_forward.22}
  #allocation0 [shape = 'u32[]', space=smem, size = 0x4, offset = 0x4, fixed_abs, tag = 'smem constant byte address 0x4 - core index']
  #allocation1 [shape = 'u32[72,128]{1,0:T(1,128)}', space=vmem, size = 0x9000, scoped, tag = 'internal scratch']
  %s0 = inlined_call_operand.vmem [shape: bf16[128,16], index: 0, kind: input, shape index: {}]
  %s1 = inlined_call_operand.vmem [shape: f32[1,16], index: 1, kind: input, shape index: {}]
  %s2 = inlined_call_operand.vmem [shape: f32[1,16], index: 2, kind: input, shape index: {}]
  %s3 = inlined_call_operand.vmem [shape: f32[1,16], index: 3, kind: input, shape index: {}]
  %s4 = inlined_call_operand.vmem [shape: f32[1,16], index: 4, kind: input, shape index: {}]
  %s5 = inlined_call_operand.vmem [shape: bf16[128,16], index: 5, kind: output, shape index: {}]
  %s6 = sld [smem:[#allocation0]]
  $region30: #{resnet_generator_forward.22} parent=0
    _
  %s8 = ssub.s32 1, %s6
  %s9 = scalar_select 0, %s8, %s6
  // Predicated region
  $region2: #{resnet_generator_forward.22} parent=0 // pred_check
    _
  $region3: #{resnet_generator_forward.22} parent=0 // pred_check_branch
    %11 = sbr.rel (0) target = $region5
  $region4: #{resnet_generator_forward.22} parent=0 // pred_region
    _
  $region5: #{resnet_generator_forward.22} parent=0 // pred_fallthru
    _
  // Predicated region
  $region6: #{resnet_generator_forward.22} parent=0 // pred_check
    _
  $region7: #{resnet_generator_forward.22} parent=0 // pred_check_branch
    %13 = sbr.rel (0) target = $region9
  $region8: #{resnet_generator_forward.22} parent=0 // pred_region
    _
  $region9: #{resnet_generator_forward.22} parent=0 // pred_fallthru
    _
  // Predicated region
  $region10: #{resnet_generator_forward.22} parent=0 // pred_check
    _
  $region11: #{resnet_generator_forward.22} parent=0 // pred_check_branch
    %15 = sbr.rel (0) target = $region13
  $region12: #{resnet_generator_forward.22} parent=0 // pred_region
    _
  $region13: #{resnet_generator_forward.22} parent=0 // pred_fallthru
    _
  // Predicated region
  $region14: #{resnet_generator_forward.22} parent=0 // pred_check
    _
  $region15: #{resnet_generator_forward.22} parent=0 // pred_check_branch
    %17 = sbr.rel (0) target = $region17
  $region16: #{resnet_generator_forward.22} parent=0 // pred_region
    _
  $region17: #{resnet_generator_forward.22} parent=0 // pred_fallthru
    _
  // Predicated region
  $region18: #{resnet_generator_forward.22} parent=0 // pred_check
    _
  $region19: #{resnet_generator_forward.22} parent=0 // pred_check_branch
    %19 = sbr.rel (0) target = $region21
  $region20: #{resnet_generator_forward.22} parent=0 // pred_region
    _
  $region21: #{resnet_generator_forward.22} parent=0 // pred_fallthru
    _
  %v20 = vld [vmem:[%s1] sm:$0x1]
  %v21 = vmul.f32 %v20, 0.0078125
  %v22 = vld [vmem:[%s2] sm:$0x1]
  %v23 = vmul.f32 %v22, 0.0078125
  %v24 = vmul.f32 %v21, %v21
  %v25 = vsub.f32 %v23, %v24
  %v26 = vmax.f32 %v25, 0.0
  %v27 = vld [vmem:[%s3] sm:$0x1]
  %v28 = vadd.f32 %v26, 1e-05
  %v29 = vrsqrt.pop %v28
  %v30 = vmul.f32 %v29, %v28
  %v31 = vmul.f32 %v30, %v29
  %v32 = vmul.f32 0.5, %v31
  %v33 = vsub.f32 1.5, %v32
  %v34 = vmul.f32 %v29, %v33
  %vm35 = vweird.f32 %v28
  %vm36 = vweird.f32 %v29
  %vm37 = vmor %vm35, %vm36
  %v38 = vsel %vm37, %v29, %v34
  %v39 = vmul.f32 %v27, %v38
  %v40 = vld [vmem:[%s4] sm:$0x1]
  %v41 = vmul.f32 %v21, %v39
  %v42 = vsub.f32 %v40, %v41
  %v43 = vld [vmem:[%s0] sm:$0xf]
  %v44 = vld [vmem:[%s0 + $0x4] sm:$0xf]
  %v45 = vld [vmem:[%s0 + $0x8] sm:$0xf]
  %v46 = vld [vmem:[%s0 + $0xc] sm:$0xf]
  %v47 = vld [vmem:[%s0 + $0x10] sm:$0xf]
  %v48 = vld [vmem:[%s0 + $0x14] sm:$0xf]
  %v49 = vld [vmem:[%s0 + $0x18] sm:$0xf]
  %v50 = vld [vmem:[%s0 + $0x1c] sm:$0xf]
  %v51 = vld [vmem:[%s0 + $0x20] sm:$0xf]
  %v52 = vld [vmem:[%s0 + $0x24] sm:$0xf]
  %v53 = vld [vmem:[%s0 + $0x28] sm:$0xf]
  %v54 = vld [vmem:[%s0 + $0x2c] sm:$0xf]
  %v55 = vld [vmem:[%s0 + $0x30] sm:$0xf]
  %v56 = vld [vmem:[%s0 + $0x34] sm:$0xf]
  %v57 = vld [vmem:[%s0 + $0x38] sm:$0xf]
  %v58 = vld [vmem:[%s0 + $0x3c] sm:$0xf]
  %v59 = vunpack.c.l.bf16 %v43
  %v60 = vunpack.c.l.bf16 %v44
  %v61 = vunpack.c.l.bf16 %v45
  %v62 = vunpack.c.l.bf16 %v46
  %v63 = vunpack.c.l.bf16 %v47
  %v64 = vunpack.c.l.bf16 %v48
  %v65 = vunpack.c.l.bf16 %v49
  %v66 = vunpack.c.l.bf16 %v50
  %v67 = vunpack.c.l.bf16 %v51
  %v68 = vunpack.c.l.bf16 %v52
  %v69 = vunpack.c.l.bf16 %v53
  %v70 = vunpack.c.l.bf16 %v54
  %v71 = vunpack.c.l.bf16 %v55
  %v72 = vunpack.c.l.bf16 %v56
  %v73 = vunpack.c.l.bf16 %v57
  %v74 = vunpack.c.l.bf16 %v58
  %v76 = vperm.slane %v39, 0
  %v78 = vmul.f32 %v59, %v76
  %v79 = vmul.f32 %v60, %v76
  %v80 = vmul.f32 %v61, %v76
  %v81 = vmul.f32 %v62, %v76
  %v82 = vmul.f32 %v63, %v76
  %v83 = vmul.f32 %v64, %v76
  %v84 = vmul.f32 %v65, %v76
  %v85 = vmul.f32 %v66, %v76
  %v86 = vmul.f32 %v67, %v76
  %v87 = vmul.f32 %v68, %v76
  %v88 = vmul.f32 %v69, %v76
  %v89 = vmul.f32 %v70, %v76
  %v90 = vmul.f32 %v71, %v76
  %v91 = vmul.f32 %v72, %v76
  %v92 = vmul.f32 %v73, %v76
  %v93 = vmul.f32 %v74, %v76
  %v95 = vperm.slane %v42, 0
  %v97 = vadd.f32 %v78, %v95
  %v98 = vadd.f32 %v79, %v95
  %v99 = vadd.f32 %v80, %v95
  %v100 = vadd.f32 %v81, %v95
  %v101 = vadd.f32 %v82, %v95
  %v102 = vadd.f32 %v83, %v95
  %v103 = vadd.f32 %v84, %v95
  %v104 = vadd.f32 %v85, %v95
  %v105 = vadd.f32 %v86, %v95
  %v106 = vadd.f32 %v87, %v95
  %v107 = vadd.f32 %v88, %v95
  %v108 = vadd.f32 %v89, %v95
  %v109 = vadd.f32 %v90, %v95
  %v110 = vadd.f32 %v91, %v95
  %v111 = vadd.f32 %v92, %v95
  %v112 = vadd.f32 %v93, %v95
  %v113 = vmax.f32 %v97, 0.0
  %v114 = vmax.f32 %v98, 0.0
  %v115 = vmax.f32 %v99, 0.0
  %v116 = vmax.f32 %v100, 0.0
  %v117 = vmax.f32 %v101, 0.0
  %v118 = vmax.f32 %v102, 0.0
  %v119 = vmax.f32 %v103, 0.0
  %v120 = vmax.f32 %v104, 0.0
  %v121 = vmax.f32 %v105, 0.0
  %v122 = vmax.f32 %v106, 0.0
  %v123 = vmax.f32 %v107, 0.0
  %v124 = vmax.f32 %v108, 0.0
  %v125 = vmax.f32 %v109, 0.0
  %v126 = vmax.f32 %v110, 0.0
  %v127 = vmax.f32 %v111, 0.0
  %v128 = vmax.f32 %v112, 0.0
  %v129 = vpack.c.bf16 %v113, %v113
  %v130 = vpack.c.bf16 %v114, %v114
  %v131 = vpack.c.bf16 %v115, %v115
  %v132 = vpack.c.bf16 %v116, %v116
  %v133 = vpack.c.bf16 %v117, %v117
  %v134 = vpack.c.bf16 %v118, %v118
  %v135 = vpack.c.bf16 %v119, %v119
  %v136 = vpack.c.bf16 %v120, %v120
  %v137 = vpack.c.bf16 %v121, %v121
  %v138 = vpack.c.bf16 %v122, %v122
  %v139 = vpack.c.bf16 %v123, %v123
  %v140 = vpack.c.bf16 %v124, %v124
  %v141 = vpack.c.bf16 %v125, %v125
  %v142 = vpack.c.bf16 %v126, %v126
  %v143 = vpack.c.bf16 %v127, %v127
  %v144 = vpack.c.bf16 %v128, %v128
  %vm145 = vcmask 125952
  %146 = vst.msk [vmem:[%s5] sm:$0xf] %vm145, %v129
  %147 = vst.msk [vmem:[%s5 + $0x4] sm:$0xf] %vm145, %v130
  %148 = vst.msk [vmem:[%s5 + $0x8] sm:$0xf] %vm145, %v131
  %149 = vst.msk [vmem:[%s5 + $0xc] sm:$0xf] %vm145, %v132
  %150 = vst.msk [vmem:[%s5 + $0x10] sm:$0xf] %vm145, %v133
  %151 = vst.msk [vmem:[%s5 + $0x14] sm:$0xf] %vm145, %v134
  %152 = vst.msk [vmem:[%s5 + $0x18] sm:$0xf] %vm145, %v135
  %153 = vst.msk [vmem:[%s5 + $0x1c] sm:$0xf] %vm145, %v136
  %154 = vst.msk [vmem:[%s5 + $0x20] sm:$0xf] %vm145, %v137
  %155 = vst.msk [vmem:[%s5 + $0x24] sm:$0xf] %vm145, %v138
  %156 = vst.msk [vmem:[%s5 + $0x28] sm:$0xf] %vm145, %v139
  %157 = vst.msk [vmem:[%s5 + $0x2c] sm:$0xf] %vm145, %v140
  %158 = vst.msk [vmem:[%s5 + $0x30] sm:$0xf] %vm145, %v141
  %159 = vst.msk [vmem:[%s5 + $0x34] sm:$0xf] %vm145, %v142
  %160 = vst.msk [vmem:[%s5 + $0x38] sm:$0xf] %vm145, %v143
  %161 = vst.msk [vmem:[%s5 + $0x3c] sm:$0xf] %vm145, %v144
  // Predicated region
  $region22: #{resnet_generator_forward.22} parent=0 // pred_check
    _
  $region23: #{resnet_generator_forward.22} parent=0 // pred_check_branch
    %163 = sbr.rel (0) target = $region25
  $region24: #{resnet_generator_forward.22} parent=0 // pred_region
    _
  $region25: #{resnet_generator_forward.22} parent=0 // pred_fallthru
    _
  // Predicated region
  $region26: #{resnet_generator_forward.22} parent=0 // pred_check
    _
  $region27: #{resnet_generator_forward.22} parent=0 // pred_check_branch
    %165 = sbr.rel (0) target = $region29
  $region28: #{resnet_generator_forward.22} parent=0 // pred_region
    _
  $region29: #{resnet_generator_forward.22} parent=0 // pred_fallthru
    _

// kernel: resnet_generator_forward.24
$region0: #{resnet_generator_forward.24}
  #allocation0 [shape = 'u32[]', space=smem, size = 0x4, offset = 0x4, fixed_abs, tag = 'smem constant byte address 0x4 - core index']
  #allocation1 [shape = 'u32[72,128]{1,0:T(1,128)}', space=vmem, size = 0x9000, scoped, tag = 'internal scratch']
  %s0 = inlined_call_operand.vmem [shape: bf16[32,32], index: 0, kind: input, shape index: {}]
  %s1 = inlined_call_operand.vmem [shape: f32[1,32], index: 1, kind: input, shape index: {}]
  %s2 = inlined_call_operand.vmem [shape: f32[1,32], index: 2, kind: input, shape index: {}]
  %s3 = inlined_call_operand.vmem [shape: f32[1,32], index: 3, kind: input, shape index: {}]
  %s4 = inlined_call_operand.vmem [shape: f32[1,32], index: 4, kind: input, shape index: {}]
  %s5 = inlined_call_operand.vmem [shape: bf16[32,32], index: 5, kind: output, shape index: {}]
  %s6 = sld [smem:[#allocation0]]
  $region30: #{resnet_generator_forward.24} parent=0
    _
  %s8 = ssub.s32 1, %s6
  %s9 = scalar_select 0, %s8, %s6
  // Predicated region
  $region2: #{resnet_generator_forward.24} parent=0 // pred_check
    _
  $region3: #{resnet_generator_forward.24} parent=0 // pred_check_branch
    %11 = sbr.rel (0) target = $region5
  $region4: #{resnet_generator_forward.24} parent=0 // pred_region
    _
  $region5: #{resnet_generator_forward.24} parent=0 // pred_fallthru
    _
  // Predicated region
  $region6: #{resnet_generator_forward.24} parent=0 // pred_check
    _
  $region7: #{resnet_generator_forward.24} parent=0 // pred_check_branch
    %13 = sbr.rel (0) target = $region9
  $region8: #{resnet_generator_forward.24} parent=0 // pred_region
    _
  $region9: #{resnet_generator_forward.24} parent=0 // pred_fallthru
    _
  // Predicated region
  $region10: #{resnet_generator_forward.24} parent=0 // pred_check
    _
  $region11: #{resnet_generator_forward.24} parent=0 // pred_check_branch
    %15 = sbr.rel (0) target = $region13
  $region12: #{resnet_generator_forward.24} parent=0 // pred_region
    _
  $region13: #{resnet_generator_forward.24} parent=0 // pred_fallthru
    _
  // Predicated region
  $region14: #{resnet_generator_forward.24} parent=0 // pred_check
    _
  $region15: #{resnet_generator_forward.24} parent=0 // pred_check_branch
    %17 = sbr.rel (0) target = $region17
  $region16: #{resnet_generator_forward.24} parent=0 // pred_region
    _
  $region17: #{resnet_generator_forward.24} parent=0 // pred_fallthru
    _
  // Predicated region
  $region18: #{resnet_generator_forward.24} parent=0 // pred_check
    _
  $region19: #{resnet_generator_forward.24} parent=0 // pred_check_branch
    %19 = sbr.rel (0) target = $region21
  $region20: #{resnet_generator_forward.24} parent=0 // pred_region
    _
  $region21: #{resnet_generator_forward.24} parent=0 // pred_fallthru
    _
  %v20 = vld [vmem:[%s1] sm:$0x1]
  %v21 = vmul.f32 %v20, 0.03125
  %v22 = vld [vmem:[%s2] sm:$0x1]
  %v23 = vmul.f32 %v22, 0.03125
  %v24 = vmul.f32 %v21, %v21
  %v25 = vsub.f32 %v23, %v24
  %v26 = vmax.f32 %v25, 0.0
  %v27 = vld [vmem:[%s3] sm:$0x1]
  %v28 = vadd.f32 %v26, 1e-05
  %v29 = vrsqrt.pop %v28
  %v30 = vmul.f32 %v29, %v28
  %v31 = vmul.f32 %v30, %v29
  %v32 = vmul.f32 0.5, %v31
  %v33 = vsub.f32 1.5, %v32
  %v34 = vmul.f32 %v29, %v33
  %vm35 = vweird.f32 %v28
  %vm36 = vweird.f32 %v29
  %vm37 = vmor %vm35, %vm36
  %v38 = vsel %vm37, %v29, %v34
  %v39 = vmul.f32 %v27, %v38
  %v40 = vld [vmem:[%s4] sm:$0x1]
  %v41 = vmul.f32 %v21, %v39
  %v42 = vsub.f32 %v40, %v41
  %v43 = vld [vmem:[%s0] sm:$0xf]
  %v44 = vld [vmem:[%s0 + $0x4] sm:$0xf]
  %v45 = vld [vmem:[%s0 + $0x8] sm:$0xf]
  %v46 = vld [vmem:[%s0 + $0xc] sm:$0xf]
  %v47 = vunpack.c.l.bf16 %v43
  %v48 = vunpack.c.l.bf16 %v44
  %v49 = vunpack.c.l.bf16 %v45
  %v50 = vunpack.c.l.bf16 %v46
  %v52 = vperm.slane %v39, 0
  %v54 = vmul.f32 %v47, %v52
  %v55 = vmul.f32 %v48, %v52
  %v56 = vmul.f32 %v49, %v52
  %v57 = vmul.f32 %v50, %v52
  %v59 = vperm.slane %v42, 0
  %v61 = vadd.f32 %v54, %v59
  %v62 = vadd.f32 %v55, %v59
  %v63 = vadd.f32 %v56, %v59
  %v64 = vadd.f32 %v57, %v59
  %v65 = vmax.f32 %v61, 0.0
  %v66 = vmax.f32 %v62, 0.0
  %v67 = vmax.f32 %v63, 0.0
  %v68 = vmax.f32 %v64, 0.0
  %v69 = vpack.c.bf16 %v65, %v65
  %v70 = vpack.c.bf16 %v66, %v66
  %v71 = vpack.c.bf16 %v67, %v67
  %v72 = vpack.c.bf16 %v68, %v68
  %vm73 = vcmask 257024
  %74 = vst.msk [vmem:[%s5] sm:$0xf] %vm73, %v69
  %75 = vst.msk [vmem:[%s5 + $0x4] sm:$0xf] %vm73, %v70
  %76 = vst.msk [vmem:[%s5 + $0x8] sm:$0xf] %vm73, %v71
  %77 = vst.msk [vmem:[%s5 + $0xc] sm:$0xf] %vm73, %v72
  // Predicated region
  $region22: #{resnet_generator_forward.24} parent=0 // pred_check
    _
  $region23: #{resnet_generator_forward.24} parent=0 // pred_check_branch
    %79 = sbr.rel (0) target = $region25
  $region24: #{resnet_generator_forward.24} parent=0 // pred_region
    _
  $region25: #{resnet_generator_forward.24} parent=0 // pred_fallthru
    _
  // Predicated region
  $region26: #{resnet_generator_forward.24} parent=0 // pred_check
    _
  $region27: #{resnet_generator_forward.24} parent=0 // pred_check_branch
    %81 = sbr.rel (0) target = $region29
  $region28: #{resnet_generator_forward.24} parent=0 // pred_region
    _
  $region29: #{resnet_generator_forward.24} parent=0 // pred_fallthru
    _

// kernel: resnet_generator_forward.23
$region0: #{resnet_generator_forward.23}
  #allocation0 [shape = 'u32[]', space=smem, size = 0x4, offset = 0x4, fixed_abs, tag = 'smem constant byte address 0x4 - core index']
  #allocation1 [shape = 'u32[72,128]{1,0:T(1,128)}', space=vmem, size = 0x9000, scoped, tag = 'internal scratch']
  %s0 = inlined_call_operand.vmem [shape: bf16[32,256], index: 0, kind: input, shape index: {}]
  %s1 = inlined_call_operand.vmem [shape: bf16[256,32], index: 1, kind: input, shape index: {}]
  %s2 = inlined_call_operand.vmem [shape: bf16[32,32], index: 2, kind: output, shape index: {0}]
  %s3 = inlined_call_operand.vmem [shape: f32[1,32], index: 3, kind: output, shape index: {1}]
  %s4 = inlined_call_operand.vmem [shape: f32[1,32], index: 4, kind: output, shape index: {2}]
  %5 = xla_tuple %s2, %s3, %s4
  %s6 = sld [smem:[#allocation0]]
  $region38: #{resnet_generator_forward.23} parent=0
    _
  %s8 = ssub.s32 1, %s6
  %s9 = scalar_select 0, %s8, %s6
  // Predicated region
  $region2: #{resnet_generator_forward.23} parent=0 // pred_check
    _
  $region3: #{resnet_generator_forward.23} parent=0 // pred_check_branch
    %11 = sbr.rel (0) target = $region5
  $region4: #{resnet_generator_forward.23} parent=0 // pred_region
    _
  $region5: #{resnet_generator_forward.23} parent=0 // pred_fallthru
    _
  // Predicated region
  $region6: #{resnet_generator_forward.23} parent=0 // pred_check
    _
  $region7: #{resnet_generator_forward.23} parent=0 // pred_check_branch
    %13 = sbr.rel (0) target = $region9
  $region8: #{resnet_generator_forward.23} parent=0 // pred_region
    _
  $region9: #{resnet_generator_forward.23} parent=0 // pred_fallthru
    _
  %v14 = vld [vmem:[%s0] sm:$0xff]
  %v15 = vld [vmem:[%s0 + $0x8] sm:$0xff]
  %v16 = vld [vmem:[%s0 + $0x10] sm:$0xff]
  %v17 = vld [vmem:[%s0 + $0x18] sm:$0xff]
  %v18 = vld [vmem:[%s1] sm:$0xf]
  %v19 = vld [vmem:[%s1 + $0x4] sm:$0xf]
  %v20 = vld [vmem:[%s1 + $0x8] sm:$0xf]
  %v21 = vld [vmem:[%s1 + $0xc] sm:$0xf]
  %v22 = vld [vmem:[%s1 + $0x10] sm:$0xf]
  %v23 = vld [vmem:[%s1 + $0x14] sm:$0xf]
  %v24 = vld [vmem:[%s1 + $0x18] sm:$0xf]
  %v25 = vld [vmem:[%s1 + $0x1c] sm:$0xf]
  %v26 = vld [vmem:[%s1 + $0x20] sm:$0xf]
  %v27 = vld [vmem:[%s1 + $0x24] sm:$0xf]
  %v28 = vld [vmem:[%s1 + $0x28] sm:$0xf]
  %v29 = vld [vmem:[%s1 + $0x2c] sm:$0xf]
  %v30 = vld [vmem:[%s1 + $0x30] sm:$0xf]
  %v31 = vld [vmem:[%s1 + $0x34] sm:$0xf]
  %v32 = vld [vmem:[%s1 + $0x38] sm:$0xf]
  %v33 = vld [vmem:[%s1 + $0x3c] sm:$0xf]
  %v34 = vld [vmem:[%s1 + $0x40] sm:$0xf]
  %v35 = vld [vmem:[%s1 + $0x44] sm:$0xf]
  %v36 = vld [vmem:[%s1 + $0x48] sm:$0xf]
  %v37 = vld [vmem:[%s1 + $0x4c] sm:$0xf]
  %v38 = vld [vmem:[%s1 + $0x50] sm:$0xf]
  %v39 = vld [vmem:[%s1 + $0x54] sm:$0xf]
  %v40 = vld [vmem:[%s1 + $0x58] sm:$0xf]
  %v41 = vld [vmem:[%s1 + $0x5c] sm:$0xf]
  %v42 = vld [vmem:[%s1 + $0x60] sm:$0xf]
  %v43 = vld [vmem:[%s1 + $0x64] sm:$0xf]
  %v44 = vld [vmem:[%s1 + $0x68] sm:$0xf]
  %v45 = vld [vmem:[%s1 + $0x6c] sm:$0xf]
  %v46 = vld [vmem:[%s1 + $0x70] sm:$0xf]
  %v47 = vld [vmem:[%s1 + $0x74] sm:$0xf]
  %v48 = vld [vmem:[%s1 + $0x78] sm:$0xf]
  %v49 = vld [vmem:[%s1 + $0x7c] sm:$0xf]
  %v54 = vunpack.c.l.b16 %v14
  %v55 = vunpack.c.h.b16 %v14
  %v56 = vunpack.c.l.b16 %v15
  %v57 = vunpack.c.h.b16 %v15
  %v58 = vunpack.c.l.b16 %v16
  %v59 = vunpack.c.h.b16 %v16
  %v60 = vunpack.c.l.b16 %v17
  %v61 = vunpack.c.h.b16 %v17
  %v62 = vpack.c.b16 %v56, %v54
  %v63 = vpack.c.b16 %v57, %v55
  %v64 = vpack.c.b16 %v60, %v58
  %v65 = vpack.c.b16 %v61, %v59
  %v102 = vunpack.c.l.b16 %v18
  %v103 = vunpack.c.l.b16 %v19
  %v104 = vunpack.c.l.b16 %v20
  %v105 = vunpack.c.l.b16 %v21
  %v106 = vunpack.c.l.b16 %v22
  %v107 = vunpack.c.l.b16 %v23
  %v108 = vunpack.c.l.b16 %v24
  %v109 = vunpack.c.l.b16 %v25
  %v110 = vunpack.c.l.b16 %v26
  %v111 = vunpack.c.l.b16 %v27
  %v112 = vunpack.c.l.b16 %v28
  %v113 = vunpack.c.l.b16 %v29
  %v114 = vunpack.c.l.b16 %v30
  %v115 = vunpack.c.l.b16 %v31
  %v116 = vunpack.c.l.b16 %v32
  %v117 = vunpack.c.l.b16 %v33
  %v118 = vunpack.c.l.b16 %v34
  %v119 = vunpack.c.l.b16 %v35
  %v120 = vunpack.c.l.b16 %v36
  %v121 = vunpack.c.l.b16 %v37
  %v122 = vunpack.c.l.b16 %v38
  %v123 = vunpack.c.l.b16 %v39
  %v124 = vunpack.c.l.b16 %v40
  %v125 = vunpack.c.l.b16 %v41
  %v126 = vunpack.c.l.b16 %v42
  %v127 = vunpack.c.l.b16 %v43
  %v128 = vunpack.c.l.b16 %v44
  %v129 = vunpack.c.l.b16 %v45
  %v130 = vunpack.c.l.b16 %v46
  %v131 = vunpack.c.l.b16 %v47
  %v132 = vunpack.c.l.b16 %v48
  %v133 = vunpack.c.l.b16 %v49
  %v134 = vpack.c.b16 %v103, %v102
  %v135 = vpack.c.b16 %v105, %v104
  %v136 = vpack.c.b16 %v107, %v106
  %v137 = vpack.c.b16 %v109, %v108
  %v138 = vpack.c.b16 %v111, %v110
  %v139 = vpack.c.b16 %v113, %v112
  %v140 = vpack.c.b16 %v115, %v114
  %v141 = vpack.c.b16 %v117, %v116
  %v142 = vpack.c.b16 %v119, %v118
  %v143 = vpack.c.b16 %v121, %v120
  %v144 = vpack.c.b16 %v123, %v122
  %v145 = vpack.c.b16 %v125, %v124
  %v146 = vpack.c.b16 %v127, %v126
  %v147 = vpack.c.b16 %v129, %v128
  %v148 = vpack.c.b16 %v131, %v130
  %v149 = vpack.c.b16 %v133, %v132
  %166 = vmatpush.bf16.msra.mxu0 %v141
  %167 = vmatpush.bf16.msra.mxu0 %v140
  %168 = vmatpush.bf16.msra.mxu0 %v139
  %169 = vmatpush.bf16.msra.mxu0 %v138
  %170 = vmatpush.bf16.msra.mxu0 %v137
  %171 = vmatpush.bf16.msra.mxu0 %v136
  %172 = vmatpush.bf16.msra.mxu0 %v135
  %173 = vmatpush.bf16.msra.mxu0 %v134
  %174 = vmatmul.bf16.gmra.mxu0 %v62
  %v175 = vpop.f32.mrf.mxu0
  %v176 = vadd.f32 0.0, %v175
  %v177 = vpop.f32.mrf.mxu0
  %v178 = vadd.f32 0.0, %v177
  %179 = vmatmul.bf16.gmra.mxu0 %v64
  %v180 = vpop.f32.mrf.mxu0
  %v181 = vadd.f32 0.0, %v180
  %v182 = vpop.f32.mrf.mxu0
  %v183 = vadd.f32 0.0, %v182
  %184 = vdwg.mxu0
  %185 = vmatpush.bf16.msra.mxu0 %v149
  %186 = vmatpush.bf16.msra.mxu0 %v148
  %187 = vmatpush.bf16.msra.mxu0 %v147
  %188 = vmatpush.bf16.msra.mxu0 %v146
  %189 = vmatpush.bf16.msra.mxu0 %v145
  %190 = vmatpush.bf16.msra.mxu0 %v144
  %191 = vmatpush.bf16.msra.mxu0 %v143
  %192 = vmatpush.bf16.msra.mxu0 %v142
  %193 = vmatmul.bf16.gmra.mxu0 %v63
  %v194 = vpop.f32.mrf.mxu0
  %v195 = vadd.f32 %v176, %v194
  %v196 = vpop.f32.mrf.mxu0
  %v197 = vadd.f32 %v178, %v196
  %198 = vmatmul.bf16.gmra.mxu0 %v65
  %v199 = vpop.f32.mrf.mxu0
  %v200 = vadd.f32 %v181, %v199
  %v201 = vpop.f32.mrf.mxu0
  %v202 = vadd.f32 %v183, %v201
  %203 = vdwg.mxu0
  %v204 = vpack.c.bf16 %v195, %v195
  %v205 = vpack.c.bf16 %v197, %v197
  %v206 = vpack.c.bf16 %v200, %v200
  %v207 = vpack.c.bf16 %v202, %v202
  %vm208 = vcmask 257024
  %209 = vst.msk [vmem:[%s2] sm:$0xf] %vm208, %v204
  %210 = vst.msk [vmem:[%s2 + $0x4] sm:$0xf] %vm208, %v205
  %211 = vst.msk [vmem:[%s2 + $0x8] sm:$0xf] %vm208, %v206
  %212 = vst.msk [vmem:[%s2 + $0xc] sm:$0xf] %vm208, %v207
  %p213 = scmp.eq.s32.totalorder 0, 0
  // Predicated region
  $region10: #{resnet_generator_forward.23} parent=0 // pred_check
    %p214 = pneg %p213
  $region11: #{resnet_generator_forward.23} parent=0 // pred_check_branch
    %216 = sbr.rel (%p214) target = $region13
  $region12: #{resnet_generator_forward.23} parent=0 // pred_region
    %vm217 = vcmask 253952
    %218 = vst.msk [vmem:[%s3] sm:$0x1] %vm217, 0.0
    %219 = vst.msk [vmem:[%s4] sm:$0x1] %vm217, 0.0
  $region13: #{resnet_generator_forward.23} parent=0 // pred_fallthru
    _
  %v220 = vld [vmem:[%s3] sm:$0x1]
  %vm221 = vcmask 261120
  %v222 = vsel %vm221, %v195, 0.0
  %v223 = vsel %vm221, %v197, 0.0
  %v224 = vadd.f32 %v222, %v223
  %v225 = vsel %vm221, %v200, 0.0
  %v226 = vadd.f32 %v224, %v225
  %v227 = vsel %vm221, %v202, 0.0
  %v228 = vadd.f32 %v226, %v227
  %v229 = vrot.slane %v228, 4
  %v230 = vadd.f32 %v228, %v229
  %v231 = vrot.slane %v230, 2
  %v232 = vadd.f32 %v230, %v231
  %v233 = vrot.slane %v232, 1
  %v234 = vadd.f32 %v232, %v233
  %v235 = vadd.f32 %v220, %v234
  %vm236 = vcmask 253952
  %237 = vst.msk [vmem:[%s3] sm:$0x1] %vm236, %v235
  %v238 = vld [vmem:[%s4] sm:$0x1]
  %v239 = vmul.f32 %v195, %v195
  %v240 = vmul.f32 %v197, %v197
  %v241 = vmul.f32 %v200, %v200
  %v242 = vmul.f32 %v202, %v202
  %v243 = vsel %vm221, %v239, 0.0
  %v244 = vsel %vm221, %v240, 0.0
  %v245 = vadd.f32 %v243, %v244
  %v246 = vsel %vm221, %v241, 0.0
  %v247 = vadd.f32 %v245, %v246
  %v248 = vsel %vm221, %v242, 0.0
  %v249 = vadd.f32 %v247, %v248
  %v250 = vrot.slane %v249, 4
  %v251 = vadd.f32 %v249, %v250
  %v252 = vrot.slane %v251, 2
  %v253 = vadd.f32 %v251, %v252
  %v254 = vrot.slane %v253, 1
  %v255 = vadd.f32 %v253, %v254
  %v256 = vadd.f32 %v238, %v255
  %257 = vst.msk [vmem:[%s4] sm:$0x1] %vm236, %v256
  // Predicated region
  $region14: #{resnet_generator_forward.23} parent=0 // pred_check
    _
  $region15: #{resnet_generator_forward.23} parent=0 // pred_check_branch
    %259 = sbr.rel (0) target = $region17
  $region16: #{resnet_generator_forward.23} parent=0 // pred_region
    _
  $region17: #{resnet_generator_forward.23} parent=0 // pred_fallthru
    _
  // Predicated region
  $region18: #{resnet_generator_forward.23} parent=0 // pred_check
    _
  $region19: #{resnet_generator_forward.23} parent=0 // pred_check_branch
    %261 = sbr.rel (0) target = $region21
  $region20: #{resnet_generator_forward.23} parent=0 // pred_region
    _
  $region21: #{resnet_generator_forward.23} parent=0 // pred_fallthru
    _
  // Predicated region
  $region22: #{resnet_generator_forward.23} parent=0 // pred_check
    _
  $region23: #{resnet_generator_forward.23} parent=0 // pred_check_branch
    %263 = sbr.rel (0) target = $region25
  $region24: #{resnet_generator_forward.23} parent=0 // pred_region
    _
  $region25: #{resnet_generator_forward.23} parent=0 // pred_fallthru
    _
  // Predicated region
  $region26: #{resnet_generator_forward.23} parent=0 // pred_check
    _
  $region27: #{resnet_generator_forward.23} parent=0 // pred_check_branch
    %265 = sbr.rel (0) target = $region29
  $region28: #{resnet_generator_forward.23} parent=0 // pred_region
    _
  $region29: #{resnet_generator_forward.23} parent=0 // pred_fallthru
    _
  // Predicated region
  $region30: #{resnet_generator_forward.23} parent=0 // pred_check
    _
  $region31: #{resnet_generator_forward.23} parent=0 // pred_check_branch
    %267 = sbr.rel (0) target = $region33
  $region32: #{resnet_generator_forward.23} parent=0 // pred_region
    _
  $region33: #{resnet_generator_forward.23} parent=0 // pred_fallthru
    _
  // Predicated region
  $region34: #{resnet_generator_forward.23} parent=0 // pred_check
    _
  $region35: #{resnet_generator_forward.23} parent=0 // pred_check_branch
    %269 = sbr.rel (0) target = $region37
  $region36: #{resnet_generator_forward.23} parent=0 // pred_region
    _
  $region37: #{resnet_generator_forward.23} parent=0 // pred_fallthru
    _

// kernel: resnet_generator_forward.25
$region0: #{resnet_generator_forward.25}
  #allocation0 [shape = 'u32[]', space=smem, size = 0x4, offset = 0x4, fixed_abs, tag = 'smem constant byte address 0x4 - core index']
  #allocation1 [shape = 'u32[72,128]{1,0:T(1,128)}', space=vmem, size = 0x9000, scoped, tag = 'internal scratch']
  %s0 = inlined_call_operand.vmem [shape: bf16[32,384], index: 0, kind: input, shape index: {}]
  %s1 = inlined_call_operand.vmem [shape: bf16[384,32], index: 1, kind: input, shape index: {}]
  %s2 = inlined_call_operand.vmem [shape: bf16[32,32], index: 2, kind: output, shape index: {0}]
  %s3 = inlined_call_operand.vmem [shape: f32[1,32], index: 3, kind: output, shape index: {1}]
  %s4 = inlined_call_operand.vmem [shape: f32[1,32], index: 4, kind: output, shape index: {2}]
  %5 = xla_tuple %s2, %s3, %s4
  %s6 = sld [smem:[#allocation0]]
  $region38: #{resnet_generator_forward.25} parent=0
    _
  %s8 = ssub.s32 1, %s6
  %s9 = scalar_select 0, %s8, %s6
  // Predicated region
  $region2: #{resnet_generator_forward.25} parent=0 // pred_check
    _
  $region3: #{resnet_generator_forward.25} parent=0 // pred_check_branch
    %11 = sbr.rel (0) target = $region5
  $region4: #{resnet_generator_forward.25} parent=0 // pred_region
    _
  $region5: #{resnet_generator_forward.25} parent=0 // pred_fallthru
    _
  // Predicated region
  $region6: #{resnet_generator_forward.25} parent=0 // pred_check
    _
  $region7: #{resnet_generator_forward.25} parent=0 // pred_check_branch
    %13 = sbr.rel (0) target = $region9
  $region8: #{resnet_generator_forward.25} parent=0 // pred_region
    _
  $region9: #{resnet_generator_forward.25} parent=0 // pred_fallthru
    _
  %v14 = vld [vmem:[%s0] sm:$0xff]
  %v15 = vld [vmem:[%s0 + $0x8] sm:$0xf]
  %v16 = vld [vmem:[%s0 + $0xc] sm:$0xff]
  %v17 = vld [vmem:[%s0 + $0x14] sm:$0xf]
  %v18 = vld [vmem:[%s0 + $0x18] sm:$0xff]
  %v19 = vld [vmem:[%s0 + $0x20] sm:$0xf]
  %v20 = vld [vmem:[%s0 + $0x24] sm:$0xff]
  %v21 = vld [vmem:[%s0 + $0x2c] sm:$0xf]
  %v22 = vld [vmem:[%s1] sm:$0xf]
  %v23 = vld [vmem:[%s1 + $0x4] sm:$0xf]
  %v24 = vld [vmem:[%s1 + $0x8] sm:$0xf]
  %v25 = vld [vmem:[%s1 + $0xc] sm:$0xf]
  %v26 = vld [vmem:[%s1 + $0x10] sm:$0xf]
  %v27 = vld [vmem:[%s1 + $0x14] sm:$0xf]
  %v28 = vld [vmem:[%s1 + $0x18] sm:$0xf]
  %v29 = vld [vmem:[%s1 + $0x1c] sm:$0xf]
  %v30 = vld [vmem:[%s1 + $0x20] sm:$0xf]
  %v31 = vld [vmem:[%s1 + $0x24] sm:$0xf]
  %v32 = vld [vmem:[%s1 + $0x28] sm:$0xf]
  %v33 = vld [vmem:[%s1 + $0x2c] sm:$0xf]
  %v34 = vld [vmem:[%s1 + $0x30] sm:$0xf]
  %v35 = vld [vmem:[%s1 + $0x34] sm:$0xf]
  %v36 = vld [vmem:[%s1 + $0x38] sm:$0xf]
  %v37 = vld [vmem:[%s1 + $0x3c] sm:$0xf]
  %v38 = vld [vmem:[%s1 + $0x40] sm:$0xf]
  %v39 = vld [vmem:[%s1 + $0x44] sm:$0xf]
  %v40 = vld [vmem:[%s1 + $0x48] sm:$0xf]
  %v41 = vld [vmem:[%s1 + $0x4c] sm:$0xf]
  %v42 = vld [vmem:[%s1 + $0x50] sm:$0xf]
  %v43 = vld [vmem:[%s1 + $0x54] sm:$0xf]
  %v44 = vld [vmem:[%s1 + $0x58] sm:$0xf]
  %v45 = vld [vmem:[%s1 + $0x5c] sm:$0xf]
  %v46 = vld [vmem:[%s1 + $0x60] sm:$0xf]
  %v47 = vld [vmem:[%s1 + $0x64] sm:$0xf]
  %v48 = vld [vmem:[%s1 + $0x68] sm:$0xf]
  %v49 = vld [vmem:[%s1 + $0x6c] sm:$0xf]
  %v50 = vld [vmem:[%s1 + $0x70] sm:$0xf]
  %v51 = vld [vmem:[%s1 + $0x74] sm:$0xf]
  %v52 = vld [vmem:[%s1 + $0x78] sm:$0xf]
  %v53 = vld [vmem:[%s1 + $0x7c] sm:$0xf]
  %v54 = vld [vmem:[%s1 + $0x80] sm:$0xf]
  %v55 = vld [vmem:[%s1 + $0x84] sm:$0xf]
  %v56 = vld [vmem:[%s1 + $0x88] sm:$0xf]
  %v57 = vld [vmem:[%s1 + $0x8c] sm:$0xf]
  %v58 = vld [vmem:[%s1 + $0x90] sm:$0xf]
  %v59 = vld [vmem:[%s1 + $0x94] sm:$0xf]
  %v60 = vld [vmem:[%s1 + $0x98] sm:$0xf]
  %v61 = vld [vmem:[%s1 + $0x9c] sm:$0xf]
  %v62 = vld [vmem:[%s1 + $0xa0] sm:$0xf]
  %v63 = vld [vmem:[%s1 + $0xa4] sm:$0xf]
  %v64 = vld [vmem:[%s1 + $0xa8] sm:$0xf]
  %v65 = vld [vmem:[%s1 + $0xac] sm:$0xf]
  %v66 = vld [vmem:[%s1 + $0xb0] sm:$0xf]
  %v67 = vld [vmem:[%s1 + $0xb4] sm:$0xf]
  %v68 = vld [vmem:[%s1 + $0xb8] sm:$0xf]
  %v69 = vld [vmem:[%s1 + $0xbc] sm:$0xf]
  %v78 = vunpack.c.l.b16 %v14
  %v79 = vunpack.c.h.b16 %v14
  %v80 = vunpack.c.l.b16 %v15
  %v81 = vunpack.c.l.b16 %v16
  %v82 = vunpack.c.h.b16 %v16
  %v83 = vunpack.c.l.b16 %v17
  %v84 = vunpack.c.l.b16 %v18
  %v85 = vunpack.c.h.b16 %v18
  %v86 = vunpack.c.l.b16 %v19
  %v87 = vunpack.c.l.b16 %v20
  %v88 = vunpack.c.h.b16 %v20
  %v89 = vunpack.c.l.b16 %v21
  %v90 = vpack.c.b16 %v81, %v78
  %v91 = vpack.c.b16 %v82, %v79
  %v92 = vpack.c.b16 %v83, %v80
  %v93 = vpack.c.b16 %v87, %v84
  %v94 = vpack.c.b16 %v88, %v85
  %v95 = vpack.c.b16 %v89, %v86
  %v150 = vunpack.c.l.b16 %v22
  %v151 = vunpack.c.l.b16 %v23
  %v152 = vunpack.c.l.b16 %v24
  %v153 = vunpack.c.l.b16 %v25
  %v154 = vunpack.c.l.b16 %v26
  %v155 = vunpack.c.l.b16 %v27
  %v156 = vunpack.c.l.b16 %v28
  %v157 = vunpack.c.l.b16 %v29
  %v158 = vunpack.c.l.b16 %v30
  %v159 = vunpack.c.l.b16 %v31
  %v160 = vunpack.c.l.b16 %v32
  %v161 = vunpack.c.l.b16 %v33
  %v162 = vunpack.c.l.b16 %v34
  %v163 = vunpack.c.l.b16 %v35
  %v164 = vunpack.c.l.b16 %v36
  %v165 = vunpack.c.l.b16 %v37
  %v166 = vunpack.c.l.b16 %v38
  %v167 = vunpack.c.l.b16 %v39
  %v168 = vunpack.c.l.b16 %v40
  %v169 = vunpack.c.l.b16 %v41
  %v170 = vunpack.c.l.b16 %v42
  %v171 = vunpack.c.l.b16 %v43
  %v172 = vunpack.c.l.b16 %v44
  %v173 = vunpack.c.l.b16 %v45
  %v174 = vunpack.c.l.b16 %v46
  %v175 = vunpack.c.l.b16 %v47
  %v176 = vunpack.c.l.b16 %v48
  %v177 = vunpack.c.l.b16 %v49
  %v178 = vunpack.c.l.b16 %v50
  %v179 = vunpack.c.l.b16 %v51
  %v180 = vunpack.c.l.b16 %v52
  %v181 = vunpack.c.l.b16 %v53
  %v182 = vunpack.c.l.b16 %v54
  %v183 = vunpack.c.l.b16 %v55
  %v184 = vunpack.c.l.b16 %v56
  %v185 = vunpack.c.l.b16 %v57
  %v186 = vunpack.c.l.b16 %v58
  %v187 = vunpack.c.l.b16 %v59
  %v188 = vunpack.c.l.b16 %v60
  %v189 = vunpack.c.l.b16 %v61
  %v190 = vunpack.c.l.b16 %v62
  %v191 = vunpack.c.l.b16 %v63
  %v192 = vunpack.c.l.b16 %v64
  %v193 = vunpack.c.l.b16 %v65
  %v194 = vunpack.c.l.b16 %v66
  %v195 = vunpack.c.l.b16 %v67
  %v196 = vunpack.c.l.b16 %v68
  %v197 = vunpack.c.l.b16 %v69
  %v198 = vpack.c.b16 %v151, %v150
  %v199 = vpack.c.b16 %v153, %v152
  %v200 = vpack.c.b16 %v155, %v154
  %v201 = vpack.c.b16 %v157, %v156
  %v202 = vpack.c.b16 %v159, %v158
  %v203 = vpack.c.b16 %v161, %v160
  %v204 = vpack.c.b16 %v163, %v162
  %v205 = vpack.c.b16 %v165, %v164
  %v206 = vpack.c.b16 %v167, %v166
  %v207 = vpack.c.b16 %v169, %v168
  %v208 = vpack.c.b16 %v171, %v170
  %v209 = vpack.c.b16 %v173, %v172
  %v210 = vpack.c.b16 %v175, %v174
  %v211 = vpack.c.b16 %v177, %v176
  %v212 = vpack.c.b16 %v179, %v178
  %v213 = vpack.c.b16 %v181, %v180
  %v214 = vpack.c.b16 %v183, %v182
  %v215 = vpack.c.b16 %v185, %v184
  %v216 = vpack.c.b16 %v187, %v186
  %v217 = vpack.c.b16 %v189, %v188
  %v218 = vpack.c.b16 %v191, %v190
  %v219 = vpack.c.b16 %v193, %v192
  %v220 = vpack.c.b16 %v195, %v194
  %v221 = vpack.c.b16 %v197, %v196
  %246 = vmatpush.bf16.msra.mxu0 %v205
  %247 = vmatpush.bf16.msra.mxu0 %v204
  %248 = vmatpush.bf16.msra.mxu0 %v203
  %249 = vmatpush.bf16.msra.mxu0 %v202
  %250 = vmatpush.bf16.msra.mxu0 %v201
  %251 = vmatpush.bf16.msra.mxu0 %v200
  %252 = vmatpush.bf16.msra.mxu0 %v199
  %253 = vmatpush.bf16.msra.mxu0 %v198
  %254 = vmatmul.bf16.gmra.mxu0 %v90
  %v255 = vpop.f32.mrf.mxu0
  %v256 = vadd.f32 0.0, %v255
  %v257 = vpop.f32.mrf.mxu0
  %v258 = vadd.f32 0.0, %v257
  %259 = vmatmul.bf16.gmra.mxu0 %v93
  %v260 = vpop.f32.mrf.mxu0
  %v261 = vadd.f32 0.0, %v260
  %v262 = vpop.f32.mrf.mxu0
  %v263 = vadd.f32 0.0, %v262
  %264 = vdwg.mxu0
  %265 = vmatpush.bf16.msra.mxu0 %v213
  %266 = vmatpush.bf16.msra.mxu0 %v212
  %267 = vmatpush.bf16.msra.mxu0 %v211
  %268 = vmatpush.bf16.msra.mxu0 %v210
  %269 = vmatpush.bf16.msra.mxu0 %v209
  %270 = vmatpush.bf16.msra.mxu0 %v208
  %271 = vmatpush.bf16.msra.mxu0 %v207
  %272 = vmatpush.bf16.msra.mxu0 %v206
  %273 = vmatmul.bf16.gmra.mxu0 %v91
  %v274 = vpop.f32.mrf.mxu0
  %v275 = vadd.f32 %v256, %v274
  %v276 = vpop.f32.mrf.mxu0
  %v277 = vadd.f32 %v258, %v276
  %278 = vmatmul.bf16.gmra.mxu0 %v94
  %v279 = vpop.f32.mrf.mxu0
  %v280 = vadd.f32 %v261, %v279
  %v281 = vpop.f32.mrf.mxu0
  %v282 = vadd.f32 %v263, %v281
  %283 = vdwg.mxu0
  %284 = vmatpush.bf16.msra.mxu0 %v221
  %285 = vmatpush.bf16.msra.mxu0 %v220
  %286 = vmatpush.bf16.msra.mxu0 %v219
  %287 = vmatpush.bf16.msra.mxu0 %v218
  %288 = vmatpush.bf16.msra.mxu0 %v217
  %289 = vmatpush.bf16.msra.mxu0 %v216
  %290 = vmatpush.bf16.msra.mxu0 %v215
  %291 = vmatpush.bf16.msra.mxu0 %v214
  %292 = vmatmul.bf16.gmra.mxu0 %v92
  %v293 = vpop.f32.mrf.mxu0
  %v294 = vadd.f32 %v275, %v293
  %v295 = vpop.f32.mrf.mxu0
  %v296 = vadd.f32 %v277, %v295
  %297 = vmatmul.bf16.gmra.mxu0 %v95
  %v298 = vpop.f32.mrf.mxu0
  %v299 = vadd.f32 %v280, %v298
  %v300 = vpop.f32.mrf.mxu0
  %v301 = vadd.f32 %v282, %v300
  %302 = vdwg.mxu0
  %v303 = vpack.c.bf16 %v294, %v294
  %v304 = vpack.c.bf16 %v296, %v296
  %v305 = vpack.c.bf16 %v299, %v299
  %v306 = vpack.c.bf16 %v301, %v301
  %vm307 = vcmask 257024
  %308 = vst.msk [vmem:[%s2] sm:$0xf] %vm307, %v303
  %309 = vst.msk [vmem:[%s2 + $0x4] sm:$0xf] %vm307, %v304
  %310 = vst.msk [vmem:[%s2 + $0x8] sm:$0xf] %vm307, %v305
  %311 = vst.msk [vmem:[%s2 + $0xc] sm:$0xf] %vm307, %v306
  %p312 = scmp.eq.s32.totalorder 0, 0
  // Predicated region
  $region10: #{resnet_generator_forward.25} parent=0 // pred_check
    %p313 = pneg %p312
  $region11: #{resnet_generator_forward.25} parent=0 // pred_check_branch
    %315 = sbr.rel (%p313) target = $region13
  $region12: #{resnet_generator_forward.25} parent=0 // pred_region
    %vm316 = vcmask 253952
    %317 = vst.msk [vmem:[%s3] sm:$0x1] %vm316, 0.0
    %318 = vst.msk [vmem:[%s4] sm:$0x1] %vm316, 0.0
  $region13: #{resnet_generator_forward.25} parent=0 // pred_fallthru
    _
  %v319 = vld [vmem:[%s3] sm:$0x1]
  %vm320 = vcmask 261120
  %v321 = vsel %vm320, %v294, 0.0
  %v322 = vsel %vm320, %v296, 0.0
  %v323 = vadd.f32 %v321, %v322
  %v324 = vsel %vm320, %v299, 0.0
  %v325 = vadd.f32 %v323, %v324
  %v326 = vsel %vm320, %v301, 0.0
  %v327 = vadd.f32 %v325, %v326
  %v328 = vrot.slane %v327, 4
  %v329 = vadd.f32 %v327, %v328
  %v330 = vrot.slane %v329, 2
  %v331 = vadd.f32 %v329, %v330
  %v332 = vrot.slane %v331, 1
  %v333 = vadd.f32 %v331, %v332
  %v334 = vadd.f32 %v319, %v333
  %vm335 = vcmask 253952
  %336 = vst.msk [vmem:[%s3] sm:$0x1] %vm335, %v334
  %v337 = vld [vmem:[%s4] sm:$0x1]
  %v338 = vmul.f32 %v294, %v294
  %v339 = vmul.f32 %v296, %v296
  %v340 = vmul.f32 %v299, %v299
  %v341 = vmul.f32 %v301, %v301
  %v342 = vsel %vm320, %v338, 0.0
  %v343 = vsel %vm320, %v339, 0.0
  %v344 = vadd.f32 %v342, %v343
  %v345 = vsel %vm320, %v340, 0.0
  %v346 = vadd.f32 %v344, %v345
  %v347 = vsel %vm320, %v341, 0.0
  %v348 = vadd.f32 %v346, %v347
  %v349 = vrot.slane %v348, 4
  %v350 = vadd.f32 %v348, %v349
  %v351 = vrot.slane %v350, 2
  %v352 = vadd.f32 %v350, %v351
  %v353 = vrot.slane %v352, 1
  %v354 = vadd.f32 %v352, %v353
  %v355 = vadd.f32 %v337, %v354
  %356 = vst.msk [vmem:[%s4] sm:$0x1] %vm335, %v355
  // Predicated region
  $region14: #{resnet_generator_forward.25} parent=0 // pred_check
    _
  $region15: #{resnet_generator_forward.25} parent=0 // pred_check_branch
    %358 = sbr.rel (0) target = $region17
  $region16: #{resnet_generator_forward.25} parent=0 // pred_region
    _
  $region17: #{resnet_generator_forward.25} parent=0 // pred_fallthru
    _
  // Predicated region
  $region18: #{resnet_generator_forward.25} parent=0 // pred_check
    _
  $region19: #{resnet_generator_forward.25} parent=0 // pred_check_branch
    %360 = sbr.rel (0) target = $region21
  $region20: #{resnet_generator_forward.25} parent=0 // pred_region
    _
  $region21: #{resnet_generator_forward.25} parent=0 // pred_fallthru
    _
  // Predicated region
  $region22: #{resnet_generator_forward.25} parent=0 // pred_check
    _
  $region23: #{resnet_generator_forward.25} parent=0 // pred_check_branch
    %362 = sbr.rel (0) target = $region25
  $region24: #{resnet_generator_forward.25} parent=0 // pred_region
    _
  $region25: #{resnet_generator_forward.25} parent=0 // pred_fallthru
    _
  // Predicated region
  $region26: #{resnet_generator_forward.25} parent=0 // pred_check
    _
  $region27: #{resnet_generator_forward.25} parent=0 // pred_check_branch
    %364 = sbr.rel (0) target = $region29
  $region28: #{resnet_generator_forward.25} parent=0 // pred_region
    _
  $region29: #{resnet_generator_forward.25} parent=0 // pred_fallthru
    _
  // Predicated region
  $region30: #{resnet_generator_forward.25} parent=0 // pred_check
    _
  $region31: #{resnet_generator_forward.25} parent=0 // pred_check_branch
    %366 = sbr.rel (0) target = $region33
  $region32: #{resnet_generator_forward.25} parent=0 // pred_region
    _
  $region33: #{resnet_generator_forward.25} parent=0 // pred_fallthru
    _
  // Predicated region
  $region34: #{resnet_generator_forward.25} parent=0 // pred_check
    _
  $region35: #{resnet_generator_forward.25} parent=0 // pred_check_branch
    %368 = sbr.rel (0) target = $region37
  $region36: #{resnet_generator_forward.25} parent=0 // pred_region
    _
  $region37: #{resnet_generator_forward.25} parent=0 // pred_fallthru
    _

// kernel: resnet_generator_forward.28
$region0: #{resnet_generator_forward.28}
  #allocation0 [shape = 'u32[]', space=smem, size = 0x4, offset = 0x4, fixed_abs, tag = 'smem constant byte address 0x4 - core index']
  #allocation1 [shape = 'u32[72,128]{1,0:T(1,128)}', space=vmem, size = 0x9000, scoped, tag = 'internal scratch']
  %s0 = inlined_call_operand.vmem [shape: bf16[32,32], index: 0, kind: input, shape index: {}]
  %s1 = inlined_call_operand.vmem [shape: f32[1,32], index: 1, kind: input, shape index: {}]
  %s2 = inlined_call_operand.vmem [shape: f32[1,32], index: 2, kind: input, shape index: {}]
  %s3 = inlined_call_operand.vmem [shape: f32[1,32], index: 3, kind: input, shape index: {}]
  %s4 = inlined_call_operand.vmem [shape: f32[1,32], index: 4, kind: input, shape index: {}]
  %s5 = inlined_call_operand.vmem [shape: bf16[32,32], index: 5, kind: input, shape index: {}]
  %s6 = inlined_call_operand.vmem [shape: bf16[32,32], index: 6, kind: output, shape index: {}]
  %s7 = sld [smem:[#allocation0]]
  $region34: #{resnet_generator_forward.28} parent=0
    _
  %s9 = ssub.s32 1, %s7
  %s10 = scalar_select 0, %s9, %s7
  // Predicated region
  $region2: #{resnet_generator_forward.28} parent=0 // pred_check
    _
  $region3: #{resnet_generator_forward.28} parent=0 // pred_check_branch
    %12 = sbr.rel (0) target = $region5
  $region4: #{resnet_generator_forward.28} parent=0 // pred_region
    _
  $region5: #{resnet_generator_forward.28} parent=0 // pred_fallthru
    _
  // Predicated region
  $region6: #{resnet_generator_forward.28} parent=0 // pred_check
    _
  $region7: #{resnet_generator_forward.28} parent=0 // pred_check_branch
    %14 = sbr.rel (0) target = $region9
  $region8: #{resnet_generator_forward.28} parent=0 // pred_region
    _
  $region9: #{resnet_generator_forward.28} parent=0 // pred_fallthru
    _
  // Predicated region
  $region10: #{resnet_generator_forward.28} parent=0 // pred_check
    _
  $region11: #{resnet_generator_forward.28} parent=0 // pred_check_branch
    %16 = sbr.rel (0) target = $region13
  $region12: #{resnet_generator_forward.28} parent=0 // pred_region
    _
  $region13: #{resnet_generator_forward.28} parent=0 // pred_fallthru
    _
  // Predicated region
  $region14: #{resnet_generator_forward.28} parent=0 // pred_check
    _
  $region15: #{resnet_generator_forward.28} parent=0 // pred_check_branch
    %18 = sbr.rel (0) target = $region17
  $region16: #{resnet_generator_forward.28} parent=0 // pred_region
    _
  $region17: #{resnet_generator_forward.28} parent=0 // pred_fallthru
    _
  // Predicated region
  $region18: #{resnet_generator_forward.28} parent=0 // pred_check
    _
  $region19: #{resnet_generator_forward.28} parent=0 // pred_check_branch
    %20 = sbr.rel (0) target = $region21
  $region20: #{resnet_generator_forward.28} parent=0 // pred_region
    _
  $region21: #{resnet_generator_forward.28} parent=0 // pred_fallthru
    _
  // Predicated region
  $region22: #{resnet_generator_forward.28} parent=0 // pred_check
    _
  $region23: #{resnet_generator_forward.28} parent=0 // pred_check_branch
    %22 = sbr.rel (0) target = $region25
  $region24: #{resnet_generator_forward.28} parent=0 // pred_region
    _
  $region25: #{resnet_generator_forward.28} parent=0 // pred_fallthru
    _
  %v23 = vld [vmem:[%s1] sm:$0x1]
  %v24 = vmul.f32 %v23, 0.03125
  %v25 = vld [vmem:[%s2] sm:$0x1]
  %v26 = vmul.f32 %v25, 0.03125
  %v27 = vmul.f32 %v24, %v24
  %v28 = vsub.f32 %v26, %v27
  %v29 = vmax.f32 %v28, 0.0
  %v30 = vld [vmem:[%s3] sm:$0x1]
  %v31 = vadd.f32 %v29, 1e-05
  %v32 = vrsqrt.pop %v31
  %v33 = vmul.f32 %v32, %v31
  %v34 = vmul.f32 %v33, %v32
  %v35 = vmul.f32 0.5, %v34
  %v36 = vsub.f32 1.5, %v35
  %v37 = vmul.f32 %v32, %v36
  %vm38 = vweird.f32 %v31
  %vm39 = vweird.f32 %v32
  %vm40 = vmor %vm38, %vm39
  %v41 = vsel %vm40, %v32, %v37
  %v42 = vmul.f32 %v30, %v41
  %v43 = vld [vmem:[%s4] sm:$0x1]
  %v44 = vmul.f32 %v24, %v42
  %v45 = vsub.f32 %v43, %v44
  %v46 = vld [vmem:[%s0] sm:$0xf]
  %v47 = vld [vmem:[%s0 + $0x4] sm:$0xf]
  %v48 = vld [vmem:[%s0 + $0x8] sm:$0xf]
  %v49 = vld [vmem:[%s0 + $0xc] sm:$0xf]
  %v50 = vunpack.c.l.bf16 %v46
  %v51 = vunpack.c.l.bf16 %v47
  %v52 = vunpack.c.l.bf16 %v48
  %v53 = vunpack.c.l.bf16 %v49
  %v55 = vperm.slane %v42, 0
  %v57 = vmul.f32 %v50, %v55
  %v58 = vmul.f32 %v51, %v55
  %v59 = vmul.f32 %v52, %v55
  %v60 = vmul.f32 %v53, %v55
  %v62 = vperm.slane %v45, 0
  %v64 = vadd.f32 %v57, %v62
  %v65 = vadd.f32 %v58, %v62
  %v66 = vadd.f32 %v59, %v62
  %v67 = vadd.f32 %v60, %v62
  %v68 = vld [vmem:[%s5] sm:$0xf]
  %v69 = vld [vmem:[%s5 + $0x4] sm:$0xf]
  %v70 = vld [vmem:[%s5 + $0x8] sm:$0xf]
  %v71 = vld [vmem:[%s5 + $0xc] sm:$0xf]
  %v72 = vunpack.c.l.bf16 %v68
  %v73 = vunpack.c.l.bf16 %v69
  %v74 = vunpack.c.l.bf16 %v70
  %v75 = vunpack.c.l.bf16 %v71
  %v76 = vadd.f32 %v64, %v72
  %v77 = vadd.f32 %v65, %v73
  %v78 = vadd.f32 %v66, %v74
  %v79 = vadd.f32 %v67, %v75
  %v80 = vpack.c.bf16 %v76, %v76
  %v81 = vpack.c.bf16 %v77, %v77
  %v82 = vpack.c.bf16 %v78, %v78
  %v83 = vpack.c.bf16 %v79, %v79
  %vm84 = vcmask 257024
  %85 = vst.msk [vmem:[%s6] sm:$0xf] %vm84, %v80
  %86 = vst.msk [vmem:[%s6 + $0x4] sm:$0xf] %vm84, %v81
  %87 = vst.msk [vmem:[%s6 + $0x8] sm:$0xf] %vm84, %v82
  %88 = vst.msk [vmem:[%s6 + $0xc] sm:$0xf] %vm84, %v83
  // Predicated region
  $region26: #{resnet_generator_forward.28} parent=0 // pred_check
    _
  $region27: #{resnet_generator_forward.28} parent=0 // pred_check_branch
    %90 = sbr.rel (0) target = $region29
  $region28: #{resnet_generator_forward.28} parent=0 // pred_region
    _
  $region29: #{resnet_generator_forward.28} parent=0 // pred_fallthru
    _
  // Predicated region
  $region30: #{resnet_generator_forward.28} parent=0 // pred_check
    _
  $region31: #{resnet_generator_forward.28} parent=0 // pred_check_branch
    %92 = sbr.rel (0) target = $region33
  $region32: #{resnet_generator_forward.28} parent=0 // pred_region
    _
  $region33: #{resnet_generator_forward.28} parent=0 // pred_fallthru
    _

// kernel: resnet_generator_forward.33
$region0: #{resnet_generator_forward.33}
  #allocation0 [shape = 'u32[]', space=smem, size = 0x4, offset = 0x4, fixed_abs, tag = 'smem constant byte address 0x4 - core index']
  #allocation1 [shape = 'u32[72,128]{1,0:T(1,128)}', space=vmem, size = 0x9000, scoped, tag = 'internal scratch']
  %s0 = inlined_call_operand.vmem [shape: bf16[32,128], index: 0, kind: input, shape index: {}]
  %s1 = inlined_call_operand.vmem [shape: bf16[128,64], index: 1, kind: input, shape index: {}]
  %s2 = inlined_call_operand.vmem [shape: bf16[32,64], index: 2, kind: output, shape index: {0}]
  %s3 = inlined_call_operand.vmem [shape: f32[1,64], index: 3, kind: output, shape index: {1}]
  %s4 = inlined_call_operand.vmem [shape: f32[1,64], index: 4, kind: output, shape index: {2}]
  %5 = xla_tuple %s2, %s3, %s4
  %s6 = sld [smem:[#allocation0]]
  $region38: #{resnet_generator_forward.33} parent=0
    _
  %s8 = ssub.s32 1, %s6
  %s9 = scalar_select 0, %s8, %s6
  // Predicated region
  $region2: #{resnet_generator_forward.33} parent=0 // pred_check
    _
  $region3: #{resnet_generator_forward.33} parent=0 // pred_check_branch
    %11 = sbr.rel (0) target = $region5
  $region4: #{resnet_generator_forward.33} parent=0 // pred_region
    _
  $region5: #{resnet_generator_forward.33} parent=0 // pred_fallthru
    _
  // Predicated region
  $region6: #{resnet_generator_forward.33} parent=0 // pred_check
    _
  $region7: #{resnet_generator_forward.33} parent=0 // pred_check_branch
    %13 = sbr.rel (0) target = $region9
  $region8: #{resnet_generator_forward.33} parent=0 // pred_region
    _
  $region9: #{resnet_generator_forward.33} parent=0 // pred_fallthru
    _
  %v14 = vld [vmem:[%s0] sm:$0xf]
  %v15 = vld [vmem:[%s0 + $0x4] sm:$0xf]
  %v16 = vld [vmem:[%s0 + $0x8] sm:$0xf]
  %v17 = vld [vmem:[%s0 + $0xc] sm:$0xf]
  %v18 = vld [vmem:[%s1] sm:$0xf]
  %v19 = vld [vmem:[%s1 + $0x4] sm:$0xf]
  %v20 = vld [vmem:[%s1 + $0x8] sm:$0xf]
  %v21 = vld [vmem:[%s1 + $0xc] sm:$0xf]
  %v22 = vld [vmem:[%s1 + $0x10] sm:$0xf]
  %v23 = vld [vmem:[%s1 + $0x14] sm:$0xf]
  %v24 = vld [vmem:[%s1 + $0x18] sm:$0xf]
  %v25 = vld [vmem:[%s1 + $0x1c] sm:$0xf]
  %v26 = vld [vmem:[%s1 + $0x20] sm:$0xf]
  %v27 = vld [vmem:[%s1 + $0x24] sm:$0xf]
  %v28 = vld [vmem:[%s1 + $0x28] sm:$0xf]
  %v29 = vld [vmem:[%s1 + $0x2c] sm:$0xf]
  %v30 = vld [vmem:[%s1 + $0x30] sm:$0xf]
  %v31 = vld [vmem:[%s1 + $0x34] sm:$0xf]
  %v32 = vld [vmem:[%s1 + $0x38] sm:$0xf]
  %v33 = vld [vmem:[%s1 + $0x3c] sm:$0xf]
  %v38 = vunpack.c.l.b16 %v14
  %v39 = vunpack.c.l.b16 %v15
  %v40 = vunpack.c.l.b16 %v16
  %v41 = vunpack.c.l.b16 %v17
  %v42 = vpack.c.b16 %v39, %v38
  %v43 = vpack.c.b16 %v41, %v40
  %v62 = vunpack.c.l.b16 %v18
  %v63 = vunpack.c.l.b16 %v19
  %v64 = vunpack.c.l.b16 %v20
  %v65 = vunpack.c.l.b16 %v21
  %v66 = vunpack.c.l.b16 %v22
  %v67 = vunpack.c.l.b16 %v23
  %v68 = vunpack.c.l.b16 %v24
  %v69 = vunpack.c.l.b16 %v25
  %v70 = vunpack.c.l.b16 %v26
  %v71 = vunpack.c.l.b16 %v27
  %v72 = vunpack.c.l.b16 %v28
  %v73 = vunpack.c.l.b16 %v29
  %v74 = vunpack.c.l.b16 %v30
  %v75 = vunpack.c.l.b16 %v31
  %v76 = vunpack.c.l.b16 %v32
  %v77 = vunpack.c.l.b16 %v33
  %v78 = vpack.c.b16 %v63, %v62
  %v79 = vpack.c.b16 %v65, %v64
  %v80 = vpack.c.b16 %v67, %v66
  %v81 = vpack.c.b16 %v69, %v68
  %v82 = vpack.c.b16 %v71, %v70
  %v83 = vpack.c.b16 %v73, %v72
  %v84 = vpack.c.b16 %v75, %v74
  %v85 = vpack.c.b16 %v77, %v76
  %94 = vmatpush.bf16.msra.mxu0 %v85
  %95 = vmatpush.bf16.msra.mxu0 %v84
  %96 = vmatpush.bf16.msra.mxu0 %v83
  %97 = vmatpush.bf16.msra.mxu0 %v82
  %98 = vmatpush.bf16.msra.mxu0 %v81
  %99 = vmatpush.bf16.msra.mxu0 %v80
  %100 = vmatpush.bf16.msra.mxu0 %v79
  %101 = vmatpush.bf16.msra.mxu0 %v78
  %102 = vmatmul.bf16.gmra.mxu0 %v42
  %v103 = vpop.f32.mrf.mxu0
  %v104 = vadd.f32 0.0, %v103
  %v105 = vpop.f32.mrf.mxu0
  %v106 = vadd.f32 0.0, %v105
  %107 = vmatmul.bf16.gmra.mxu0 %v43
  %v108 = vpop.f32.mrf.mxu0
  %v109 = vadd.f32 0.0, %v108
  %v110 = vpop.f32.mrf.mxu0
  %v111 = vadd.f32 0.0, %v110
  %112 = vdwg.mxu0
  %v113 = vpack.c.bf16 %v104, %v104
  %v114 = vpack.c.bf16 %v106, %v106
  %v115 = vpack.c.bf16 %v109, %v109
  %v116 = vpack.c.bf16 %v111, %v111
  %vm117 = vcmask 519168
  %118 = vst.msk [vmem:[%s2] sm:$0xf] %vm117, %v113
  %119 = vst.msk [vmem:[%s2 + $0x4] sm:$0xf] %vm117, %v114
  %120 = vst.msk [vmem:[%s2 + $0x8] sm:$0xf] %vm117, %v115
  %121 = vst.msk [vmem:[%s2 + $0xc] sm:$0xf] %vm117, %v116
  %p122 = scmp.eq.s32.totalorder 0, 0
  // Predicated region
  $region10: #{resnet_generator_forward.33} parent=0 // pred_check
    %p123 = pneg %p122
  $region11: #{resnet_generator_forward.33} parent=0 // pred_check_branch
    %125 = sbr.rel (%p123) target = $region13
  $region12: #{resnet_generator_forward.33} parent=0 // pred_region
    %vm126 = vcmask 516096
    %127 = vst.msk [vmem:[%s3] sm:$0x1] %vm126, 0.0
    %128 = vst.msk [vmem:[%s4] sm:$0x1] %vm126, 0.0
  $region13: #{resnet_generator_forward.33} parent=0 // pred_fallthru
    _
  %v129 = vld [vmem:[%s3] sm:$0x1]
  %vm130 = vcmask 523264
  %v131 = vsel %vm130, %v104, 0.0
  %v132 = vsel %vm130, %v106, 0.0
  %v133 = vadd.f32 %v131, %v132
  %v134 = vsel %vm130, %v109, 0.0
  %v135 = vadd.f32 %v133, %v134
  %v136 = vsel %vm130, %v111, 0.0
  %v137 = vadd.f32 %v135, %v136
  %v138 = vrot.slane %v137, 4
  %v139 = vadd.f32 %v137, %v138
  %v140 = vrot.slane %v139, 2
  %v141 = vadd.f32 %v139, %v140
  %v142 = vrot.slane %v141, 1
  %v143 = vadd.f32 %v141, %v142
  %v144 = vadd.f32 %v129, %v143
  %vm145 = vcmask 516096
  %146 = vst.msk [vmem:[%s3] sm:$0x1] %vm145, %v144
  %v147 = vld [vmem:[%s4] sm:$0x1]
  %v148 = vmul.f32 %v104, %v104
  %v149 = vmul.f32 %v106, %v106
  %v150 = vmul.f32 %v109, %v109
  %v151 = vmul.f32 %v111, %v111
  %v152 = vsel %vm130, %v148, 0.0
  %v153 = vsel %vm130, %v149, 0.0
  %v154 = vadd.f32 %v152, %v153
  %v155 = vsel %vm130, %v150, 0.0
  %v156 = vadd.f32 %v154, %v155
  %v157 = vsel %vm130, %v151, 0.0
  %v158 = vadd.f32 %v156, %v157
  %v159 = vrot.slane %v158, 4
  %v160 = vadd.f32 %v158, %v159
  %v161 = vrot.slane %v160, 2
  %v162 = vadd.f32 %v160, %v161
  %v163 = vrot.slane %v162, 1
  %v164 = vadd.f32 %v162, %v163
  %v165 = vadd.f32 %v147, %v164
  %166 = vst.msk [vmem:[%s4] sm:$0x1] %vm145, %v165
  // Predicated region
  $region14: #{resnet_generator_forward.33} parent=0 // pred_check
    _
  $region15: #{resnet_generator_forward.33} parent=0 // pred_check_branch
    %168 = sbr.rel (0) target = $region17
  $region16: #{resnet_generator_forward.33} parent=0 // pred_region
    _
  $region17: #{resnet_generator_forward.33} parent=0 // pred_fallthru
    _
  // Predicated region
  $region18: #{resnet_generator_forward.33} parent=0 // pred_check
    _
  $region19: #{resnet_generator_forward.33} parent=0 // pred_check_branch
    %170 = sbr.rel (0) target = $region21
  $region20: #{resnet_generator_forward.33} parent=0 // pred_region
    _
  $region21: #{resnet_generator_forward.33} parent=0 // pred_fallthru
    _
  // Predicated region
  $region22: #{resnet_generator_forward.33} parent=0 // pred_check
    _
  $region23: #{resnet_generator_forward.33} parent=0 // pred_check_branch
    %172 = sbr.rel (0) target = $region25
  $region24: #{resnet_generator_forward.33} parent=0 // pred_region
    _
  $region25: #{resnet_generator_forward.33} parent=0 // pred_fallthru
    _
  // Predicated region
  $region26: #{resnet_generator_forward.33} parent=0 // pred_check
    _
  $region27: #{resnet_generator_forward.33} parent=0 // pred_check_branch
    %174 = sbr.rel (0) target = $region29
  $region28: #{resnet_generator_forward.33} parent=0 // pred_region
    _
  $region29: #{resnet_generator_forward.33} parent=0 // pred_fallthru
    _
  // Predicated region
  $region30: #{resnet_generator_forward.33} parent=0 // pred_check
    _
  $region31: #{resnet_generator_forward.33} parent=0 // pred_check_branch
    %176 = sbr.rel (0) target = $region33
  $region32: #{resnet_generator_forward.33} parent=0 // pred_region
    _
  $region33: #{resnet_generator_forward.33} parent=0 // pred_fallthru
    _
  // Predicated region
  $region34: #{resnet_generator_forward.33} parent=0 // pred_check
    _
  $region35: #{resnet_generator_forward.33} parent=0 // pred_check_branch
    %178 = sbr.rel (0) target = $region37
  $region36: #{resnet_generator_forward.33} parent=0 // pred_region
    _
  $region37: #{resnet_generator_forward.33} parent=0 // pred_fallthru
    _

// kernel: resnet_generator_forward.34
$region0: #{resnet_generator_forward.34}
  #allocation0 [shape = 'u32[]', space=smem, size = 0x4, offset = 0x4, fixed_abs, tag = 'smem constant byte address 0x4 - core index']
  #allocation1 [shape = 'u32[72,128]{1,0:T(1,128)}', space=vmem, size = 0x9000, scoped, tag = 'internal scratch']
  %s0 = inlined_call_operand.vmem [shape: bf16[32,64], index: 0, kind: input, shape index: {}]
  %s1 = inlined_call_operand.vmem [shape: f32[1,64], index: 1, kind: input, shape index: {}]
  %s2 = inlined_call_operand.vmem [shape: f32[1,64], index: 2, kind: input, shape index: {}]
  %s3 = inlined_call_operand.vmem [shape: f32[1,64], index: 3, kind: input, shape index: {}]
  %s4 = inlined_call_operand.vmem [shape: f32[1,64], index: 4, kind: input, shape index: {}]
  %s5 = inlined_call_operand.vmem [shape: bf16[32,64], index: 5, kind: output, shape index: {}]
  %s6 = sld [smem:[#allocation0]]
  $region30: #{resnet_generator_forward.34} parent=0
    _
  %s8 = ssub.s32 1, %s6
  %s9 = scalar_select 0, %s8, %s6
  // Predicated region
  $region2: #{resnet_generator_forward.34} parent=0 // pred_check
    _
  $region3: #{resnet_generator_forward.34} parent=0 // pred_check_branch
    %11 = sbr.rel (0) target = $region5
  $region4: #{resnet_generator_forward.34} parent=0 // pred_region
    _
  $region5: #{resnet_generator_forward.34} parent=0 // pred_fallthru
    _
  // Predicated region
  $region6: #{resnet_generator_forward.34} parent=0 // pred_check
    _
  $region7: #{resnet_generator_forward.34} parent=0 // pred_check_branch
    %13 = sbr.rel (0) target = $region9
  $region8: #{resnet_generator_forward.34} parent=0 // pred_region
    _
  $region9: #{resnet_generator_forward.34} parent=0 // pred_fallthru
    _
  // Predicated region
  $region10: #{resnet_generator_forward.34} parent=0 // pred_check
    _
  $region11: #{resnet_generator_forward.34} parent=0 // pred_check_branch
    %15 = sbr.rel (0) target = $region13
  $region12: #{resnet_generator_forward.34} parent=0 // pred_region
    _
  $region13: #{resnet_generator_forward.34} parent=0 // pred_fallthru
    _
  // Predicated region
  $region14: #{resnet_generator_forward.34} parent=0 // pred_check
    _
  $region15: #{resnet_generator_forward.34} parent=0 // pred_check_branch
    %17 = sbr.rel (0) target = $region17
  $region16: #{resnet_generator_forward.34} parent=0 // pred_region
    _
  $region17: #{resnet_generator_forward.34} parent=0 // pred_fallthru
    _
  // Predicated region
  $region18: #{resnet_generator_forward.34} parent=0 // pred_check
    _
  $region19: #{resnet_generator_forward.34} parent=0 // pred_check_branch
    %19 = sbr.rel (0) target = $region21
  $region20: #{resnet_generator_forward.34} parent=0 // pred_region
    _
  $region21: #{resnet_generator_forward.34} parent=0 // pred_fallthru
    _
  %v20 = vld [vmem:[%s1] sm:$0x1]
  %v21 = vmul.f32 %v20, 0.0078125
  %v22 = vld [vmem:[%s2] sm:$0x1]
  %v23 = vmul.f32 %v22, 0.0078125
  %v24 = vmul.f32 %v21, %v21
  %v25 = vsub.f32 %v23, %v24
  %v26 = vmax.f32 %v25, 0.0
  %v27 = vld [vmem:[%s3] sm:$0x1]
  %v28 = vadd.f32 %v26, 1e-05
  %v29 = vrsqrt.pop %v28
  %v30 = vmul.f32 %v29, %v28
  %v31 = vmul.f32 %v30, %v29
  %v32 = vmul.f32 0.5, %v31
  %v33 = vsub.f32 1.5, %v32
  %v34 = vmul.f32 %v29, %v33
  %vm35 = vweird.f32 %v28
  %vm36 = vweird.f32 %v29
  %vm37 = vmor %vm35, %vm36
  %v38 = vsel %vm37, %v29, %v34
  %v39 = vmul.f32 %v27, %v38
  %v40 = vld [vmem:[%s4] sm:$0x1]
  %v41 = vmul.f32 %v21, %v39
  %v42 = vsub.f32 %v40, %v41
  %v43 = vld [vmem:[%s0] sm:$0xf]
  %v44 = vld [vmem:[%s0 + $0x4] sm:$0xf]
  %v45 = vld [vmem:[%s0 + $0x8] sm:$0xf]
  %v46 = vld [vmem:[%s0 + $0xc] sm:$0xf]
  %v47 = vunpack.c.l.bf16 %v43
  %v48 = vunpack.c.l.bf16 %v44
  %v49 = vunpack.c.l.bf16 %v45
  %v50 = vunpack.c.l.bf16 %v46
  %v52 = vperm.slane %v39, 0
  %v54 = vmul.f32 %v47, %v52
  %v55 = vmul.f32 %v48, %v52
  %v56 = vmul.f32 %v49, %v52
  %v57 = vmul.f32 %v50, %v52
  %v59 = vperm.slane %v42, 0
  %v61 = vadd.f32 %v54, %v59
  %v62 = vadd.f32 %v55, %v59
  %v63 = vadd.f32 %v56, %v59
  %v64 = vadd.f32 %v57, %v59
  %v65 = vmax.f32 %v61, 0.0
  %v66 = vmax.f32 %v62, 0.0
  %v67 = vmax.f32 %v63, 0.0
  %v68 = vmax.f32 %v64, 0.0
  %v69 = vpack.c.bf16 %v65, %v65
  %v70 = vpack.c.bf16 %v66, %v66
  %v71 = vpack.c.bf16 %v67, %v67
  %v72 = vpack.c.bf16 %v68, %v68
  %vm73 = vcmask 519168
  %74 = vst.msk [vmem:[%s5] sm:$0xf] %vm73, %v69
  %75 = vst.msk [vmem:[%s5 + $0x4] sm:$0xf] %vm73, %v70
  %76 = vst.msk [vmem:[%s5 + $0x8] sm:$0xf] %vm73, %v71
  %77 = vst.msk [vmem:[%s5 + $0xc] sm:$0xf] %vm73, %v72
  // Predicated region
  $region22: #{resnet_generator_forward.34} parent=0 // pred_check
    _
  $region23: #{resnet_generator_forward.34} parent=0 // pred_check_branch
    %79 = sbr.rel (0) target = $region25
  $region24: #{resnet_generator_forward.34} parent=0 // pred_region
    _
  $region25: #{resnet_generator_forward.34} parent=0 // pred_fallthru
    _
  // Predicated region
  $region26: #{resnet_generator_forward.34} parent=0 // pred_check
    _
  $region27: #{resnet_generator_forward.34} parent=0 // pred_check_branch
    %81 = sbr.rel (0) target = $region29
  $region28: #{resnet_generator_forward.34} parent=0 // pred_region
    _
  $region29: #{resnet_generator_forward.34} parent=0 // pred_fallthru
    _

// kernel: resnet_generator_forward.35
$region0: #{resnet_generator_forward.35}
  #allocation0 [shape = 'u32[]', space=smem, size = 0x4, offset = 0x4, fixed_abs, tag = 'smem constant byte address 0x4 - core index']
  #allocation1 [shape = 'u32[72,128]{1,0:T(1,128)}', space=vmem, size = 0x9000, scoped, tag = 'internal scratch']
  %s0 = inlined_call_operand.vmem [shape: bf16[128,128], index: 0, kind: input, shape index: {}]
  %s1 = inlined_call_operand.vmem [shape: bf16[128,32], index: 1, kind: input, shape index: {}]
  %s2 = inlined_call_operand.vmem [shape: bf16[128,32], index: 2, kind: output, shape index: {0}]
  %s3 = inlined_call_operand.vmem [shape: f32[1,32], index: 3, kind: output, shape index: {1}]
  %s4 = inlined_call_operand.vmem [shape: f32[1,32], index: 4, kind: output, shape index: {2}]
  %5 = xla_tuple %s2, %s3, %s4
  %s6 = sld [smem:[#allocation0]]
  $region38: #{resnet_generator_forward.35} parent=0
    _
  %s8 = ssub.s32 1, %s6
  %s9 = scalar_select 0, %s8, %s6
  // Predicated region
  $region2: #{resnet_generator_forward.35} parent=0 // pred_check
    _
  $region3: #{resnet_generator_forward.35} parent=0 // pred_check_branch
    %11 = sbr.rel (0) target = $region5
  $region4: #{resnet_generator_forward.35} parent=0 // pred_region
    _
  $region5: #{resnet_generator_forward.35} parent=0 // pred_fallthru
    _
  // Predicated region
  $region6: #{resnet_generator_forward.35} parent=0 // pred_check
    _
  $region7: #{resnet_generator_forward.35} parent=0 // pred_check_branch
    %13 = sbr.rel (0) target = $region9
  $region8: #{resnet_generator_forward.35} parent=0 // pred_region
    _
  $region9: #{resnet_generator_forward.35} parent=0 // pred_fallthru
    _
  %v14 = vld [vmem:[%s0] sm:$0xf]
  %v15 = vld [vmem:[%s0 + $0x4] sm:$0xf]
  %v16 = vld [vmem:[%s0 + $0x8] sm:$0xf]
  %v17 = vld [vmem:[%s0 + $0xc] sm:$0xf]
  %v18 = vld [vmem:[%s0 + $0x10] sm:$0xf]
  %v19 = vld [vmem:[%s0 + $0x14] sm:$0xf]
  %v20 = vld [vmem:[%s0 + $0x18] sm:$0xf]
  %v21 = vld [vmem:[%s0 + $0x1c] sm:$0xf]
  %v22 = vld [vmem:[%s0 + $0x20] sm:$0xf]
  %v23 = vld [vmem:[%s0 + $0x24] sm:$0xf]
  %v24 = vld [vmem:[%s0 + $0x28] sm:$0xf]
  %v25 = vld [vmem:[%s0 + $0x2c] sm:$0xf]
  %v26 = vld [vmem:[%s0 + $0x30] sm:$0xf]
  %v27 = vld [vmem:[%s0 + $0x34] sm:$0xf]
  %v28 = vld [vmem:[%s0 + $0x38] sm:$0xf]
  %v29 = vld [vmem:[%s0 + $0x3c] sm:$0xf]
  %v30 = vld [vmem:[%s1] sm:$0xf]
  %v31 = vld [vmem:[%s1 + $0x4] sm:$0xf]
  %v32 = vld [vmem:[%s1 + $0x8] sm:$0xf]
  %v33 = vld [vmem:[%s1 + $0xc] sm:$0xf]
  %v34 = vld [vmem:[%s1 + $0x10] sm:$0xf]
  %v35 = vld [vmem:[%s1 + $0x14] sm:$0xf]
  %v36 = vld [vmem:[%s1 + $0x18] sm:$0xf]
  %v37 = vld [vmem:[%s1 + $0x1c] sm:$0xf]
  %v38 = vld [vmem:[%s1 + $0x20] sm:$0xf]
  %v39 = vld [vmem:[%s1 + $0x24] sm:$0xf]
  %v40 = vld [vmem:[%s1 + $0x28] sm:$0xf]
  %v41 = vld [vmem:[%s1 + $0x2c] sm:$0xf]
  %v42 = vld [vmem:[%s1 + $0x30] sm:$0xf]
  %v43 = vld [vmem:[%s1 + $0x34] sm:$0xf]
  %v44 = vld [vmem:[%s1 + $0x38] sm:$0xf]
  %v45 = vld [vmem:[%s1 + $0x3c] sm:$0xf]
  %v62 = vunpack.c.l.b16 %v14
  %v63 = vunpack.c.l.b16 %v15
  %v64 = vunpack.c.l.b16 %v16
  %v65 = vunpack.c.l.b16 %v17
  %v66 = vunpack.c.l.b16 %v18
  %v67 = vunpack.c.l.b16 %v19
  %v68 = vunpack.c.l.b16 %v20
  %v69 = vunpack.c.l.b16 %v21
  %v70 = vunpack.c.l.b16 %v22
  %v71 = vunpack.c.l.b16 %v23
  %v72 = vunpack.c.l.b16 %v24
  %v73 = vunpack.c.l.b16 %v25
  %v74 = vunpack.c.l.b16 %v26
  %v75 = vunpack.c.l.b16 %v27
  %v76 = vunpack.c.l.b16 %v28
  %v77 = vunpack.c.l.b16 %v29
  %v78 = vpack.c.b16 %v63, %v62
  %v79 = vpack.c.b16 %v65, %v64
  %v80 = vpack.c.b16 %v67, %v66
  %v81 = vpack.c.b16 %v69, %v68
  %v82 = vpack.c.b16 %v71, %v70
  %v83 = vpack.c.b16 %v73, %v72
  %v84 = vpack.c.b16 %v75, %v74
  %v85 = vpack.c.b16 %v77, %v76
  %v110 = vunpack.c.l.b16 %v30
  %v111 = vunpack.c.l.b16 %v31
  %v112 = vunpack.c.l.b16 %v32
  %v113 = vunpack.c.l.b16 %v33
  %v114 = vunpack.c.l.b16 %v34
  %v115 = vunpack.c.l.b16 %v35
  %v116 = vunpack.c.l.b16 %v36
  %v117 = vunpack.c.l.b16 %v37
  %v118 = vunpack.c.l.b16 %v38
  %v119 = vunpack.c.l.b16 %v39
  %v120 = vunpack.c.l.b16 %v40
  %v121 = vunpack.c.l.b16 %v41
  %v122 = vunpack.c.l.b16 %v42
  %v123 = vunpack.c.l.b16 %v43
  %v124 = vunpack.c.l.b16 %v44
  %v125 = vunpack.c.l.b16 %v45
  %v126 = vpack.c.b16 %v111, %v110
  %v127 = vpack.c.b16 %v113, %v112
  %v128 = vpack.c.b16 %v115, %v114
  %v129 = vpack.c.b16 %v117, %v116
  %v130 = vpack.c.b16 %v119, %v118
  %v131 = vpack.c.b16 %v121, %v120
  %v132 = vpack.c.b16 %v123, %v122
  %v133 = vpack.c.b16 %v125, %v124
  %142 = vmatpush.bf16.msra.mxu0 %v133
  %143 = vmatpush.bf16.msra.mxu0 %v132
  %144 = vmatpush.bf16.msra.mxu0 %v131
  %145 = vmatpush.bf16.msra.mxu0 %v130
  %146 = vmatpush.bf16.msra.mxu0 %v129
  %147 = vmatpush.bf16.msra.mxu0 %v128
  %148 = vmatpush.bf16.msra.mxu0 %v127
  %149 = vmatpush.bf16.msra.mxu0 %v126
  %150 = vmatmul.bf16.gmra.mxu0 %v78
  %v151 = vpop.f32.mrf.mxu0
  %v152 = vadd.f32 0.0, %v151
  %v153 = vpop.f32.mrf.mxu0
  %v154 = vadd.f32 0.0, %v153
  %155 = vmatmul.bf16.gmra.mxu0 %v79
  %v156 = vpop.f32.mrf.mxu0
  %v157 = vadd.f32 0.0, %v156
  %v158 = vpop.f32.mrf.mxu0
  %v159 = vadd.f32 0.0, %v158
  %160 = vmatmul.bf16.gmra.mxu0 %v80
  %v161 = vpop.f32.mrf.mxu0
  %v162 = vadd.f32 0.0, %v161
  %v163 = vpop.f32.mrf.mxu0
  %v164 = vadd.f32 0.0, %v163
  %165 = vmatmul.bf16.gmra.mxu0 %v81
  %v166 = vpop.f32.mrf.mxu0
  %v167 = vadd.f32 0.0, %v166
  %v168 = vpop.f32.mrf.mxu0
  %v169 = vadd.f32 0.0, %v168
  %170 = vmatmul.bf16.gmra.mxu0 %v82
  %v171 = vpop.f32.mrf.mxu0
  %v172 = vadd.f32 0.0, %v171
  %v173 = vpop.f32.mrf.mxu0
  %v174 = vadd.f32 0.0, %v173
  %175 = vmatmul.bf16.gmra.mxu0 %v83
  %v176 = vpop.f32.mrf.mxu0
  %v177 = vadd.f32 0.0, %v176
  %v178 = vpop.f32.mrf.mxu0
  %v179 = vadd.f32 0.0, %v178
  %180 = vmatmul.bf16.gmra.mxu0 %v84
  %v181 = vpop.f32.mrf.mxu0
  %v182 = vadd.f32 0.0, %v181
  %v183 = vpop.f32.mrf.mxu0
  %v184 = vadd.f32 0.0, %v183
  %185 = vmatmul.bf16.gmra.mxu0 %v85
  %v186 = vpop.f32.mrf.mxu0
  %v187 = vadd.f32 0.0, %v186
  %v188 = vpop.f32.mrf.mxu0
  %v189 = vadd.f32 0.0, %v188
  %190 = vdwg.mxu0
  %v191 = vpack.c.bf16 %v152, %v152
  %v192 = vpack.c.bf16 %v154, %v154
  %v193 = vpack.c.bf16 %v157, %v157
  %v194 = vpack.c.bf16 %v159, %v159
  %v195 = vpack.c.bf16 %v162, %v162
  %v196 = vpack.c.bf16 %v164, %v164
  %v197 = vpack.c.bf16 %v167, %v167
  %v198 = vpack.c.bf16 %v169, %v169
  %v199 = vpack.c.bf16 %v172, %v172
  %v200 = vpack.c.bf16 %v174, %v174
  %v201 = vpack.c.bf16 %v177, %v177
  %v202 = vpack.c.bf16 %v179, %v179
  %v203 = vpack.c.bf16 %v182, %v182
  %v204 = vpack.c.bf16 %v184, %v184
  %v205 = vpack.c.bf16 %v187, %v187
  %v206 = vpack.c.bf16 %v189, %v189
  %vm207 = vcmask 257024
  %208 = vst.msk [vmem:[%s2] sm:$0xf] %vm207, %v191
  %209 = vst.msk [vmem:[%s2 + $0x4] sm:$0xf] %vm207, %v192
  %210 = vst.msk [vmem:[%s2 + $0x8] sm:$0xf] %vm207, %v193
  %211 = vst.msk [vmem:[%s2 + $0xc] sm:$0xf] %vm207, %v194
  %212 = vst.msk [vmem:[%s2 + $0x10] sm:$0xf] %vm207, %v195
  %213 = vst.msk [vmem:[%s2 + $0x14] sm:$0xf] %vm207, %v196
  %214 = vst.msk [vmem:[%s2 + $0x18] sm:$0xf] %vm207, %v197
  %215 = vst.msk [vmem:[%s2 + $0x1c] sm:$0xf] %vm207, %v198
  %216 = vst.msk [vmem:[%s2 + $0x20] sm:$0xf] %vm207, %v199
  %217 = vst.msk [vmem:[%s2 + $0x24] sm:$0xf] %vm207, %v200
  %218 = vst.msk [vmem:[%s2 + $0x28] sm:$0xf] %vm207, %v201
  %219 = vst.msk [vmem:[%s2 + $0x2c] sm:$0xf] %vm207, %v202
  %220 = vst.msk [vmem:[%s2 + $0x30] sm:$0xf] %vm207, %v203
  %221 = vst.msk [vmem:[%s2 + $0x34] sm:$0xf] %vm207, %v204
  %222 = vst.msk [vmem:[%s2 + $0x38] sm:$0xf] %vm207, %v205
  %223 = vst.msk [vmem:[%s2 + $0x3c] sm:$0xf] %vm207, %v206
  %p224 = scmp.eq.s32.totalorder 0, 0
  // Predicated region
  $region10: #{resnet_generator_forward.35} parent=0 // pred_check
    %p225 = pneg %p224
  $region11: #{resnet_generator_forward.35} parent=0 // pred_check_branch
    %227 = sbr.rel (%p225) target = $region13
  $region12: #{resnet_generator_forward.35} parent=0 // pred_region
    %vm228 = vcmask 253952
    %229 = vst.msk [vmem:[%s3] sm:$0x1] %vm228, 0.0
    %230 = vst.msk [vmem:[%s4] sm:$0x1] %vm228, 0.0
  $region13: #{resnet_generator_forward.35} parent=0 // pred_fallthru
    _
  %v231 = vld [vmem:[%s3] sm:$0x1]
  %vm232 = vcmask 261120
  %v233 = vsel %vm232, %v152, 0.0
  %v234 = vsel %vm232, %v154, 0.0
  %v235 = vadd.f32 %v233, %v234
  %v236 = vsel %vm232, %v157, 0.0
  %v237 = vadd.f32 %v235, %v236
  %v238 = vsel %vm232, %v159, 0.0
  %v239 = vadd.f32 %v237, %v238
  %v240 = vsel %vm232, %v162, 0.0
  %v241 = vadd.f32 %v239, %v240
  %v242 = vsel %vm232, %v164, 0.0
  %v243 = vadd.f32 %v241, %v242
  %v244 = vsel %vm232, %v167, 0.0
  %v245 = vadd.f32 %v243, %v244
  %v246 = vsel %vm232, %v169, 0.0
  %v247 = vadd.f32 %v245, %v246
  %v248 = vsel %vm232, %v172, 0.0
  %v249 = vadd.f32 %v247, %v248
  %v250 = vsel %vm232, %v174, 0.0
  %v251 = vadd.f32 %v249, %v250
  %v252 = vsel %vm232, %v177, 0.0
  %v253 = vadd.f32 %v251, %v252
  %v254 = vsel %vm232, %v179, 0.0
  %v255 = vadd.f32 %v253, %v254
  %v256 = vsel %vm232, %v182, 0.0
  %v257 = vadd.f32 %v255, %v256
  %v258 = vsel %vm232, %v184, 0.0
  %v259 = vadd.f32 %v257, %v258
  %v260 = vsel %vm232, %v187, 0.0
  %v261 = vadd.f32 %v259, %v260
  %v262 = vsel %vm232, %v189, 0.0
  %v263 = vadd.f32 %v261, %v262
  %v264 = vrot.slane %v263, 4
  %v265 = vadd.f32 %v263, %v264
  %v266 = vrot.slane %v265, 2
  %v267 = vadd.f32 %v265, %v266
  %v268 = vrot.slane %v267, 1
  %v269 = vadd.f32 %v267, %v268
  %v270 = vadd.f32 %v231, %v269
  %vm271 = vcmask 253952
  %272 = vst.msk [vmem:[%s3] sm:$0x1] %vm271, %v270
  %v273 = vld [vmem:[%s4] sm:$0x1]
  %v274 = vmul.f32 %v152, %v152
  %v275 = vmul.f32 %v154, %v154
  %v276 = vmul.f32 %v157, %v157
  %v277 = vmul.f32 %v159, %v159
  %v278 = vmul.f32 %v162, %v162
  %v279 = vmul.f32 %v164, %v164
  %v280 = vmul.f32 %v167, %v167
  %v281 = vmul.f32 %v169, %v169
  %v282 = vmul.f32 %v172, %v172
  %v283 = vmul.f32 %v174, %v174
  %v284 = vmul.f32 %v177, %v177
  %v285 = vmul.f32 %v179, %v179
  %v286 = vmul.f32 %v182, %v182
  %v287 = vmul.f32 %v184, %v184
  %v288 = vmul.f32 %v187, %v187
  %v289 = vmul.f32 %v189, %v189
  %v290 = vsel %vm232, %v274, 0.0
  %v291 = vsel %vm232, %v275, 0.0
  %v292 = vadd.f32 %v290, %v291
  %v293 = vsel %vm232, %v276, 0.0
  %v294 = vadd.f32 %v292, %v293
  %v295 = vsel %vm232, %v277, 0.0
  %v296 = vadd.f32 %v294, %v295
  %v297 = vsel %vm232, %v278, 0.0
  %v298 = vadd.f32 %v296, %v297
  %v299 = vsel %vm232, %v279, 0.0
  %v300 = vadd.f32 %v298, %v299
  %v301 = vsel %vm232, %v280, 0.0
  %v302 = vadd.f32 %v300, %v301
  %v303 = vsel %vm232, %v281, 0.0
  %v304 = vadd.f32 %v302, %v303
  %v305 = vsel %vm232, %v282, 0.0
  %v306 = vadd.f32 %v304, %v305
  %v307 = vsel %vm232, %v283, 0.0
  %v308 = vadd.f32 %v306, %v307
  %v309 = vsel %vm232, %v284, 0.0
  %v310 = vadd.f32 %v308, %v309
  %v311 = vsel %vm232, %v285, 0.0
  %v312 = vadd.f32 %v310, %v311
  %v313 = vsel %vm232, %v286, 0.0
  %v314 = vadd.f32 %v312, %v313
  %v315 = vsel %vm232, %v287, 0.0
  %v316 = vadd.f32 %v314, %v315
  %v317 = vsel %vm232, %v288, 0.0
  %v318 = vadd.f32 %v316, %v317
  %v319 = vsel %vm232, %v289, 0.0
  %v320 = vadd.f32 %v318, %v319
  %v321 = vrot.slane %v320, 4
  %v322 = vadd.f32 %v320, %v321
  %v323 = vrot.slane %v322, 2
  %v324 = vadd.f32 %v322, %v323
  %v325 = vrot.slane %v324, 1
  %v326 = vadd.f32 %v324, %v325
  %v327 = vadd.f32 %v273, %v326
  %328 = vst.msk [vmem:[%s4] sm:$0x1] %vm271, %v327
  // Predicated region
  $region14: #{resnet_generator_forward.35} parent=0 // pred_check
    _
  $region15: #{resnet_generator_forward.35} parent=0 // pred_check_branch
    %330 = sbr.rel (0) target = $region17
  $region16: #{resnet_generator_forward.35} parent=0 // pred_region
    _
  $region17: #{resnet_generator_forward.35} parent=0 // pred_fallthru
    _
  // Predicated region
  $region18: #{resnet_generator_forward.35} parent=0 // pred_check
    _
  $region19: #{resnet_generator_forward.35} parent=0 // pred_check_branch
    %332 = sbr.rel (0) target = $region21
  $region20: #{resnet_generator_forward.35} parent=0 // pred_region
    _
  $region21: #{resnet_generator_forward.35} parent=0 // pred_fallthru
    _
  // Predicated region
  $region22: #{resnet_generator_forward.35} parent=0 // pred_check
    _
  $region23: #{resnet_generator_forward.35} parent=0 // pred_check_branch
    %334 = sbr.rel (0) target = $region25
  $region24: #{resnet_generator_forward.35} parent=0 // pred_region
    _
  $region25: #{resnet_generator_forward.35} parent=0 // pred_fallthru
    _
  // Predicated region
  $region26: #{resnet_generator_forward.35} parent=0 // pred_check
    _
  $region27: #{resnet_generator_forward.35} parent=0 // pred_check_branch
    %336 = sbr.rel (0) target = $region29
  $region28: #{resnet_generator_forward.35} parent=0 // pred_region
    _
  $region29: #{resnet_generator_forward.35} parent=0 // pred_fallthru
    _
  // Predicated region
  $region30: #{resnet_generator_forward.35} parent=0 // pred_check
    _
  $region31: #{resnet_generator_forward.35} parent=0 // pred_check_branch
    %338 = sbr.rel (0) target = $region33
  $region32: #{resnet_generator_forward.35} parent=0 // pred_region
    _
  $region33: #{resnet_generator_forward.35} parent=0 // pred_fallthru
    _
  // Predicated region
  $region34: #{resnet_generator_forward.35} parent=0 // pred_check
    _
  $region35: #{resnet_generator_forward.35} parent=0 // pred_check_branch
    %340 = sbr.rel (0) target = $region37
  $region36: #{resnet_generator_forward.35} parent=0 // pred_region
    _
  $region37: #{resnet_generator_forward.35} parent=0 // pred_fallthru
    _

// kernel: resnet_generator_forward.36
$region0: #{resnet_generator_forward.36}
  #allocation0 [shape = 'u32[]', space=smem, size = 0x4, offset = 0x4, fixed_abs, tag = 'smem constant byte address 0x4 - core index']
  #allocation1 [shape = 'u32[72,128]{1,0:T(1,128)}', space=vmem, size = 0x9000, scoped, tag = 'internal scratch']
  %s0 = inlined_call_operand.vmem [shape: bf16[128,32], index: 0, kind: input, shape index: {}]
  %s1 = inlined_call_operand.vmem [shape: f32[1,32], index: 1, kind: input, shape index: {}]
  %s2 = inlined_call_operand.vmem [shape: f32[1,32], index: 2, kind: input, shape index: {}]
  %s3 = inlined_call_operand.vmem [shape: f32[1,32], index: 3, kind: input, shape index: {}]
  %s4 = inlined_call_operand.vmem [shape: f32[1,32], index: 4, kind: input, shape index: {}]
  %s5 = inlined_call_operand.vmem [shape: bf16[128,32], index: 5, kind: output, shape index: {}]
  %s6 = sld [smem:[#allocation0]]
  $region30: #{resnet_generator_forward.36} parent=0
    _
  %s8 = ssub.s32 1, %s6
  %s9 = scalar_select 0, %s8, %s6
  // Predicated region
  $region2: #{resnet_generator_forward.36} parent=0 // pred_check
    _
  $region3: #{resnet_generator_forward.36} parent=0 // pred_check_branch
    %11 = sbr.rel (0) target = $region5
  $region4: #{resnet_generator_forward.36} parent=0 // pred_region
    _
  $region5: #{resnet_generator_forward.36} parent=0 // pred_fallthru
    _
  // Predicated region
  $region6: #{resnet_generator_forward.36} parent=0 // pred_check
    _
  $region7: #{resnet_generator_forward.36} parent=0 // pred_check_branch
    %13 = sbr.rel (0) target = $region9
  $region8: #{resnet_generator_forward.36} parent=0 // pred_region
    _
  $region9: #{resnet_generator_forward.36} parent=0 // pred_fallthru
    _
  // Predicated region
  $region10: #{resnet_generator_forward.36} parent=0 // pred_check
    _
  $region11: #{resnet_generator_forward.36} parent=0 // pred_check_branch
    %15 = sbr.rel (0) target = $region13
  $region12: #{resnet_generator_forward.36} parent=0 // pred_region
    _
  $region13: #{resnet_generator_forward.36} parent=0 // pred_fallthru
    _
  // Predicated region
  $region14: #{resnet_generator_forward.36} parent=0 // pred_check
    _
  $region15: #{resnet_generator_forward.36} parent=0 // pred_check_branch
    %17 = sbr.rel (0) target = $region17
  $region16: #{resnet_generator_forward.36} parent=0 // pred_region
    _
  $region17: #{resnet_generator_forward.36} parent=0 // pred_fallthru
    _
  // Predicated region
  $region18: #{resnet_generator_forward.36} parent=0 // pred_check
    _
  $region19: #{resnet_generator_forward.36} parent=0 // pred_check_branch
    %19 = sbr.rel (0) target = $region21
  $region20: #{resnet_generator_forward.36} parent=0 // pred_region
    _
  $region21: #{resnet_generator_forward.36} parent=0 // pred_fallthru
    _
  %v20 = vld [vmem:[%s1] sm:$0x1]
  %v21 = vmul.f32 %v20, 0.001953125
  %v22 = vld [vmem:[%s2] sm:$0x1]
  %v23 = vmul.f32 %v22, 0.001953125
  %v24 = vmul.f32 %v21, %v21
  %v25 = vsub.f32 %v23, %v24
  %v26 = vmax.f32 %v25, 0.0
  %v27 = vld [vmem:[%s3] sm:$0x1]
  %v28 = vadd.f32 %v26, 1e-05
  %v29 = vrsqrt.pop %v28
  %v30 = vmul.f32 %v29, %v28
  %v31 = vmul.f32 %v30, %v29
  %v32 = vmul.f32 0.5, %v31
  %v33 = vsub.f32 1.5, %v32
  %v34 = vmul.f32 %v29, %v33
  %vm35 = vweird.f32 %v28
  %vm36 = vweird.f32 %v29
  %vm37 = vmor %vm35, %vm36
  %v38 = vsel %vm37, %v29, %v34
  %v39 = vmul.f32 %v27, %v38
  %v40 = vld [vmem:[%s4] sm:$0x1]
  %v41 = vmul.f32 %v21, %v39
  %v42 = vsub.f32 %v40, %v41
  %v43 = vld [vmem:[%s0] sm:$0xf]
  %v44 = vld [vmem:[%s0 + $0x4] sm:$0xf]
  %v45 = vld [vmem:[%s0 + $0x8] sm:$0xf]
  %v46 = vld [vmem:[%s0 + $0xc] sm:$0xf]
  %v47 = vld [vmem:[%s0 + $0x10] sm:$0xf]
  %v48 = vld [vmem:[%s0 + $0x14] sm:$0xf]
  %v49 = vld [vmem:[%s0 + $0x18] sm:$0xf]
  %v50 = vld [vmem:[%s0 + $0x1c] sm:$0xf]
  %v51 = vld [vmem:[%s0 + $0x20] sm:$0xf]
  %v52 = vld [vmem:[%s0 + $0x24] sm:$0xf]
  %v53 = vld [vmem:[%s0 + $0x28] sm:$0xf]
  %v54 = vld [vmem:[%s0 + $0x2c] sm:$0xf]
  %v55 = vld [vmem:[%s0 + $0x30] sm:$0xf]
  %v56 = vld [vmem:[%s0 + $0x34] sm:$0xf]
  %v57 = vld [vmem:[%s0 + $0x38] sm:$0xf]
  %v58 = vld [vmem:[%s0 + $0x3c] sm:$0xf]
  %v59 = vunpack.c.l.bf16 %v43
  %v60 = vunpack.c.l.bf16 %v44
  %v61 = vunpack.c.l.bf16 %v45
  %v62 = vunpack.c.l.bf16 %v46
  %v63 = vunpack.c.l.bf16 %v47
  %v64 = vunpack.c.l.bf16 %v48
  %v65 = vunpack.c.l.bf16 %v49
  %v66 = vunpack.c.l.bf16 %v50
  %v67 = vunpack.c.l.bf16 %v51
  %v68 = vunpack.c.l.bf16 %v52
  %v69 = vunpack.c.l.bf16 %v53
  %v70 = vunpack.c.l.bf16 %v54
  %v71 = vunpack.c.l.bf16 %v55
  %v72 = vunpack.c.l.bf16 %v56
  %v73 = vunpack.c.l.bf16 %v57
  %v74 = vunpack.c.l.bf16 %v58
  %v76 = vperm.slane %v39, 0
  %v78 = vmul.f32 %v59, %v76
  %v79 = vmul.f32 %v60, %v76
  %v80 = vmul.f32 %v61, %v76
  %v81 = vmul.f32 %v62, %v76
  %v82 = vmul.f32 %v63, %v76
  %v83 = vmul.f32 %v64, %v76
  %v84 = vmul.f32 %v65, %v76
  %v85 = vmul.f32 %v66, %v76
  %v86 = vmul.f32 %v67, %v76
  %v87 = vmul.f32 %v68, %v76
  %v88 = vmul.f32 %v69, %v76
  %v89 = vmul.f32 %v70, %v76
  %v90 = vmul.f32 %v71, %v76
  %v91 = vmul.f32 %v72, %v76
  %v92 = vmul.f32 %v73, %v76
  %v93 = vmul.f32 %v74, %v76
  %v95 = vperm.slane %v42, 0
  %v97 = vadd.f32 %v78, %v95
  %v98 = vadd.f32 %v79, %v95
  %v99 = vadd.f32 %v80, %v95
  %v100 = vadd.f32 %v81, %v95
  %v101 = vadd.f32 %v82, %v95
  %v102 = vadd.f32 %v83, %v95
  %v103 = vadd.f32 %v84, %v95
  %v104 = vadd.f32 %v85, %v95
  %v105 = vadd.f32 %v86, %v95
  %v106 = vadd.f32 %v87, %v95
  %v107 = vadd.f32 %v88, %v95
  %v108 = vadd.f32 %v89, %v95
  %v109 = vadd.f32 %v90, %v95
  %v110 = vadd.f32 %v91, %v95
  %v111 = vadd.f32 %v92, %v95
  %v112 = vadd.f32 %v93, %v95
  %v113 = vmax.f32 %v97, 0.0
  %v114 = vmax.f32 %v98, 0.0
  %v115 = vmax.f32 %v99, 0.0
  %v116 = vmax.f32 %v100, 0.0
  %v117 = vmax.f32 %v101, 0.0
  %v118 = vmax.f32 %v102, 0.0
  %v119 = vmax.f32 %v103, 0.0
  %v120 = vmax.f32 %v104, 0.0
  %v121 = vmax.f32 %v105, 0.0
  %v122 = vmax.f32 %v106, 0.0
  %v123 = vmax.f32 %v107, 0.0
  %v124 = vmax.f32 %v108, 0.0
  %v125 = vmax.f32 %v109, 0.0
  %v126 = vmax.f32 %v110, 0.0
  %v127 = vmax.f32 %v111, 0.0
  %v128 = vmax.f32 %v112, 0.0
  %v129 = vpack.c.bf16 %v113, %v113
  %v130 = vpack.c.bf16 %v114, %v114
  %v131 = vpack.c.bf16 %v115, %v115
  %v132 = vpack.c.bf16 %v116, %v116
  %v133 = vpack.c.bf16 %v117, %v117
  %v134 = vpack.c.bf16 %v118, %v118
  %v135 = vpack.c.bf16 %v119, %v119
  %v136 = vpack.c.bf16 %v120, %v120
  %v137 = vpack.c.bf16 %v121, %v121
  %v138 = vpack.c.bf16 %v122, %v122
  %v139 = vpack.c.bf16 %v123, %v123
  %v140 = vpack.c.bf16 %v124, %v124
  %v141 = vpack.c.bf16 %v125, %v125
  %v142 = vpack.c.bf16 %v126, %v126
  %v143 = vpack.c.bf16 %v127, %v127
  %v144 = vpack.c.bf16 %v128, %v128
  %vm145 = vcmask 257024
  %146 = vst.msk [vmem:[%s5] sm:$0xf] %vm145, %v129
  %147 = vst.msk [vmem:[%s5 + $0x4] sm:$0xf] %vm145, %v130
  %148 = vst.msk [vmem:[%s5 + $0x8] sm:$0xf] %vm145, %v131
  %149 = vst.msk [vmem:[%s5 + $0xc] sm:$0xf] %vm145, %v132
  %150 = vst.msk [vmem:[%s5 + $0x10] sm:$0xf] %vm145, %v133
  %151 = vst.msk [vmem:[%s5 + $0x14] sm:$0xf] %vm145, %v134
  %152 = vst.msk [vmem:[%s5 + $0x18] sm:$0xf] %vm145, %v135
  %153 = vst.msk [vmem:[%s5 + $0x1c] sm:$0xf] %vm145, %v136
  %154 = vst.msk [vmem:[%s5 + $0x20] sm:$0xf] %vm145, %v137
  %155 = vst.msk [vmem:[%s5 + $0x24] sm:$0xf] %vm145, %v138
  %156 = vst.msk [vmem:[%s5 + $0x28] sm:$0xf] %vm145, %v139
  %157 = vst.msk [vmem:[%s5 + $0x2c] sm:$0xf] %vm145, %v140
  %158 = vst.msk [vmem:[%s5 + $0x30] sm:$0xf] %vm145, %v141
  %159 = vst.msk [vmem:[%s5 + $0x34] sm:$0xf] %vm145, %v142
  %160 = vst.msk [vmem:[%s5 + $0x38] sm:$0xf] %vm145, %v143
  %161 = vst.msk [vmem:[%s5 + $0x3c] sm:$0xf] %vm145, %v144
  // Predicated region
  $region22: #{resnet_generator_forward.36} parent=0 // pred_check
    _
  $region23: #{resnet_generator_forward.36} parent=0 // pred_check_branch
    %163 = sbr.rel (0) target = $region25
  $region24: #{resnet_generator_forward.36} parent=0 // pred_region
    _
  $region25: #{resnet_generator_forward.36} parent=0 // pred_fallthru
    _
  // Predicated region
  $region26: #{resnet_generator_forward.36} parent=0 // pred_check
    _
  $region27: #{resnet_generator_forward.36} parent=0 // pred_check_branch
    %165 = sbr.rel (0) target = $region29
  $region28: #{resnet_generator_forward.36} parent=0 // pred_region
    _
  $region29: #{resnet_generator_forward.36} parent=0 // pred_fallthru
    _

// kernel: resnet_generator_forward.37
$region0: #{resnet_generator_forward.37}
  #allocation0 [shape = 'u32[]', space=smem, size = 0x4, offset = 0x4, fixed_abs, tag = 'smem constant byte address 0x4 - core index']
  #allocation1 [shape = 'u32[72,128]{1,0:T(1,128)}', space=vmem, size = 0x9000, scoped, tag = 'internal scratch']
  %s0 = inlined_call_operand.vmem [shape: bf16[512,512], index: 0, kind: input, shape index: {}]
  %s1 = inlined_call_operand.vmem [shape: bf16[512,3], index: 1, kind: input, shape index: {}]
  %s2 = inlined_call_operand.vmem [shape: f32[1,3], index: 2, kind: input, shape index: {}]
  %s3 = inlined_call_operand.vmem [shape: f32[512,3], index: 3, kind: output, shape index: {}]
  %s4 = sld [smem:[#allocation0]]
  $region45: #{resnet_generator_forward.37} parent=0
    _
  %s6 = ssub.s32 1, %s4
  %s7 = scalar_select 0, %s6, %s4
  loop: start=0, step=1, limit=4
  $region2: #{resnet_generator_forward.37} parent=0 // loop_pre_header
    _
  $region3: #{resnet_generator_forward.37} parent=0 // loop_header
    %s9 = sphi 0, %s13
    %p10 = scmp.ge.s32.totalorder %s9, 4
    %s19 = sphi 0, %s21
    %s22 = sphi 0, %s19
    %s23 = sphi 0, %s22
    %s39 = sphi 0, %s23
    %s43 = sphi 0, %s43
    %s45 = sphi 0, %s43
    %s46 = sphi 0, %s45
    %s60 = sphi 0, %s46
    %s64 = sphi 0, %s64
    %s66 = sphi 0, %s64
    %s67 = sphi 0, %s66
    %s81 = sphi 0, %s67
    %s87 = sphi 0, %s89
    %s90 = sphi 0, %s87
    %s91 = sphi 0, %s90
    %s107 = sphi 0, %s91
  $region4: #{resnet_generator_forward.37} parent=0 // loop_header_branch
    %12 = sbr.rel (%p10) target = $region8
  $region5: #{resnet_generator_forward.37} parent=0 // loop_body
    %s14 = ssub.s32 %s9, 1
    %s15 = ssub.s32 %s9, 2
    %s16 = sadd.s32 %s9, 1
    %s17 = ssub.s32 %s9, %s16
    %p18 = scmp.eq.s32.totalorder %s17, 0
    %s20 = sadd.s32 %s19, 1
    %s21 = scalar_select %p18, %s19, %s20
    %p24 = pneg %p18
    %p25 = scmp.eq.s32.totalorder %s9, 1
    %p26 = por %p24, %p25
    %p27 = scmp.ne.s32.totalorder %s19, %s22
    %p28 = scmp.eq.s32.totalorder %s9, 0
    %p29 = por %p27, %p28
    %p30 = scmp.ne.s32.totalorder %s19, %s22
    %p31 = scmp.eq.s32.totalorder %s14, 1
    %p32 = por %p30, %p31
    %p33 = scmp.ne.s32.totalorder %s22, %s23
    %p34 = scmp.eq.s32.totalorder %s14, 0
    %p35 = por %p33, %p34
    %p36 = scmp.ne.s32.totalorder %s22, %s23
    %p37 = scmp.eq.s32.totalorder %s15, 1
    %p38 = por %p36, %p37
    %p40 = scmp.ne.s32.totalorder %s23, %s39
    %p41 = scmp.eq.s32.totalorder %s15, 0
    %p42 = por %p40, %p41
    %s44 = sadd.s32 %s43, 1
    %p47 = scmp.eq.s32.totalorder %s9, 1
    %p48 = scmp.ne.s32.totalorder %s43, %s45
    %p49 = scmp.eq.s32.totalorder %s9, 0
    %p50 = por %p48, %p49
    %p51 = scmp.ne.s32.totalorder %s43, %s45
    %p52 = scmp.eq.s32.totalorder %s14, 1
    %p53 = por %p51, %p52
    %p54 = scmp.ne.s32.totalorder %s45, %s46
    %p55 = scmp.eq.s32.totalorder %s14, 0
    %p56 = por %p54, %p55
    %p57 = scmp.ne.s32.totalorder %s45, %s46
    %p58 = scmp.eq.s32.totalorder %s15, 1
    %p59 = por %p57, %p58
    %p61 = scmp.ne.s32.totalorder %s46, %s60
    %p62 = scmp.eq.s32.totalorder %s15, 0
    %p63 = por %p61, %p62
    %s65 = sadd.s32 %s64, 1
    %p68 = scmp.eq.s32.totalorder %s9, 1
    %p69 = scmp.ne.s32.totalorder %s64, %s66
    %p70 = scmp.eq.s32.totalorder %s9, 0
    %p71 = por %p69, %p70
    %p72 = scmp.ne.s32.totalorder %s64, %s66
    %p73 = scmp.eq.s32.totalorder %s14, 1
    %p74 = por %p72, %p73
    %p75 = scmp.ne.s32.totalorder %s66, %s67
    %p76 = scmp.eq.s32.totalorder %s14, 0
    %p77 = por %p75, %p76
    %p78 = scmp.ne.s32.totalorder %s66, %s67
    %p79 = scmp.eq.s32.totalorder %s15, 1
    %p80 = por %p78, %p79
    %p82 = scmp.ne.s32.totalorder %s67, %s81
    %p83 = scmp.eq.s32.totalorder %s15, 0
    %p84 = por %p82, %p83
    %s85 = ssub.s32 %s9, %s16
    %p86 = scmp.eq.s32.totalorder %s85, 0
    %s88 = sadd.s32 %s87, 1
    %s89 = scalar_select %p86, %s87, %s88
    %p92 = pneg %p86
    %p93 = scmp.eq.s32.totalorder %s9, 1
    %p94 = por %p92, %p93
    %p95 = scmp.ne.s32.totalorder %s87, %s90
    %p96 = scmp.eq.s32.totalorder %s9, 0
    %p97 = por %p95, %p96
    %p98 = scmp.ne.s32.totalorder %s87, %s90
    %p99 = scmp.eq.s32.totalorder %s14, 1
    %p100 = por %p98, %p99
    %p101 = scmp.ne.s32.totalorder %s90, %s91
    %p102 = scmp.eq.s32.totalorder %s14, 0
    %p103 = por %p101, %p102
    %p104 = scmp.ne.s32.totalorder %s90, %s91
    %p105 = scmp.eq.s32.totalorder %s15, 1
    %p106 = por %p104, %p105
    %p108 = scmp.ne.s32.totalorder %s91, %s107
    %p109 = scmp.eq.s32.totalorder %s15, 0
    %p110 = por %p108, %p109
    %p111 = scmp.le.s32.totalorder 1, %s9
    %p112 = scmp.lt.s32.totalorder %s9, 3
    %p113 = pnand %p111, %p112
    %p114 = pneg %p113
    // Predicated region
    $region9: #{resnet_generator_forward.37} parent=5 // pred_check
      _
    $region10: #{resnet_generator_forward.37} parent=5 // pred_check_branch
      %116 = sbr.rel (%p113) target = $region12
    $region11: #{resnet_generator_forward.37} parent=5 // pred_region
      %s117 = ssub.s32 %s9, 1
      // Predicated region
      $region13: #{resnet_generator_forward.37} parent=11 // pred_check
        %p118 = pneg %p56
      $region14: #{resnet_generator_forward.37} parent=11 // pred_check_branch
        %120 = sbr.rel (%p118) target = $region16
      $region15: #{resnet_generator_forward.37} parent=11 // pred_region
        _
      $region16: #{resnet_generator_forward.37} parent=11 // pred_fallthru
        _
      // Predicated region
      $region17: #{resnet_generator_forward.37} parent=11 // pred_check
        %p121 = pneg %p77
      $region18: #{resnet_generator_forward.37} parent=11 // pred_check_branch
        %123 = sbr.rel (%p121) target = $region20
      $region19: #{resnet_generator_forward.37} parent=11 // pred_region
        _
      $region20: #{resnet_generator_forward.37} parent=11 // pred_fallthru
        _
    $region12: #{resnet_generator_forward.37} parent=5 // pred_fallthru
      _
    %p124 = scmp.lt.s32.totalorder %s9, 2
    // Predicated region
    $region21: #{resnet_generator_forward.37} parent=5 // pred_check
      %p125 = pneg %p124
    $region22: #{resnet_generator_forward.37} parent=5 // pred_check_branch
      %127 = sbr.rel (%p125) target = $region24
    $region23: #{resnet_generator_forward.37} parent=5 // pred_region
      // Predicated region
      $region25: #{resnet_generator_forward.37} parent=23 // pred_check
        %p128 = pneg %p29
      $region26: #{resnet_generator_forward.37} parent=23 // pred_check_branch
        %130 = sbr.rel (%p128) target = $region28
      $region27: #{resnet_generator_forward.37} parent=23 // pred_region
        %s131 = smul.u32 32, %s9
        %p132 = scmp.lt.s32.totalorder %s131, 63
        %s133 = scalar_select %p132, %s131, 63
        %s134 = smul.addr %s133, 4
        %s135 = smul.addr %s134, 4
        %s136 = scalar_lea.vmem %s0, %s135
        %s137 = smul.u32 32, %s9
      $region28: #{resnet_generator_forward.37} parent=23 // pred_fallthru
        _
    $region24: #{resnet_generator_forward.37} parent=5 // pred_fallthru
      _
    %p138 = scmp.le.s32.totalorder 1, %s9
    %p139 = scmp.lt.s32.totalorder %s9, 3
    %p140 = pnand %p138, %p139
    %p141 = pneg %p140
    // Predicated region
    $region29: #{resnet_generator_forward.37} parent=5 // pred_check
      _
    $region30: #{resnet_generator_forward.37} parent=5 // pred_check_branch
      %143 = sbr.rel (%p140) target = $region32
    $region31: #{resnet_generator_forward.37} parent=5 // pred_region
      %s144 = ssub.s32 %s9, 1
      %s145 = smul.u32 32, %s14
      %p146 = scmp.lt.s32.totalorder %s145, 63
      %s147 = scalar_select %p146, %s145, 63
      %s148 = smul.addr %s147, 4
      %s149 = smul.addr %s148, 4
      %s150 = scalar_lea.vmem %s0, %s149
      %p151 = pneg %p35
      %p152 = pneg %p32
      %p153 = pneg %p56
      %p154 = pneg %p53
      %p155 = pneg %p77
      %p156 = pneg %p74
      %p157 = pneg %p103
      %p158 = pneg %p100
      %s159 = smul.u32 32, %s14
      %p160 = scmp.lt.s32.totalorder %s159, 63
      %s161 = scalar_select %p160, %s159, 63
      %s162 = smul.addr %s161, 8
      %s163 = scalar_lea.vmem %s3, %s162
      %s164 = smul.u32 32, %s14
      %p165 = scmp.lt.s32.totalorder %s164, 63
      %s166 = scalar_select %p165, %s164, 63
      %s167 = smul.addr %s166, 4
      %s168 = smul.addr %s167, 4
      %s169 = scalar_lea.vmem %s0, %s168
      %s170 = smul.u32 32, %s14
      %s171 = smul.u32 32, %s14
      %p172 = scmp.lt.s32.totalorder %s171, 63
      %s173 = scalar_select %p172, %s171, 63
      %s174 = smul.addr %s173, 8
      %s175 = scalar_lea.vmem %s3, %s174
      %s176 = smul.u32 32, %s14
      %v177 = vld [vmem:[%s169] sm:$0xff]
      %v178 = vld [vmem:[%s169 + $0x8] sm:$0xff]
      %v179 = vld [vmem:[%s169 + $0x10] sm:$0xff]
      %v180 = vld [vmem:[%s169 + $0x18] sm:$0xff]
      %v181 = vld [vmem:[%s169 + $0x20] sm:$0xff]
      %v182 = vld [vmem:[%s169 + $0x28] sm:$0xff]
      %v183 = vld [vmem:[%s169 + $0x30] sm:$0xff]
      %v184 = vld [vmem:[%s169 + $0x38] sm:$0xff]
      %v185 = vld [vmem:[%s169 + $0x40] sm:$0xff]
      %v186 = vld [vmem:[%s169 + $0x48] sm:$0xff]
      %v187 = vld [vmem:[%s169 + $0x50] sm:$0xff]
      %v188 = vld [vmem:[%s169 + $0x58] sm:$0xff]
      %v189 = vld [vmem:[%s169 + $0x60] sm:$0xff]
      %v190 = vld [vmem:[%s169 + $0x68] sm:$0xff]
      %v191 = vld [vmem:[%s169 + $0x70] sm:$0xff]
      %v192 = vld [vmem:[%s169 + $0x78] sm:$0xff]
      %v193 = vld [vmem:[%s169 + $0x80] sm:$0xff]
      %v194 = vld [vmem:[%s169 + $0x88] sm:$0xff]
      %v195 = vld [vmem:[%s169 + $0x90] sm:$0xff]
      %v196 = vld [vmem:[%s169 + $0x98] sm:$0xff]
      %v197 = vld [vmem:[%s169 + $0xa0] sm:$0xff]
      %v198 = vld [vmem:[%s169 + $0xa8] sm:$0xff]
      %v199 = vld [vmem:[%s169 + $0xb0] sm:$0xff]
      %v200 = vld [vmem:[%s169 + $0xb8] sm:$0xff]
      %v201 = vld [vmem:[%s169 + $0xc0] sm:$0xff]
      %v202 = vld [vmem:[%s169 + $0xc8] sm:$0xff]
      %v203 = vld [vmem:[%s169 + $0xd0] sm:$0xff]
      %v204 = vld [vmem:[%s169 + $0xd8] sm:$0xff]
      %v205 = vld [vmem:[%s169 + $0xe0] sm:$0xff]
      %v206 = vld [vmem:[%s169 + $0xe8] sm:$0xff]
      %v207 = vld [vmem:[%s169 + $0xf0] sm:$0xff]
      %v208 = vld [vmem:[%s169 + $0xf8] sm:$0xff]
      %v209 = vld [vmem:[%s169 + $0x100] sm:$0xff]
      %v210 = vld [vmem:[%s169 + $0x108] sm:$0xff]
      %v211 = vld [vmem:[%s169 + $0x110] sm:$0xff]
      %v212 = vld [vmem:[%s169 + $0x118] sm:$0xff]
      %v213 = vld [vmem:[%s169 + $0x120] sm:$0xff]
      %v214 = vld [vmem:[%s169 + $0x128] sm:$0xff]
      %v215 = vld [vmem:[%s169 + $0x130] sm:$0xff]
      %v216 = vld [vmem:[%s169 + $0x138] sm:$0xff]
      %v217 = vld [vmem:[%s169 + $0x140] sm:$0xff]
      %v218 = vld [vmem:[%s169 + $0x148] sm:$0xff]
      %v219 = vld [vmem:[%s169 + $0x150] sm:$0xff]
      %v220 = vld [vmem:[%s169 + $0x158] sm:$0xff]
      %v221 = vld [vmem:[%s169 + $0x160] sm:$0xff]
      %v222 = vld [vmem:[%s169 + $0x168] sm:$0xff]
      %v223 = vld [vmem:[%s169 + $0x170] sm:$0xff]
      %v224 = vld [vmem:[%s169 + $0x178] sm:$0xff]
      %v225 = vld [vmem:[%s169 + $0x180] sm:$0xff]
      %v226 = vld [vmem:[%s169 + $0x188] sm:$0xff]
      %v227 = vld [vmem:[%s169 + $0x190] sm:$0xff]
      %v228 = vld [vmem:[%s169 + $0x198] sm:$0xff]
      %v229 = vld [vmem:[%s169 + $0x1a0] sm:$0xff]
      %v230 = vld [vmem:[%s169 + $0x1a8] sm:$0xff]
      %v231 = vld [vmem:[%s169 + $0x1b0] sm:$0xff]
      %v232 = vld [vmem:[%s169 + $0x1b8] sm:$0xff]
      %v233 = vld [vmem:[%s169 + $0x1c0] sm:$0xff]
      %v234 = vld [vmem:[%s169 + $0x1c8] sm:$0xff]
      %v235 = vld [vmem:[%s169 + $0x1d0] sm:$0xff]
      %v236 = vld [vmem:[%s169 + $0x1d8] sm:$0xff]
      %v237 = vld [vmem:[%s169 + $0x1e0] sm:$0xff]
      %v238 = vld [vmem:[%s169 + $0x1e8] sm:$0xff]
      %v239 = vld [vmem:[%s169 + $0x1f0] sm:$0xff]
      %v240 = vld [vmem:[%s169 + $0x1f8] sm:$0xff]
      %v241 = vld [vmem:[%s1] sm:$0xf]
      %v242 = vld [vmem:[%s1 + $0x4] sm:$0xf]
      %v243 = vld [vmem:[%s1 + $0x8] sm:$0xf]
      %v244 = vld [vmem:[%s1 + $0xc] sm:$0xf]
      %v245 = vld [vmem:[%s1 + $0x10] sm:$0xf]
      %v246 = vld [vmem:[%s1 + $0x14] sm:$0xf]
      %v247 = vld [vmem:[%s1 + $0x18] sm:$0xf]
      %v248 = vld [vmem:[%s1 + $0x1c] sm:$0xf]
      %v249 = vld [vmem:[%s1 + $0x20] sm:$0xf]
      %v250 = vld [vmem:[%s1 + $0x24] sm:$0xf]
      %v251 = vld [vmem:[%s1 + $0x28] sm:$0xf]
      %v252 = vld [vmem:[%s1 + $0x2c] sm:$0xf]
      %v253 = vld [vmem:[%s1 + $0x30] sm:$0xf]
      %v254 = vld [vmem:[%s1 + $0x34] sm:$0xf]
      %v255 = vld [vmem:[%s1 + $0x38] sm:$0xf]
      %v256 = vld [vmem:[%s1 + $0x3c] sm:$0xf]
      %v257 = vld [vmem:[%s1 + $0x40] sm:$0xf]
      %v258 = vld [vmem:[%s1 + $0x44] sm:$0xf]
      %v259 = vld [vmem:[%s1 + $0x48] sm:$0xf]
      %v260 = vld [vmem:[%s1 + $0x4c] sm:$0xf]
      %v261 = vld [vmem:[%s1 + $0x50] sm:$0xf]
      %v262 = vld [vmem:[%s1 + $0x54] sm:$0xf]
      %v263 = vld [vmem:[%s1 + $0x58] sm:$0xf]
      %v264 = vld [vmem:[%s1 + $0x5c] sm:$0xf]
      %v265 = vld [vmem:[%s1 + $0x60] sm:$0xf]
      %v266 = vld [vmem:[%s1 + $0x64] sm:$0xf]
      %v267 = vld [vmem:[%s1 + $0x68] sm:$0xf]
      %v268 = vld [vmem:[%s1 + $0x6c] sm:$0xf]
      %v269 = vld [vmem:[%s1 + $0x70] sm:$0xf]
      %v270 = vld [vmem:[%s1 + $0x74] sm:$0xf]
      %v271 = vld [vmem:[%s1 + $0x78] sm:$0xf]
      %v272 = vld [vmem:[%s1 + $0x7c] sm:$0xf]
      %v273 = vld [vmem:[%s1 + $0x80] sm:$0xf]
      %v274 = vld [vmem:[%s1 + $0x84] sm:$0xf]
      %v275 = vld [vmem:[%s1 + $0x88] sm:$0xf]
      %v276 = vld [vmem:[%s1 + $0x8c] sm:$0xf]
      %v277 = vld [vmem:[%s1 + $0x90] sm:$0xf]
      %v278 = vld [vmem:[%s1 + $0x94] sm:$0xf]
      %v279 = vld [vmem:[%s1 + $0x98] sm:$0xf]
      %v280 = vld [vmem:[%s1 + $0x9c] sm:$0xf]
      %v281 = vld [vmem:[%s1 + $0xa0] sm:$0xf]
      %v282 = vld [vmem:[%s1 + $0xa4] sm:$0xf]
      %v283 = vld [vmem:[%s1 + $0xa8] sm:$0xf]
      %v284 = vld [vmem:[%s1 + $0xac] sm:$0xf]
      %v285 = vld [vmem:[%s1 + $0xb0] sm:$0xf]
      %v286 = vld [vmem:[%s1 + $0xb4] sm:$0xf]
      %v287 = vld [vmem:[%s1 + $0xb8] sm:$0xf]
      %v288 = vld [vmem:[%s1 + $0xbc] sm:$0xf]
      %v289 = vld [vmem:[%s1 + $0xc0] sm:$0xf]
      %v290 = vld [vmem:[%s1 + $0xc4] sm:$0xf]
      %v291 = vld [vmem:[%s1 + $0xc8] sm:$0xf]
      %v292 = vld [vmem:[%s1 + $0xcc] sm:$0xf]
      %v293 = vld [vmem:[%s1 + $0xd0] sm:$0xf]
      %v294 = vld [vmem:[%s1 + $0xd4] sm:$0xf]
      %v295 = vld [vmem:[%s1 + $0xd8] sm:$0xf]
      %v296 = vld [vmem:[%s1 + $0xdc] sm:$0xf]
      %v297 = vld [vmem:[%s1 + $0xe0] sm:$0xf]
      %v298 = vld [vmem:[%s1 + $0xe4] sm:$0xf]
      %v299 = vld [vmem:[%s1 + $0xe8] sm:$0xf]
      %v300 = vld [vmem:[%s1 + $0xec] sm:$0xf]
      %v301 = vld [vmem:[%s1 + $0xf0] sm:$0xf]
      %v302 = vld [vmem:[%s1 + $0xf4] sm:$0xf]
      %v303 = vld [vmem:[%s1 + $0xf8] sm:$0xf]
      %v304 = vld [vmem:[%s1 + $0xfc] sm:$0xf]
      %v305 = vld [vmem:[%s2] sm:$0x1]
      %v307 = vperm.slane %v305, 0
      %v373 = vunpack.c.l.b16 %v177
      %v374 = vunpack.c.h.b16 %v177
      %v375 = vunpack.c.l.b16 %v178
      %v376 = vunpack.c.h.b16 %v178
      %v377 = vunpack.c.l.b16 %v179
      %v378 = vunpack.c.h.b16 %v179
      %v379 = vunpack.c.l.b16 %v180
      %v380 = vunpack.c.h.b16 %v180
      %v381 = vunpack.c.l.b16 %v181
      %v382 = vunpack.c.h.b16 %v181
      %v383 = vunpack.c.l.b16 %v182
      %v384 = vunpack.c.h.b16 %v182
      %v385 = vunpack.c.l.b16 %v183
      %v386 = vunpack.c.h.b16 %v183
      %v387 = vunpack.c.l.b16 %v184
      %v388 = vunpack.c.h.b16 %v184
      %v389 = vunpack.c.l.b16 %v185
      %v390 = vunpack.c.h.b16 %v185
      %v391 = vunpack.c.l.b16 %v186
      %v392 = vunpack.c.h.b16 %v186
      %v393 = vunpack.c.l.b16 %v187
      %v394 = vunpack.c.h.b16 %v187
      %v395 = vunpack.c.l.b16 %v188
      %v396 = vunpack.c.h.b16 %v188
      %v397 = vunpack.c.l.b16 %v189
      %v398 = vunpack.c.h.b16 %v189
      %v399 = vunpack.c.l.b16 %v190
      %v400 = vunpack.c.h.b16 %v190
      %v401 = vunpack.c.l.b16 %v191
      %v402 = vunpack.c.h.b16 %v191
      %v403 = vunpack.c.l.b16 %v192
      %v404 = vunpack.c.h.b16 %v192
      %v405 = vunpack.c.l.b16 %v193
      %v406 = vunpack.c.h.b16 %v193
      %v407 = vunpack.c.l.b16 %v194
      %v408 = vunpack.c.h.b16 %v194
      %v409 = vunpack.c.l.b16 %v195
      %v410 = vunpack.c.h.b16 %v195
      %v411 = vunpack.c.l.b16 %v196
      %v412 = vunpack.c.h.b16 %v196
      %v413 = vunpack.c.l.b16 %v197
      %v414 = vunpack.c.h.b16 %v197
      %v415 = vunpack.c.l.b16 %v198
      %v416 = vunpack.c.h.b16 %v198
      %v417 = vunpack.c.l.b16 %v199
      %v418 = vunpack.c.h.b16 %v199
      %v419 = vunpack.c.l.b16 %v200
      %v420 = vunpack.c.h.b16 %v200
      %v421 = vunpack.c.l.b16 %v201
      %v422 = vunpack.c.h.b16 %v201
      %v423 = vunpack.c.l.b16 %v202
      %v424 = vunpack.c.h.b16 %v202
      %v425 = vunpack.c.l.b16 %v203
      %v426 = vunpack.c.h.b16 %v203
      %v427 = vunpack.c.l.b16 %v204
      %v428 = vunpack.c.h.b16 %v204
      %v429 = vunpack.c.l.b16 %v205
      %v430 = vunpack.c.h.b16 %v205
      %v431 = vunpack.c.l.b16 %v206
      %v432 = vunpack.c.h.b16 %v206
      %v433 = vunpack.c.l.b16 %v207
      %v434 = vunpack.c.h.b16 %v207
      %v435 = vunpack.c.l.b16 %v208
      %v436 = vunpack.c.h.b16 %v208
      %v437 = vunpack.c.l.b16 %v209
      %v438 = vunpack.c.h.b16 %v209
      %v439 = vunpack.c.l.b16 %v210
      %v440 = vunpack.c.h.b16 %v210
      %v441 = vunpack.c.l.b16 %v211
      %v442 = vunpack.c.h.b16 %v211
      %v443 = vunpack.c.l.b16 %v212
      %v444 = vunpack.c.h.b16 %v212
      %v445 = vunpack.c.l.b16 %v213
      %v446 = vunpack.c.h.b16 %v213
      %v447 = vunpack.c.l.b16 %v214
      %v448 = vunpack.c.h.b16 %v214
      %v449 = vunpack.c.l.b16 %v215
      %v450 = vunpack.c.h.b16 %v215
      %v451 = vunpack.c.l.b16 %v216
      %v452 = vunpack.c.h.b16 %v216
      %v453 = vunpack.c.l.b16 %v217
      %v454 = vunpack.c.h.b16 %v217
      %v455 = vunpack.c.l.b16 %v218
      %v456 = vunpack.c.h.b16 %v218
      %v457 = vunpack.c.l.b16 %v219
      %v458 = vunpack.c.h.b16 %v219
      %v459 = vunpack.c.l.b16 %v220
      %v460 = vunpack.c.h.b16 %v220
      %v461 = vunpack.c.l.b16 %v221
      %v462 = vunpack.c.h.b16 %v221
      %v463 = vunpack.c.l.b16 %v222
      %v464 = vunpack.c.h.b16 %v222
      %v465 = vunpack.c.l.b16 %v223
      %v466 = vunpack.c.h.b16 %v223
      %v467 = vunpack.c.l.b16 %v224
      %v468 = vunpack.c.h.b16 %v224
      %v469 = vunpack.c.l.b16 %v225
      %v470 = vunpack.c.h.b16 %v225
      %v471 = vunpack.c.l.b16 %v226
      %v472 = vunpack.c.h.b16 %v226
      %v473 = vunpack.c.l.b16 %v227
      %v474 = vunpack.c.h.b16 %v227
      %v475 = vunpack.c.l.b16 %v228
      %v476 = vunpack.c.h.b16 %v228
      %v477 = vunpack.c.l.b16 %v229
      %v478 = vunpack.c.h.b16 %v229
      %v479 = vunpack.c.l.b16 %v230
      %v480 = vunpack.c.h.b16 %v230
      %v481 = vunpack.c.l.b16 %v231
      %v482 = vunpack.c.h.b16 %v231
      %v483 = vunpack.c.l.b16 %v232
      %v484 = vunpack.c.h.b16 %v232
      %v485 = vunpack.c.l.b16 %v233
      %v486 = vunpack.c.h.b16 %v233
      %v487 = vunpack.c.l.b16 %v234
      %v488 = vunpack.c.h.b16 %v234
      %v489 = vunpack.c.l.b16 %v235
      %v490 = vunpack.c.h.b16 %v235
      %v491 = vunpack.c.l.b16 %v236
      %v492 = vunpack.c.h.b16 %v236
      %v493 = vunpack.c.l.b16 %v237
      %v494 = vunpack.c.h.b16 %v237
      %v495 = vunpack.c.l.b16 %v238
      %v496 = vunpack.c.h.b16 %v238
      %v497 = vunpack.c.l.b16 %v239
      %v498 = vunpack.c.h.b16 %v239
      %v499 = vunpack.c.l.b16 %v240
      %v500 = vunpack.c.h.b16 %v240
      %v501 = vpack.c.b16 %v377, %v373
      %v502 = vpack.c.b16 %v378, %v374
      %v503 = vpack.c.b16 %v379, %v375
      %v504 = vpack.c.b16 %v380, %v376
      %v505 = vpack.c.b16 %v385, %v381
      %v506 = vpack.c.b16 %v386, %v382
      %v507 = vpack.c.b16 %v387, %v383
      %v508 = vpack.c.b16 %v388, %v384
      %v509 = vpack.c.b16 %v393, %v389
      %v510 = vpack.c.b16 %v394, %v390
      %v511 = vpack.c.b16 %v395, %v391
      %v512 = vpack.c.b16 %v396, %v392
      %v513 = vpack.c.b16 %v401, %v397
      %v514 = vpack.c.b16 %v402, %v398
      %v515 = vpack.c.b16 %v403, %v399
      %v516 = vpack.c.b16 %v404, %v400
      %v517 = vpack.c.b16 %v409, %v405
      %v518 = vpack.c.b16 %v410, %v406
      %v519 = vpack.c.b16 %v411, %v407
      %v520 = vpack.c.b16 %v412, %v408
      %v521 = vpack.c.b16 %v417, %v413
      %v522 = vpack.c.b16 %v418, %v414
      %v523 = vpack.c.b16 %v419, %v415
      %v524 = vpack.c.b16 %v420, %v416
      %v525 = vpack.c.b16 %v425, %v421
      %v526 = vpack.c.b16 %v426, %v422
      %v527 = vpack.c.b16 %v427, %v423
      %v528 = vpack.c.b16 %v428, %v424
      %v529 = vpack.c.b16 %v433, %v429
      %v530 = vpack.c.b16 %v434, %v430
      %v531 = vpack.c.b16 %v435, %v431
      %v532 = vpack.c.b16 %v436, %v432
      %v533 = vpack.c.b16 %v441, %v437
      %v534 = vpack.c.b16 %v442, %v438
      %v535 = vpack.c.b16 %v443, %v439
      %v536 = vpack.c.b16 %v444, %v440
      %v537 = vpack.c.b16 %v449, %v445
      %v538 = vpack.c.b16 %v450, %v446
      %v539 = vpack.c.b16 %v451, %v447
      %v540 = vpack.c.b16 %v452, %v448
      %v541 = vpack.c.b16 %v457, %v453
      %v542 = vpack.c.b16 %v458, %v454
      %v543 = vpack.c.b16 %v459, %v455
      %v544 = vpack.c.b16 %v460, %v456
      %v545 = vpack.c.b16 %v465, %v461
      %v546 = vpack.c.b16 %v466, %v462
      %v547 = vpack.c.b16 %v467, %v463
      %v548 = vpack.c.b16 %v468, %v464
      %v549 = vpack.c.b16 %v473, %v469
      %v550 = vpack.c.b16 %v474, %v470
      %v551 = vpack.c.b16 %v475, %v471
      %v552 = vpack.c.b16 %v476, %v472
      %v553 = vpack.c.b16 %v481, %v477
      %v554 = vpack.c.b16 %v482, %v478
      %v555 = vpack.c.b16 %v483, %v479
      %v556 = vpack.c.b16 %v484, %v480
      %v557 = vpack.c.b16 %v489, %v485
      %v558 = vpack.c.b16 %v490, %v486
      %v559 = vpack.c.b16 %v491, %v487
      %v560 = vpack.c.b16 %v492, %v488
      %v561 = vpack.c.b16 %v497, %v493
      %v562 = vpack.c.b16 %v498, %v494
      %v563 = vpack.c.b16 %v499, %v495
      %v564 = vpack.c.b16 %v500, %v496
      %v693 = vunpack.c.l.b16 %v241
      %v694 = vunpack.c.l.b16 %v242
      %v695 = vunpack.c.l.b16 %v243
      %v696 = vunpack.c.l.b16 %v244
      %v697 = vunpack.c.l.b16 %v245
      %v698 = vunpack.c.l.b16 %v246
      %v699 = vunpack.c.l.b16 %v247
      %v700 = vunpack.c.l.b16 %v248
      %v701 = vunpack.c.l.b16 %v249
      %v702 = vunpack.c.l.b16 %v250
      %v703 = vunpack.c.l.b16 %v251
      %v704 = vunpack.c.l.b16 %v252
      %v705 = vunpack.c.l.b16 %v253
      %v706 = vunpack.c.l.b16 %v254
      %v707 = vunpack.c.l.b16 %v255
      %v708 = vunpack.c.l.b16 %v256
      %v709 = vunpack.c.l.b16 %v257
      %v710 = vunpack.c.l.b16 %v258
      %v711 = vunpack.c.l.b16 %v259
      %v712 = vunpack.c.l.b16 %v260
      %v713 = vunpack.c.l.b16 %v261
      %v714 = vunpack.c.l.b16 %v262
      %v715 = vunpack.c.l.b16 %v263
      %v716 = vunpack.c.l.b16 %v264
      %v717 = vunpack.c.l.b16 %v265
      %v718 = vunpack.c.l.b16 %v266
      %v719 = vunpack.c.l.b16 %v267
      %v720 = vunpack.c.l.b16 %v268
      %v721 = vunpack.c.l.b16 %v269
      %v722 = vunpack.c.l.b16 %v270
      %v723 = vunpack.c.l.b16 %v271
      %v724 = vunpack.c.l.b16 %v272
      %v725 = vunpack.c.l.b16 %v273
      %v726 = vunpack.c.l.b16 %v274
      %v727 = vunpack.c.l.b16 %v275
      %v728 = vunpack.c.l.b16 %v276
      %v729 = vunpack.c.l.b16 %v277
      %v730 = vunpack.c.l.b16 %v278
      %v731 = vunpack.c.l.b16 %v279
      %v732 = vunpack.c.l.b16 %v280
      %v733 = vunpack.c.l.b16 %v281
      %v734 = vunpack.c.l.b16 %v282
      %v735 = vunpack.c.l.b16 %v283
      %v736 = vunpack.c.l.b16 %v284
      %v737 = vunpack.c.l.b16 %v285
      %v738 = vunpack.c.l.b16 %v286
      %v739 = vunpack.c.l.b16 %v287
      %v740 = vunpack.c.l.b16 %v288
      %v741 = vunpack.c.l.b16 %v289
      %v742 = vunpack.c.l.b16 %v290
      %v743 = vunpack.c.l.b16 %v291
      %v744 = vunpack.c.l.b16 %v292
      %v745 = vunpack.c.l.b16 %v293
      %v746 = vunpack.c.l.b16 %v294
      %v747 = vunpack.c.l.b16 %v295
      %v748 = vunpack.c.l.b16 %v296
      %v749 = vunpack.c.l.b16 %v297
      %v750 = vunpack.c.l.b16 %v298
      %v751 = vunpack.c.l.b16 %v299
      %v752 = vunpack.c.l.b16 %v300
      %v753 = vunpack.c.l.b16 %v301
      %v754 = vunpack.c.l.b16 %v302
      %v755 = vunpack.c.l.b16 %v303
      %v756 = vunpack.c.l.b16 %v304
      %v757 = vpack.c.b16 %v694, %v693
      %v758 = vpack.c.b16 %v696, %v695
      %v759 = vpack.c.b16 %v698, %v697
      %v760 = vpack.c.b16 %v700, %v699
      %v761 = vpack.c.b16 %v702, %v701
      %v762 = vpack.c.b16 %v704, %v703
      %v763 = vpack.c.b16 %v706, %v705
      %v764 = vpack.c.b16 %v708, %v707
      %v765 = vpack.c.b16 %v710, %v709
      %v766 = vpack.c.b16 %v712, %v711
      %v767 = vpack.c.b16 %v714, %v713
      %v768 = vpack.c.b16 %v716, %v715
      %v769 = vpack.c.b16 %v718, %v717
      %v770 = vpack.c.b16 %v720, %v719
      %v771 = vpack.c.b16 %v722, %v721
      %v772 = vpack.c.b16 %v724, %v723
      %v773 = vpack.c.b16 %v726, %v725
      %v774 = vpack.c.b16 %v728, %v727
      %v775 = vpack.c.b16 %v730, %v729
      %v776 = vpack.c.b16 %v732, %v731
      %v777 = vpack.c.b16 %v734, %v733
      %v778 = vpack.c.b16 %v736, %v735
      %v779 = vpack.c.b16 %v738, %v737
      %v780 = vpack.c.b16 %v740, %v739
      %v781 = vpack.c.b16 %v742, %v741
      %v782 = vpack.c.b16 %v744, %v743
      %v783 = vpack.c.b16 %v746, %v745
      %v784 = vpack.c.b16 %v748, %v747
      %v785 = vpack.c.b16 %v750, %v749
      %v786 = vpack.c.b16 %v752, %v751
      %v787 = vpack.c.b16 %v754, %v753
      %v788 = vpack.c.b16 %v756, %v755
      %821 = vmatpush.bf16.msra.mxu0 %v764
      %822 = vmatpush.bf16.msra.mxu0 %v763
      %823 = vmatpush.bf16.msra.mxu0 %v762
      %824 = vmatpush.bf16.msra.mxu0 %v761
      %825 = vmatpush.bf16.msra.mxu0 %v760
      %826 = vmatpush.bf16.msra.mxu0 %v759
      %827 = vmatpush.bf16.msra.mxu0 %v758
      %828 = vmatpush.bf16.msra.mxu0 %v757
      %829 = vmatmul.bf16.gmra.mxu0 %v501
      %v830 = vpop.f32.mrf.mxu0
      %v831 = vadd.f32 %v307, %v830
      %v832 = vpop.f32.mrf.mxu0
      %v833 = vadd.f32 %v307, %v832
      %834 = vmatmul.bf16.gmra.mxu0 %v505
      %v835 = vpop.f32.mrf.mxu0
      %v836 = vadd.f32 %v307, %v835
      %v837 = vpop.f32.mrf.mxu0
      %v838 = vadd.f32 %v307, %v837
      %839 = vmatmul.bf16.gmra.mxu0 %v509
      %v840 = vpop.f32.mrf.mxu0
      %v841 = vadd.f32 %v307, %v840
      %v842 = vpop.f32.mrf.mxu0
      %v843 = vadd.f32 %v307, %v842
      %844 = vmatmul.bf16.gmra.mxu0 %v513
      %v845 = vpop.f32.mrf.mxu0
      %v846 = vadd.f32 %v307, %v845
      %v847 = vpop.f32.mrf.mxu0
      %v848 = vadd.f32 %v307, %v847
      %849 = vmatmul.bf16.gmra.mxu0 %v517
      %v850 = vpop.f32.mrf.mxu0
      %v851 = vadd.f32 %v307, %v850
      %v852 = vpop.f32.mrf.mxu0
      %v853 = vadd.f32 %v307, %v852
      %854 = vmatmul.bf16.gmra.mxu0 %v521
      %v855 = vpop.f32.mrf.mxu0
      %v856 = vadd.f32 %v307, %v855
      %v857 = vpop.f32.mrf.mxu0
      %v858 = vadd.f32 %v307, %v857
      %859 = vmatmul.bf16.gmra.mxu0 %v525
      %v860 = vpop.f32.mrf.mxu0
      %v861 = vadd.f32 %v307, %v860
      %v862 = vpop.f32.mrf.mxu0
      %v863 = vadd.f32 %v307, %v862
      %864 = vmatmul.bf16.gmra.mxu0 %v529
      %v865 = vpop.f32.mrf.mxu0
      %v866 = vadd.f32 %v307, %v865
      %v867 = vpop.f32.mrf.mxu0
      %v868 = vadd.f32 %v307, %v867
      %869 = vmatmul.bf16.gmra.mxu0 %v533
      %v870 = vpop.f32.mrf.mxu0
      %v871 = vadd.f32 %v307, %v870
      %v872 = vpop.f32.mrf.mxu0
      %v873 = vadd.f32 %v307, %v872
      %874 = vmatmul.bf16.gmra.mxu0 %v537
      %v875 = vpop.f32.mrf.mxu0
      %v876 = vadd.f32 %v307, %v875
      %v877 = vpop.f32.mrf.mxu0
      %v878 = vadd.f32 %v307, %v877
      %879 = vmatmul.bf16.gmra.mxu0 %v541
      %v880 = vpop.f32.mrf.mxu0
      %v881 = vadd.f32 %v307, %v880
      %v882 = vpop.f32.mrf.mxu0
      %v883 = vadd.f32 %v307, %v882
      %884 = vmatmul.bf16.gmra.mxu0 %v545
      %v885 = vpop.f32.mrf.mxu0
      %v886 = vadd.f32 %v307, %v885
      %v887 = vpop.f32.mrf.mxu0
      %v888 = vadd.f32 %v307, %v887
      %889 = vmatmul.bf16.gmra.mxu0 %v549
      %v890 = vpop.f32.mrf.mxu0
      %v891 = vadd.f32 %v307, %v890
      %v892 = vpop.f32.mrf.mxu0
      %v893 = vadd.f32 %v307, %v892
      %894 = vmatmul.bf16.gmra.mxu0 %v553
      %v895 = vpop.f32.mrf.mxu0
      %v896 = vadd.f32 %v307, %v895
      %v897 = vpop.f32.mrf.mxu0
      %v898 = vadd.f32 %v307, %v897
      %899 = vmatmul.bf16.gmra.mxu0 %v557
      %v900 = vpop.f32.mrf.mxu0
      %v901 = vadd.f32 %v307, %v900
      %v902 = vpop.f32.mrf.mxu0
      %v903 = vadd.f32 %v307, %v902
      %904 = vmatmul.bf16.gmra.mxu0 %v561
      %v905 = vpop.f32.mrf.mxu0
      %v906 = vadd.f32 %v307, %v905
      %v907 = vpop.f32.mrf.mxu0
      %v908 = vadd.f32 %v307, %v907
      %909 = vdwg.mxu0
      %910 = vmatpush.bf16.msra.mxu0 %v772
      %911 = vmatpush.bf16.msra.mxu0 %v771
      %912 = vmatpush.bf16.msra.mxu0 %v770
      %913 = vmatpush.bf16.msra.mxu0 %v769
      %914 = vmatpush.bf16.msra.mxu0 %v768
      %915 = vmatpush.bf16.msra.mxu0 %v767
      %916 = vmatpush.bf16.msra.mxu0 %v766
      %917 = vmatpush.bf16.msra.mxu0 %v765
      %918 = vmatmul.bf16.gmra.mxu0 %v502
      %v919 = vpop.f32.mrf.mxu0
      %v920 = vadd.f32 %v831, %v919
      %v921 = vpop.f32.mrf.mxu0
      %v922 = vadd.f32 %v833, %v921
      %923 = vmatmul.bf16.gmra.mxu0 %v506
      %v924 = vpop.f32.mrf.mxu0
      %v925 = vadd.f32 %v836, %v924
      %v926 = vpop.f32.mrf.mxu0
      %v927 = vadd.f32 %v838, %v926
      %928 = vmatmul.bf16.gmra.mxu0 %v510
      %v929 = vpop.f32.mrf.mxu0
      %v930 = vadd.f32 %v841, %v929
      %v931 = vpop.f32.mrf.mxu0
      %v932 = vadd.f32 %v843, %v931
      %933 = vmatmul.bf16.gmra.mxu0 %v514
      %v934 = vpop.f32.mrf.mxu0
      %v935 = vadd.f32 %v846, %v934
      %v936 = vpop.f32.mrf.mxu0
      %v937 = vadd.f32 %v848, %v936
      %938 = vmatmul.bf16.gmra.mxu0 %v518
      %v939 = vpop.f32.mrf.mxu0
      %v940 = vadd.f32 %v851, %v939
      %v941 = vpop.f32.mrf.mxu0
      %v942 = vadd.f32 %v853, %v941
      %943 = vmatmul.bf16.gmra.mxu0 %v522
      %v944 = vpop.f32.mrf.mxu0
      %v945 = vadd.f32 %v856, %v944
      %v946 = vpop.f32.mrf.mxu0
      %v947 = vadd.f32 %v858, %v946
      %948 = vmatmul.bf16.gmra.mxu0 %v526
      %v949 = vpop.f32.mrf.mxu0
      %v950 = vadd.f32 %v861, %v949
      %v951 = vpop.f32.mrf.mxu0
      %v952 = vadd.f32 %v863, %v951
      %953 = vmatmul.bf16.gmra.mxu0 %v530
      %v954 = vpop.f32.mrf.mxu0
      %v955 = vadd.f32 %v866, %v954
      %v956 = vpop.f32.mrf.mxu0
      %v957 = vadd.f32 %v868, %v956
      %958 = vmatmul.bf16.gmra.mxu0 %v534
      %v959 = vpop.f32.mrf.mxu0
      %v960 = vadd.f32 %v871, %v959
      %v961 = vpop.f32.mrf.mxu0
      %v962 = vadd.f32 %v873, %v961
      %963 = vmatmul.bf16.gmra.mxu0 %v538
      %v964 = vpop.f32.mrf.mxu0
      %v965 = vadd.f32 %v876, %v964
      %v966 = vpop.f32.mrf.mxu0
      %v967 = vadd.f32 %v878, %v966
      %968 = vmatmul.bf16.gmra.mxu0 %v542
      %v969 = vpop.f32.mrf.mxu0
      %v970 = vadd.f32 %v881, %v969
      %v971 = vpop.f32.mrf.mxu0
      %v972 = vadd.f32 %v883, %v971
      %973 = vmatmul.bf16.gmra.mxu0 %v546
      %v974 = vpop.f32.mrf.mxu0
      %v975 = vadd.f32 %v886, %v974
      %v976 = vpop.f32.mrf.mxu0
      %v977 = vadd.f32 %v888, %v976
      %978 = vmatmul.bf16.gmra.mxu0 %v550
      %v979 = vpop.f32.mrf.mxu0
      %v980 = vadd.f32 %v891, %v979
      %v981 = vpop.f32.mrf.mxu0
      %v982 = vadd.f32 %v893, %v981
      %983 = vmatmul.bf16.gmra.mxu0 %v554
      %v984 = vpop.f32.mrf.mxu0
      %v985 = vadd.f32 %v896, %v984
      %v986 = vpop.f32.mrf.mxu0
      %v987 = vadd.f32 %v898, %v986
      %988 = vmatmul.bf16.gmra.mxu0 %v558
      %v989 = vpop.f32.mrf.mxu0
      %v990 = vadd.f32 %v901, %v989
      %v991 = vpop.f32.mrf.mxu0
      %v992 = vadd.f32 %v903, %v991
      %993 = vmatmul.bf16.gmra.mxu0 %v562
      %v994 = vpop.f32.mrf.mxu0
      %v995 = vadd.f32 %v906, %v994
      %v996 = vpop.f32.mrf.mxu0
      %v997 = vadd.f32 %v908, %v996
      %998 = vdwg.mxu0
      %999 = vmatpush.bf16.msra.mxu0 %v780
      %1000 = vmatpush.bf16.msra.mxu0 %v779
      %1001 = vmatpush.bf16.msra.mxu0 %v778
      %1002 = vmatpush.bf16.msra.mxu0 %v777
      %1003 = vmatpush.bf16.msra.mxu0 %v776
      %1004 = vmatpush.bf16.msra.mxu0 %v775
      %1005 = vmatpush.bf16.msra.mxu0 %v774
      %1006 = vmatpush.bf16.msra.mxu0 %v773
      %1007 = vmatmul.bf16.gmra.mxu0 %v503
      %v1008 = vpop.f32.mrf.mxu0
      %v1009 = vadd.f32 %v920, %v1008
      %v1010 = vpop.f32.mrf.mxu0
      %v1011 = vadd.f32 %v922, %v1010
      %1012 = vmatmul.bf16.gmra.mxu0 %v507
      %v1013 = vpop.f32.mrf.mxu0
      %v1014 = vadd.f32 %v925, %v1013
      %v1015 = vpop.f32.mrf.mxu0
      %v1016 = vadd.f32 %v927, %v1015
      %1017 = vmatmul.bf16.gmra.mxu0 %v511
      %v1018 = vpop.f32.mrf.mxu0
      %v1019 = vadd.f32 %v930, %v1018
      %v1020 = vpop.f32.mrf.mxu0
      %v1021 = vadd.f32 %v932, %v1020
      %1022 = vmatmul.bf16.gmra.mxu0 %v515
      %v1023 = vpop.f32.mrf.mxu0
      %v1024 = vadd.f32 %v935, %v1023
      %v1025 = vpop.f32.mrf.mxu0
      %v1026 = vadd.f32 %v937, %v1025
      %1027 = vmatmul.bf16.gmra.mxu0 %v519
      %v1028 = vpop.f32.mrf.mxu0
      %v1029 = vadd.f32 %v940, %v1028
      %v1030 = vpop.f32.mrf.mxu0
      %v1031 = vadd.f32 %v942, %v1030
      %1032 = vmatmul.bf16.gmra.mxu0 %v523
      %v1033 = vpop.f32.mrf.mxu0
      %v1034 = vadd.f32 %v945, %v1033
      %v1035 = vpop.f32.mrf.mxu0
      %v1036 = vadd.f32 %v947, %v1035
      %1037 = vmatmul.bf16.gmra.mxu0 %v527
      %v1038 = vpop.f32.mrf.mxu0
      %v1039 = vadd.f32 %v950, %v1038
      %v1040 = vpop.f32.mrf.mxu0
      %v1041 = vadd.f32 %v952, %v1040
      %1042 = vmatmul.bf16.gmra.mxu0 %v531
      %v1043 = vpop.f32.mrf.mxu0
      %v1044 = vadd.f32 %v955, %v1043
      %v1045 = vpop.f32.mrf.mxu0
      %v1046 = vadd.f32 %v957, %v1045
      %1047 = vmatmul.bf16.gmra.mxu0 %v535
      %v1048 = vpop.f32.mrf.mxu0
      %v1049 = vadd.f32 %v960, %v1048
      %v1050 = vpop.f32.mrf.mxu0
      %v1051 = vadd.f32 %v962, %v1050
      %1052 = vmatmul.bf16.gmra.mxu0 %v539
      %v1053 = vpop.f32.mrf.mxu0
      %v1054 = vadd.f32 %v965, %v1053
      %v1055 = vpop.f32.mrf.mxu0
      %v1056 = vadd.f32 %v967, %v1055
      %1057 = vmatmul.bf16.gmra.mxu0 %v543
      %v1058 = vpop.f32.mrf.mxu0
      %v1059 = vadd.f32 %v970, %v1058
      %v1060 = vpop.f32.mrf.mxu0
      %v1061 = vadd.f32 %v972, %v1060
      %1062 = vmatmul.bf16.gmra.mxu0 %v547
      %v1063 = vpop.f32.mrf.mxu0
      %v1064 = vadd.f32 %v975, %v1063
      %v1065 = vpop.f32.mrf.mxu0
      %v1066 = vadd.f32 %v977, %v1065
      %1067 = vmatmul.bf16.gmra.mxu0 %v551
      %v1068 = vpop.f32.mrf.mxu0
      %v1069 = vadd.f32 %v980, %v1068
      %v1070 = vpop.f32.mrf.mxu0
      %v1071 = vadd.f32 %v982, %v1070
      %1072 = vmatmul.bf16.gmra.mxu0 %v555
      %v1073 = vpop.f32.mrf.mxu0
      %v1074 = vadd.f32 %v985, %v1073
      %v1075 = vpop.f32.mrf.mxu0
      %v1076 = vadd.f32 %v987, %v1075
      %1077 = vmatmul.bf16.gmra.mxu0 %v559
      %v1078 = vpop.f32.mrf.mxu0
      %v1079 = vadd.f32 %v990, %v1078
      %v1080 = vpop.f32.mrf.mxu0
      %v1081 = vadd.f32 %v992, %v1080
      %1082 = vmatmul.bf16.gmra.mxu0 %v563
      %v1083 = vpop.f32.mrf.mxu0
      %v1084 = vadd.f32 %v995, %v1083
      %v1085 = vpop.f32.mrf.mxu0
      %v1086 = vadd.f32 %v997, %v1085
      %1087 = vdwg.mxu0
      %1088 = vmatpush.bf16.msra.mxu0 %v788
      %1089 = vmatpush.bf16.msra.mxu0 %v787
      %1090 = vmatpush.bf16.msra.mxu0 %v786
      %1091 = vmatpush.bf16.msra.mxu0 %v785
      %1092 = vmatpush.bf16.msra.mxu0 %v784
      %1093 = vmatpush.bf16.msra.mxu0 %v783
      %1094 = vmatpush.bf16.msra.mxu0 %v782
      %1095 = vmatpush.bf16.msra.mxu0 %v781
      %1096 = vmatmul.bf16.gmra.mxu0 %v504
      %v1097 = vpop.f32.mrf.mxu0
      %v1098 = vadd.f32 %v1009, %v1097
      %v1099 = vpop.f32.mrf.mxu0
      %v1100 = vadd.f32 %v1011, %v1099
      %1101 = vmatmul.bf16.gmra.mxu0 %v508
      %v1102 = vpop.f32.mrf.mxu0
      %v1103 = vadd.f32 %v1014, %v1102
      %v1104 = vpop.f32.mrf.mxu0
      %v1105 = vadd.f32 %v1016, %v1104
      %1106 = vmatmul.bf16.gmra.mxu0 %v512
      %v1107 = vpop.f32.mrf.mxu0
      %v1108 = vadd.f32 %v1019, %v1107
      %v1109 = vpop.f32.mrf.mxu0
      %v1110 = vadd.f32 %v1021, %v1109
      %1111 = vmatmul.bf16.gmra.mxu0 %v516
      %v1112 = vpop.f32.mrf.mxu0
      %v1113 = vadd.f32 %v1024, %v1112
      %v1114 = vpop.f32.mrf.mxu0
      %v1115 = vadd.f32 %v1026, %v1114
      %1116 = vmatmul.bf16.gmra.mxu0 %v520
      %v1117 = vpop.f32.mrf.mxu0
      %v1118 = vadd.f32 %v1029, %v1117
      %v1119 = vpop.f32.mrf.mxu0
      %v1120 = vadd.f32 %v1031, %v1119
      %1121 = vmatmul.bf16.gmra.mxu0 %v524
      %v1122 = vpop.f32.mrf.mxu0
      %v1123 = vadd.f32 %v1034, %v1122
      %v1124 = vpop.f32.mrf.mxu0
      %v1125 = vadd.f32 %v1036, %v1124
      %1126 = vmatmul.bf16.gmra.mxu0 %v528
      %v1127 = vpop.f32.mrf.mxu0
      %v1128 = vadd.f32 %v1039, %v1127
      %v1129 = vpop.f32.mrf.mxu0
      %v1130 = vadd.f32 %v1041, %v1129
      %1131 = vmatmul.bf16.gmra.mxu0 %v532
      %v1132 = vpop.f32.mrf.mxu0
      %v1133 = vadd.f32 %v1044, %v1132
      %v1134 = vpop.f32.mrf.mxu0
      %v1135 = vadd.f32 %v1046, %v1134
      %1136 = vmatmul.bf16.gmra.mxu0 %v536
      %v1137 = vpop.f32.mrf.mxu0
      %v1138 = vadd.f32 %v1049, %v1137
      %v1139 = vpop.f32.mrf.mxu0
      %v1140 = vadd.f32 %v1051, %v1139
      %1141 = vmatmul.bf16.gmra.mxu0 %v540
      %v1142 = vpop.f32.mrf.mxu0
      %v1143 = vadd.f32 %v1054, %v1142
      %v1144 = vpop.f32.mrf.mxu0
      %v1145 = vadd.f32 %v1056, %v1144
      %1146 = vmatmul.bf16.gmra.mxu0 %v544
      %v1147 = vpop.f32.mrf.mxu0
      %v1148 = vadd.f32 %v1059, %v1147
      %v1149 = vpop.f32.mrf.mxu0
      %v1150 = vadd.f32 %v1061, %v1149
      %1151 = vmatmul.bf16.gmra.mxu0 %v548
      %v1152 = vpop.f32.mrf.mxu0
      %v1153 = vadd.f32 %v1064, %v1152
      %v1154 = vpop.f32.mrf.mxu0
      %v1155 = vadd.f32 %v1066, %v1154
      %1156 = vmatmul.bf16.gmra.mxu0 %v552
      %v1157 = vpop.f32.mrf.mxu0
      %v1158 = vadd.f32 %v1069, %v1157
      %v1159 = vpop.f32.mrf.mxu0
      %v1160 = vadd.f32 %v1071, %v1159
      %1161 = vmatmul.bf16.gmra.mxu0 %v556
      %v1162 = vpop.f32.mrf.mxu0
      %v1163 = vadd.f32 %v1074, %v1162
      %v1164 = vpop.f32.mrf.mxu0
      %v1165 = vadd.f32 %v1076, %v1164
      %1166 = vmatmul.bf16.gmra.mxu0 %v560
      %v1167 = vpop.f32.mrf.mxu0
      %v1168 = vadd.f32 %v1079, %v1167
      %v1169 = vpop.f32.mrf.mxu0
      %v1170 = vadd.f32 %v1081, %v1169
      %1171 = vmatmul.bf16.gmra.mxu0 %v564
      %v1172 = vpop.f32.mrf.mxu0
      %v1173 = vadd.f32 %v1084, %v1172
      %v1174 = vpop.f32.mrf.mxu0
      %v1175 = vadd.f32 %v1086, %v1174
      %1176 = vdwg.mxu0
      %v1177 = vtanh.pop %v1098
      %v1178 = vtanh.pop %v1100
      %v1179 = vtanh.pop %v1103
      %v1180 = vtanh.pop %v1105
      %v1181 = vtanh.pop %v1108
      %v1182 = vtanh.pop %v1110
      %v1183 = vtanh.pop %v1113
      %v1184 = vtanh.pop %v1115
      %v1185 = vtanh.pop %v1118
      %v1186 = vtanh.pop %v1120
      %v1187 = vtanh.pop %v1123
      %v1188 = vtanh.pop %v1125
      %v1189 = vtanh.pop %v1128
      %v1190 = vtanh.pop %v1130
      %v1191 = vtanh.pop %v1133
      %v1192 = vtanh.pop %v1135
      %v1193 = vtanh.pop %v1138
      %v1194 = vtanh.pop %v1140
      %v1195 = vtanh.pop %v1143
      %v1196 = vtanh.pop %v1145
      %v1197 = vtanh.pop %v1148
      %v1198 = vtanh.pop %v1150
      %v1199 = vtanh.pop %v1153
      %v1200 = vtanh.pop %v1155
      %v1201 = vtanh.pop %v1158
      %v1202 = vtanh.pop %v1160
      %v1203 = vtanh.pop %v1163
      %v1204 = vtanh.pop %v1165
      %v1205 = vtanh.pop %v1168
      %v1206 = vtanh.pop %v1170
      %v1207 = vtanh.pop %v1173
      %v1208 = vtanh.pop %v1175
      %vm1209 = vcmask 23552
      %1210 = vst.msk [vmem:[%s175] sm:$0xff] %vm1209, %v1177
      %1211 = vst.msk [vmem:[%s175 + $0x8] sm:$0xff] %vm1209, %v1178
      %1212 = vst.msk [vmem:[%s175 + $0x10] sm:$0xff] %vm1209, %v1179
      %1213 = vst.msk [vmem:[%s175 + $0x18] sm:$0xff] %vm1209, %v1180
      %1214 = vst.msk [vmem:[%s175 + $0x20] sm:$0xff] %vm1209, %v1181
      %1215 = vst.msk [vmem:[%s175 + $0x28] sm:$0xff] %vm1209, %v1182
      %1216 = vst.msk [vmem:[%s175 + $0x30] sm:$0xff] %vm1209, %v1183
      %1217 = vst.msk [vmem:[%s175 + $0x38] sm:$0xff] %vm1209, %v1184
      %1218 = vst.msk [vmem:[%s175 + $0x40] sm:$0xff] %vm1209, %v1185
      %1219 = vst.msk [vmem:[%s175 + $0x48] sm:$0xff] %vm1209, %v1186
      %1220 = vst.msk [vmem:[%s175 + $0x50] sm:$0xff] %vm1209, %v1187
      %1221 = vst.msk [vmem:[%s175 + $0x58] sm:$0xff] %vm1209, %v1188
      %1222 = vst.msk [vmem:[%s175 + $0x60] sm:$0xff] %vm1209, %v1189
      %1223 = vst.msk [vmem:[%s175 + $0x68] sm:$0xff] %vm1209, %v1190
      %1224 = vst.msk [vmem:[%s175 + $0x70] sm:$0xff] %vm1209, %v1191
      %1225 = vst.msk [vmem:[%s175 + $0x78] sm:$0xff] %vm1209, %v1192
      %1226 = vst.msk [vmem:[%s175 + $0x80] sm:$0xff] %vm1209, %v1193
      %1227 = vst.msk [vmem:[%s175 + $0x88] sm:$0xff] %vm1209, %v1194
      %1228 = vst.msk [vmem:[%s175 + $0x90] sm:$0xff] %vm1209, %v1195
      %1229 = vst.msk [vmem:[%s175 + $0x98] sm:$0xff] %vm1209, %v1196
      %1230 = vst.msk [vmem:[%s175 + $0xa0] sm:$0xff] %vm1209, %v1197
      %1231 = vst.msk [vmem:[%s175 + $0xa8] sm:$0xff] %vm1209, %v1198
      %1232 = vst.msk [vmem:[%s175 + $0xb0] sm:$0xff] %vm1209, %v1199
      %1233 = vst.msk [vmem:[%s175 + $0xb8] sm:$0xff] %vm1209, %v1200
      %1234 = vst.msk [vmem:[%s175 + $0xc0] sm:$0xff] %vm1209, %v1201
      %1235 = vst.msk [vmem:[%s175 + $0xc8] sm:$0xff] %vm1209, %v1202
      %1236 = vst.msk [vmem:[%s175 + $0xd0] sm:$0xff] %vm1209, %v1203
      %1237 = vst.msk [vmem:[%s175 + $0xd8] sm:$0xff] %vm1209, %v1204
      %1238 = vst.msk [vmem:[%s175 + $0xe0] sm:$0xff] %vm1209, %v1205
      %1239 = vst.msk [vmem:[%s175 + $0xe8] sm:$0xff] %vm1209, %v1206
      %1240 = vst.msk [vmem:[%s175 + $0xf0] sm:$0xff] %vm1209, %v1207
      %1241 = vst.msk [vmem:[%s175 + $0xf8] sm:$0xff] %vm1209, %v1208
      %s1242 = smul.u32 32, %s14
      %p1243 = scmp.lt.s32.totalorder %s1242, 63
      %s1244 = scalar_select %p1243, %s1242, 63
      %s1245 = smul.addr %s1244, 8
      %s1246 = scalar_lea.vmem %s3, %s1245
      // Predicated region
      $region33: #{resnet_generator_forward.37} parent=31 // pred_check
        %p1247 = pneg %p100
      $region34: #{resnet_generator_forward.37} parent=31 // pred_check_branch
        %1249 = sbr.rel (%p1247) target = $region36
      $region35: #{resnet_generator_forward.37} parent=31 // pred_region
        %s1250 = smul.u32 32, %s14
      $region36: #{resnet_generator_forward.37} parent=31 // pred_fallthru
        _
    $region32: #{resnet_generator_forward.37} parent=5 // pred_fallthru
      _
    %p1251 = scmp.le.s32.totalorder 2, %s9
    // Predicated region
    $region37: #{resnet_generator_forward.37} parent=5 // pred_check
      %p1252 = pneg %p1251
    $region38: #{resnet_generator_forward.37} parent=5 // pred_check_branch
      %1254 = sbr.rel (%p1252) target = $region40
    $region39: #{resnet_generator_forward.37} parent=5 // pred_region
      %s1255 = ssub.s32 %s9, 2
      // Predicated region
      $region41: #{resnet_generator_forward.37} parent=39 // pred_check
        %p1256 = pneg %p106
      $region42: #{resnet_generator_forward.37} parent=39 // pred_check_branch
        %1258 = sbr.rel (%p1256) target = $region44
      $region43: #{resnet_generator_forward.37} parent=39 // pred_region
        %s1259 = smul.u32 32, %s15
        %p1260 = scmp.lt.s32.totalorder %s1259, 63
        %s1261 = scalar_select %p1260, %s1259, 63
        %s1262 = smul.addr %s1261, 8
        %s1263 = scalar_lea.vmem %s3, %s1262
      $region44: #{resnet_generator_forward.37} parent=39 // pred_fallthru
        _
    $region40: #{resnet_generator_forward.37} parent=5 // pred_fallthru
      _
  $region6: #{resnet_generator_forward.37} parent=0 // loop_footer
    %s13 = sadd.s32 1, %s9
  $region7: #{resnet_generator_forward.37} parent=0 // loop_footer_branch
    %8 = sbr.rel target = $region3
  $region8: #{resnet_generator_forward.37} parent=0 // loop_exit
    _

</llo_original>
